<compile_context>
chip_gen: v7x
topology: tpu7x:2x2x1
jax: 0.10.0
libtpu: 0.0.40
codegen_flags: <defaults>
</compile_context>

<pallas_src>
import functools

import numpy as np

import jax
import jax.numpy as jnp
from jax.experimental import pallas as pl
from jax.experimental.pallas import tpu as pltpu


# ---------------------------------------------------------------------------
# Kernel
# ---------------------------------------------------------------------------
def _reorg_kernel(x_ref, sel_ref, o_ref, *, stride, precision):
    """One (batch, row-tile) grid step.

    x_ref  : (C, K)        flattened input rows for this tile, K = toh*stride*W
    sel_ref: (s*s, K, N)   constant 0/1 selection matrices,   N = toh*ow
    o_ref  : (s*s, C, N)   float32 output for this tile
    """
    s = stride
    x = x_ref[...]                       # single lane-dense whole-tile load
    if x.dtype != sel_ref.dtype:
        x = x.astype(sel_ref.dtype)
    for g in range(s * s):               # tiny static unroll: s*s groups (4 for stride=2)
        o_ref[g] = jnp.dot(              # direct store into the destination channel group
            x, sel_ref[g],
            precision=precision,
            preferred_element_type=jnp.float32,
        ).astype(o_ref.dtype)


# ---------------------------------------------------------------------------
# Helpers
# ---------------------------------------------------------------------------
def _vmem_physical_bytes():
    try:
        return int(pltpu.get_tpu_info().vmem_capacity_bytes)
    except Exception:
        return 64 * 1024 * 1024          # conservative (v7x per-core VMEM)


def _pick_row_tile(oh, ow, s, W, C, in_itemsize, sel_itemsize, budget):
    """Output rows per grid step.

    Legal tiles: toh divides oh, and either toh == oh (full-dim exemption) or
    toh*ow is a multiple of 128 (lane-dense, (8,128)-legal).  Among legal &
    budget-fitting tiles, prefer ~8 pipelined steps per batch, then bigger
    tiles (amortize per-step overhead on 128-MiB parts).
    """
    out_c = C * s * s

    def footprint(toh):
        k, n = toh * s * W, toh * ow
        in_b = C * k * in_itemsize
        out_b = out_c * n * 4
        sel_b = s * s * k * n * sel_itemsize
        # 2x for Pallas double-buffering of each block + slack for temporaries
        return 2 * (in_b + out_b + sel_b) + out_b

    legal = [t for t in range(1, oh + 1)
             if oh % t == 0 and (t == oh or (t * ow) % 128 == 0)]
    fitting = [t for t in legal if footprint(t) <= budget]
    cand = fitting if fitting else [min(legal)]
    return min(cand, key=lambda t: (abs(oh // t - 8), -t))


def _build_sel(toh, ow, s, W, dtype):
    """sel[dh*s+dw, k, n] = 1 iff k == (n//ow*s + dh)*W + (n%ow)*s + dw."""
    K, N = toh * s * W, toh * ow
    sel = np.zeros((s * s, K, N), dtype=np.float32)
    n = np.arange(N)
    t, i = n // ow, n % ow
    for dh in range(s):
        for dw in range(s):
            k = (t * s + dh) * W + i * s + dw
            sel[dh * s + dw, k, n] = 1.0
    return jnp.asarray(sel, dtype=dtype)


# ---------------------------------------------------------------------------
# Wrapper
# ---------------------------------------------------------------------------
def reorg(x_nchw, stride=2):
    """Darknet reorg (yolo2 ReorgLayer forward): NCHW in -> NCHW float32 out."""
    s = int(stride)
    B, C, H, W = x_nchw.shape
    assert H % s == 0 and W % s == 0, "H and W must be divisible by stride"
    oh, ow = H // s, W // s
    out_c = C * s * s

    # Precision / selection dtype (exact copy in all supported cases).
    in_dtype = x_nchw.dtype
    if in_dtype in (jnp.bfloat16, jnp.float16):
        sel_dtype, precision = in_dtype, jax.lax.Precision.DEFAULT
    else:
        sel_dtype, precision = jnp.float32, jax.lax.Precision.HIGHEST
    # TODO(synk): int32 inputs with |x| >= 2**24 would lose precision through
    # the f32 MXU copy path; a strided-slice de-interleave would fix that.

    in_itemsize = jnp.dtype(in_dtype).itemsize
    sel_itemsize = jnp.dtype(sel_dtype).itemsize

    phys = _vmem_physical_bytes()
    vmem_limit = min(phys * 3 // 4, 96 * 1024 * 1024)
    budget = min(phys * 2 // 5, vmem_limit - 8 * 1024 * 1024)

    toh = _pick_row_tile(oh, ow, s, W, C, in_itemsize, sel_itemsize, budget)
    K, N = toh * s * W, toh * ow
    grid = (B, oh // toh)

    x_flat = x_nchw.reshape(B, C, H * W)            # free (contiguous) reshape
    sel = _build_sel(toh, ow, s, W, sel_dtype)      # small constant input

    kernel = functools.partial(_reorg_kernel, stride=s, precision=precision)

    in_bytes = B * C * H * W * in_itemsize
    out_bytes = B * out_c * oh * ow * 4
    sel_bytes = s * s * K * N * sel_itemsize
    flops = 2 * B * (oh // toh) * s * s * C * K * N

    out4 = pl.pallas_call(
        kernel,
        out_shape=jax.ShapeDtypeStruct((B, s * s, C, oh * ow), jnp.float32),
        grid=grid,
        in_specs=[
            pl.BlockSpec((None, C, K), lambda b, t: (b, 0, t)),
            pl.BlockSpec((s * s, K, N), lambda b, t: (0, 0, 0)),
        ],
        out_specs=pl.BlockSpec((None, s * s, C, N), lambda b, t: (b, 0, 0, t)),
        compiler_params=pltpu.CompilerParams(
            dimension_semantics=("parallel", "parallel"),
            vmem_limit_bytes=int(vmem_limit),
        ),
        cost_estimate=pl.CostEstimate(
            flops=int(flops),
            transcendentals=0,
            bytes_accessed=int(in_bytes + out_bytes + sel_bytes),
        ),
    )(x_flat, sel)

    # Free reshape back to the PyTorch ReorgLayer output layout (NCHW, f32).
    return out4.reshape(B, out_c, oh, ow)


def reorg_reference(x, stride):
    """Pure-JAX reference with the exact darknet reorg (forward=0) semantics."""
    B, C, H, W = x.shape
    oh, ow = H // stride, W // stride
    xr = x.reshape(B, C, oh, stride, ow, stride)
    xr = jnp.transpose(xr, (0, 3, 5, 1, 2, 4))      # (B, dh, dw, C, oh, ow)
    return xr.reshape(B, C * stride * stride, oh, ow).astype(jnp.float32)


if __name__ == "__main__":
    stride = 2
    key = jax.random.PRNGKey(0)
    x = jax.random.normal(key, (2, 4, 16, 16), dtype=jnp.float32)   # NCHW

    out = jax.block_until_ready(reorg(x, stride=stride))

    ref = reorg_reference(x, stride)
    assert out.shape == (2, 4 * stride * stride, 16 // stride, 16 // stride)
    assert out.dtype == jnp.float32
    assert jnp.allclose(out, ref, atol=1e-6, rtol=1e-6), \
        "Pallas reorg mismatch vs reference"

    print("KERNEL_OK")
</pallas_src>

<mosaic_0001>
module attributes {stable_mosaic.version = 11 : i64} {
  func.func @_reorg_kernel(%arg0: i32, %arg1: i32, %arg2: memref<1x4x256xf32, #tpu.memory_space<vmem>>, %arg3: memref<4x256x64xf32, #tpu.memory_space<vmem>>, %arg4: memref<1x4x4x64xf32, #tpu.memory_space<vmem>>) attributes {dimension_semantics = [#tpu.dimension_semantics<parallel>, #tpu.dimension_semantics<parallel>], iteration_bounds = array<i64: 2, 1>, scalar_prefetch = 0 : i64, scratch_operands = 0 : i64, tpu.core_type = #tpu.core_type<tc>, window_params = [{transform_indices = @transform_0, window_bounds = array<i64: 1, 4, 256>}, {pipeline_mode = #tpu.pipeline_mode<synchronous>, transform_indices = @transform_1, window_bounds = array<i64: 4, 256, 64>}, {transform_indices = @transform_2, window_bounds = array<i64: 1, 4, 4, 64>}]} {
    %c0 = arith.constant 0 : index
    %c0_0 = arith.constant 0 : index
    %c0_1 = arith.constant 0 : index
    %0 = vector.load %arg2[%c0, %c0_0, %c0_1] : memref<1x4x256xf32, #tpu.memory_space<vmem>>, vector<1x4x256xf32>
    %1 = vector.shape_cast %0 : vector<1x4x256xf32> to vector<4x256xf32>
    %c0_2 = arith.constant 0 : index
    %c0_3 = arith.constant 0 : index
    %c0_4 = arith.constant 0 : index
    %2 = vector.load %arg3[%c0_2, %c0_3, %c0_4] : memref<4x256x64xf32, #tpu.memory_space<vmem>>, vector<1x256x64xf32>
    %3 = vector.shape_cast %2 : vector<1x256x64xf32> to vector<256x64xf32>
    %cst = arith.constant dense<0.000000e+00> : vector<4x64xf32>
    %4 = tpu.matmul %1, %3, %cst {dimension_numbers = #tpu.dot_dimension_numbers<[1], [0], [0], [1], [0, 0, 1, 1], [], []>, precision = #tpu.contract_precision<fp32>} : vector<4x256xf32>, vector<256x64xf32>, vector<4x64xf32> -> vector<4x64xf32>
    %c0_5 = arith.constant 0 : index
    %c0_6 = arith.constant 0 : index
    %c0_7 = arith.constant 0 : index
    %c0_8 = arith.constant 0 : index
    %5 = vector.load %arg4[%c0_5, %c0_6, %c0_7, %c0_8] : memref<1x4x4x64xf32, #tpu.memory_space<vmem>>, vector<1x1x4x64xf32>
    %6 = vector.shape_cast %5 : vector<1x1x4x64xf32> to vector<4x64xf32>
    %7 = vector.shape_cast %4 : vector<4x64xf32> to vector<1x1x4x64xf32>
    tpu.vector_store %arg4[%c0_5, %c0_6, %c0_7, %c0_8], %7 {strides = array<i32>} : memref<1x4x4x64xf32, #tpu.memory_space<vmem>>, vector<1x1x4x64xf32>,
    %c1 = arith.constant 1 : index
    %c0_9 = arith.constant 0 : index
    %c0_10 = arith.constant 0 : index
    %8 = vector.load %arg3[%c1, %c0_9, %c0_10] : memref<4x256x64xf32, #tpu.memory_space<vmem>>, vector<1x256x64xf32>
    %9 = vector.shape_cast %8 : vector<1x256x64xf32> to vector<256x64xf32>
    %cst_11 = arith.constant dense<0.000000e+00> : vector<4x64xf32>
    %10 = tpu.matmul %1, %9, %cst_11 {dimension_numbers = #tpu.dot_dimension_numbers<[1], [0], [0], [1], [0, 0, 1, 1], [], []>, precision = #tpu.contract_precision<fp32>} : vector<4x256xf32>, vector<256x64xf32>, vector<4x64xf32> -> vector<4x64xf32>
    %c0_12 = arith.constant 0 : index
    %c1_13 = arith.constant 1 : index
    %c0_14 = arith.constant 0 : index
    %c0_15 = arith.constant 0 : index
    %11 = vector.load %arg4[%c0_12, %c1_13, %c0_14, %c0_15] : memref<1x4x4x64xf32, #tpu.memory_space<vmem>>, vector<1x1x4x64xf32>
    %12 = vector.shape_cast %11 : vector<1x1x4x64xf32> to vector<4x64xf32>
    %13 = vector.shape_cast %10 : vector<4x64xf32> to vector<1x1x4x64xf32>
    tpu.vector_store %arg4[%c0_12, %c1_13, %c0_14, %c0_15], %13 {strides = array<i32>} : memref<1x4x4x64xf32, #tpu.memory_space<vmem>>, vector<1x1x4x64xf32>,
    %c2 = arith.constant 2 : index
    %c0_16 = arith.constant 0 : index
    %c0_17 = arith.constant 0 : index
    %14 = vector.load %arg3[%c2, %c0_16, %c0_17] : memref<4x256x64xf32, #tpu.memory_space<vmem>>, vector<1x256x64xf32>
    %15 = vector.shape_cast %14 : vector<1x256x64xf32> to vector<256x64xf32>
    %cst_18 = arith.constant dense<0.000000e+00> : vector<4x64xf32>
    %16 = tpu.matmul %1, %15, %cst_18 {dimension_numbers = #tpu.dot_dimension_numbers<[1], [0], [0], [1], [0, 0, 1, 1], [], []>, precision = #tpu.contract_precision<fp32>} : vector<4x256xf32>, vector<256x64xf32>, vector<4x64xf32> -> vector<4x64xf32>
    %c0_19 = arith.constant 0 : index
    %c2_20 = arith.constant 2 : index
    %c0_21 = arith.constant 0 : index
    %c0_22 = arith.constant 0 : index
    %17 = vector.load %arg4[%c0_19, %c2_20, %c0_21, %c0_22] : memref<1x4x4x64xf32, #tpu.memory_space<vmem>>, vector<1x1x4x64xf32>
    %18 = vector.shape_cast %17 : vector<1x1x4x64xf32> to vector<4x64xf32>
    %19 = vector.shape_cast %16 : vector<4x64xf32> to vector<1x1x4x64xf32>
    tpu.vector_store %arg4[%c0_19, %c2_20, %c0_21, %c0_22], %19 {strides = array<i32>} : memref<1x4x4x64xf32, #tpu.memory_space<vmem>>, vector<1x1x4x64xf32>,
    %c3 = arith.constant 3 : index
    %c0_23 = arith.constant 0 : index
    %c0_24 = arith.constant 0 : index
    %20 = vector.load %arg3[%c3, %c0_23, %c0_24] : memref<4x256x64xf32, #tpu.memory_space<vmem>>, vector<1x256x64xf32>
    %21 = vector.shape_cast %20 : vector<1x256x64xf32> to vector<256x64xf32>
    %cst_25 = arith.constant dense<0.000000e+00> : vector<4x64xf32>
    %22 = tpu.matmul %1, %21, %cst_25 {dimension_numbers = #tpu.dot_dimension_numbers<[1], [0], [0], [1], [0, 0, 1, 1], [], []>, precision = #tpu.contract_precision<fp32>} : vector<4x256xf32>, vector<256x64xf32>, vector<4x64xf32> -> vector<4x64xf32>
    %c0_26 = arith.constant 0 : index
    %c3_27 = arith.constant 3 : index
    %c0_28 = arith.constant 0 : index
    %c0_29 = arith.constant 0 : index
    %23 = vector.load %arg4[%c0_26, %c3_27, %c0_28, %c0_29] : memref<1x4x4x64xf32, #tpu.memory_space<vmem>>, vector<1x1x4x64xf32>
    %24 = vector.shape_cast %23 : vector<1x1x4x64xf32> to vector<4x64xf32>
    %25 = vector.shape_cast %22 : vector<4x64xf32> to vector<1x1x4x64xf32>
    tpu.vector_store %arg4[%c0_26, %c3_27, %c0_28, %c0_29], %25 {strides = array<i32>} : memref<1x4x4x64xf32, #tpu.memory_space<vmem>>, vector<1x1x4x64xf32>,
    return
  }
  func.func @transform_0(%arg0: i32, %arg1: i32) -> (i32, i32, i32) {
    %c0_i32 = arith.constant 0 : i32
    %c0_i32_0 = arith.constant 0 : i32
    return %arg0, %c0_i32, %arg1 : i32, i32, i32
  }
  func.func @transform_1(%arg0: i32, %arg1: i32) -> (i32, i32, i32) {
    %c0_i32 = arith.constant 0 : i32
    %c0_i32_0 = arith.constant 0 : i32
    %c0_i32_1 = arith.constant 0 : i32
    %c0_i32_2 = arith.constant 0 : i32
    return %c0_i32, %c0_i32_0, %c0_i32_1 : i32, i32, i32
  }
  func.func @transform_2(%arg0: i32, %arg1: i32) -> (i32, i32, i32, i32) {
    %c0_i32 = arith.constant 0 : i32
    %c0_i32_0 = arith.constant 0 : i32
    %c0_i32_1 = arith.constant 0 : i32
    return %arg0, %c0_i32, %c0_i32_0, %arg1 : i32, i32, i32, i32
  }
}

</mosaic_0001>

<llo_original>
// kernel: tpu_custom_call.1
$region0: #{tpu_custom_call.1}
  #allocation0 [shape = 'u32[]', space=smem, size = 0x4, offset = 0x4, fixed_abs, tag = 'smem constant byte address 0x4 - core index']
  #allocation1 [shape = 'u32[144,128]{1,0:T(1,128)}', space=vmem, size = 0x12000, scoped, tag = 'internal scratch']
  %s0 = inlined_call_operand.vmem [shape: f32[2,4,256], index: 0, kind: input, shape index: {}]
  %s1 = inlined_call_operand.vmem [shape: f32[4,256,64], index: 1, kind: input, shape index: {}]
  %s2 = inlined_call_operand.hbm [shape: f32[2,4,4,64], index: 2, kind: output, shape index: {}]
  %s3 = sld [smem:[#allocation0]]
  $region41: #{tpu_custom_call.1} parent=0
    _
  %s5 = ssub.s32 1, %s3
  %s6 = scalar_select 0, %s5, %s3
  $region1: #{tpu_custom_call.1} parent=0
    #allocation2 [shape = 'u8[16384]{0}', space=vmem, size = 0x4000, scoped, tag = 'output window, operand 0']
    #allocation3 [shape = 's32[2]{0}', space=sflag, size = 0x8, scoped, tag = 'scoped memory for tpu_custom_call.1']
    %7 = vsyncpa [#allocation3], 0
    %s8 = scalar_lea.sflag [#allocation3], 1
    %9 = vsyncpa %s8, 0
    loop: start=0, step=1, limit=4
    $region2: #{tpu_custom_call.1} parent=1 // loop_pre_header
      _
    $region3: #{tpu_custom_call.1} parent=1 // loop_header
      %s11 = sphi 0, %s15
      %p12 = scmp.ge.s32.totalorder %s11, 4
      %s18 = sphi 0, %s30
      %s19 = sphi 0, %s26
      %s20 = sphi 0, %s18
      %s21 = sphi 0, %s19
      %s22 = sphi 0, %s20
      %s23 = sphi 0, %s21
      %s35 = sphi 0, %s37
      %s38 = sphi 0, %s35
      %s39 = sphi 0, %s38
      %s55 = sphi 0, %s39
      %s59 = sphi 0, %s59
      %s61 = sphi 0, %s59
      %s62 = sphi 0, %s61
      %s76 = sphi 0, %s62
      %s84 = sphi 0, %s86
      %s87 = sphi 0, %s84
      %s88 = sphi 0, %s87
      %s104 = sphi 0, %s88
    $region4: #{tpu_custom_call.1} parent=1 // loop_header_branch
      %14 = sbr.rel (%p12) target = $region8
    $region5: #{tpu_custom_call.1} parent=1 // loop_body
      %s16 = ssub.s32 %s11, 1
      %s17 = ssub.s32 %s11, 2
      %s24 = sadd.s32 1, %s19
      %p25 = scmp.ge.s32.totalorder %s24, 1
      %s26 = scalar_select %p25, 0, %s24
      %s27 = sadd.s32 1, %s18
      %s28 = scalar_select %p25, %s27, %s18
      %p29 = scmp.ge.s32.totalorder %s28, 2
      %s30 = scalar_select %p29, 0, %s28
      %s31 = ssub.s32 %s18, %s30
      %s32 = ssub.s32 %s19, %s26
      %s33 = sor.u32 %s31, %s32
      %p34 = scmp.eq.s32.totalorder %s33, 0
      %s36 = sadd.s32 %s35, 1
      %s37 = scalar_select %p34, %s35, %s36
      %p40 = pneg %p34
      %p41 = scmp.eq.s32.totalorder %s11, 1
      %p42 = por %p40, %p41
      %p43 = scmp.ne.s32.totalorder %s35, %s38
      %p44 = scmp.eq.s32.totalorder %s11, 0
      %p45 = por %p43, %p44
      %p46 = scmp.ne.s32.totalorder %s35, %s38
      %p47 = scmp.eq.s32.totalorder %s16, 1
      %p48 = por %p46, %p47
      %p49 = scmp.ne.s32.totalorder %s38, %s39
      %p50 = scmp.eq.s32.totalorder %s16, 0
      %p51 = por %p49, %p50
      %p52 = scmp.ne.s32.totalorder %s38, %s39
      %p53 = scmp.eq.s32.totalorder %s17, 1
      %p54 = por %p52, %p53
      %p56 = scmp.ne.s32.totalorder %s39, %s55
      %p57 = scmp.eq.s32.totalorder %s17, 0
      %p58 = por %p56, %p57
      %s60 = sadd.s32 %s59, 1
      %p63 = scmp.eq.s32.totalorder %s11, 1
      %p64 = scmp.ne.s32.totalorder %s59, %s61
      %p65 = scmp.eq.s32.totalorder %s11, 0
      %p66 = por %p64, %p65
      %p67 = scmp.ne.s32.totalorder %s59, %s61
      %p68 = scmp.eq.s32.totalorder %s16, 1
      %p69 = por %p67, %p68
      %p70 = scmp.ne.s32.totalorder %s61, %s62
      %p71 = scmp.eq.s32.totalorder %s16, 0
      %p72 = por %p70, %p71
      %p73 = scmp.ne.s32.totalorder %s61, %s62
      %p74 = scmp.eq.s32.totalorder %s17, 1
      %p75 = por %p73, %p74
      %p77 = scmp.ne.s32.totalorder %s62, %s76
      %p78 = scmp.eq.s32.totalorder %s17, 0
      %p79 = por %p77, %p78
      %s80 = ssub.s32 %s18, %s30
      %s81 = ssub.s32 %s19, %s26
      %s82 = sor.u32 %s80, %s81
      %p83 = scmp.eq.s32.totalorder %s82, 0
      %s85 = sadd.s32 %s84, 1
      %s86 = scalar_select %p83, %s84, %s85
      %p89 = pneg %p83
      %p90 = scmp.eq.s32.totalorder %s11, 1
      %p91 = por %p89, %p90
      %p92 = scmp.ne.s32.totalorder %s84, %s87
      %p93 = scmp.eq.s32.totalorder %s11, 0
      %p94 = por %p92, %p93
      %p95 = scmp.ne.s32.totalorder %s84, %s87
      %p96 = scmp.eq.s32.totalorder %s16, 1
      %p97 = por %p95, %p96
      %p98 = scmp.ne.s32.totalorder %s87, %s88
      %p99 = scmp.eq.s32.totalorder %s16, 0
      %p100 = por %p98, %p99
      %p101 = scmp.ne.s32.totalorder %s87, %s88
      %p102 = scmp.eq.s32.totalorder %s17, 1
      %p103 = por %p101, %p102
      %p105 = scmp.ne.s32.totalorder %s88, %s104
      %p106 = scmp.eq.s32.totalorder %s17, 0
      %p107 = por %p105, %p106
      %p108 = scmp.le.s32.totalorder 1, %s11
      %p109 = scmp.lt.s32.totalorder %s11, 3
      %p110 = pnand %p108, %p109
      %p111 = pneg %p110
      // Predicated region
      $region9: #{tpu_custom_call.1} parent=5 // pred_check
        _
      $region10: #{tpu_custom_call.1} parent=5 // pred_check_branch
        %113 = sbr.rel (%p110) target = $region12
      $region11: #{tpu_custom_call.1} parent=5 // pred_region
        %s114 = ssub.s32 %s11, 1
        // Predicated region
        $region13: #{tpu_custom_call.1} parent=11 // pred_check
          %p115 = pneg %p72
        $region14: #{tpu_custom_call.1} parent=11 // pred_check_branch
          %117 = sbr.rel (%p115) target = $region16
        $region15: #{tpu_custom_call.1} parent=11 // pred_region
          _
        $region16: #{tpu_custom_call.1} parent=11 // pred_fallthru
          _
      $region12: #{tpu_custom_call.1} parent=5 // pred_fallthru
        _
      %p118 = scmp.lt.s32.totalorder %s11, 2
      // Predicated region
      $region17: #{tpu_custom_call.1} parent=5 // pred_check
        %p119 = pneg %p118
      $region18: #{tpu_custom_call.1} parent=5 // pred_check_branch
        %121 = sbr.rel (%p119) target = $region20
      $region19: #{tpu_custom_call.1} parent=5 // pred_region
        // Predicated region
        $region21: #{tpu_custom_call.1} parent=19 // pred_check
          %p122 = pneg %p45
        $region22: #{tpu_custom_call.1} parent=19 // pred_check_branch
          %124 = sbr.rel (%p122) target = $region24
        $region23: #{tpu_custom_call.1} parent=19 // pred_region
          %s125 = smul.u32 2, %s19
          %p126 = scmp.lt.s32.totalorder %s18, 1
          %s127 = scalar_select %p126, %s18, 1
          %p128 = scmp.lt.s32.totalorder %s125, 1
          %s129 = scalar_select %p128, %s125, 1
          %s130 = smul.addr %s127, 2
          %s131 = sadd.s32 %s129, %s130
          %s132 = smul.addr %s131, 4
          %s133 = scalar_lea.vmem %s0, %s132
          %s134 = smul.u32 2, %s19
        $region24: #{tpu_custom_call.1} parent=19 // pred_fallthru
          _
      $region20: #{tpu_custom_call.1} parent=5 // pred_fallthru
        _
      %p135 = scmp.le.s32.totalorder 1, %s11
      %p136 = scmp.lt.s32.totalorder %s11, 3
      %p137 = pnand %p135, %p136
      %p138 = pneg %p137
      // Predicated region
      $region25: #{tpu_custom_call.1} parent=5 // pred_check
        _
      $region26: #{tpu_custom_call.1} parent=5 // pred_check_branch
        %140 = sbr.rel (%p137) target = $region28
      $region27: #{tpu_custom_call.1} parent=5 // pred_region
        %s141 = ssub.s32 %s11, 1
        %s142 = smul.u32 2, %s21
        %p143 = scmp.lt.s32.totalorder %s20, 1
        %s144 = scalar_select %p143, %s20, 1
        %p145 = scmp.lt.s32.totalorder %s142, 1
        %s146 = scalar_select %p145, %s142, 1
        %s147 = smul.addr %s144, 2
        %s148 = sadd.s32 %s146, %s147
        %s149 = smul.addr %s148, 4
        %s150 = scalar_lea.vmem %s0, %s149
        %p151 = pneg %p51
        %p152 = pneg %p48
        %p153 = pneg %p72
        %p154 = pneg %p69
        %p155 = pneg %p100
        %p156 = pneg %p97
        %s157 = sand.u32 %s87, 1
        %s158 = scalar_lea.sflag [#allocation3], %s157
        %s159 = sand.u32 %s87, 1
        %s160 = smul.addr %s159, 16
        %s161 = scalar_lea.vmem [#allocation2], %s160
        %s162 = smul.u32 2, %s21
        %p163 = scmp.lt.s32.totalorder %s20, 1
        %s164 = scalar_select %p163, %s20, 1
        %p165 = scmp.lt.s32.totalorder %s162, 1
        %s166 = scalar_select %p165, %s162, 1
        %s167 = smul.addr %s164, 2
        %s168 = sadd.s32 %s166, %s167
        %s169 = smul.addr %s168, 4
        %s170 = scalar_lea.vmem %s0, %s169
        %s171 = smul.u32 2, %s21
        %v172 = vld [vmem:[%s170] sm:$0xff]
        %v173 = vld [vmem:[%s1] sm:$0xff]
        %v174 = vld [vmem:[%s1 + $0x8] sm:$0xff]
        %v175 = vld [vmem:[%s1 + $0x10] sm:$0xff]
        %v176 = vld [vmem:[%s1 + $0x18] sm:$0xff]
        %v177 = vld [vmem:[%s1 + $0x20] sm:$0xff]
        %v178 = vld [vmem:[%s1 + $0x28] sm:$0xff]
        %v179 = vld [vmem:[%s1 + $0x30] sm:$0xff]
        %v180 = vld [vmem:[%s1 + $0x38] sm:$0xff]
        %v181 = vld [vmem:[%s1 + $0x40] sm:$0xff]
        %v182 = vld [vmem:[%s1 + $0x48] sm:$0xff]
        %v183 = vld [vmem:[%s1 + $0x50] sm:$0xff]
        %v184 = vld [vmem:[%s1 + $0x58] sm:$0xff]
        %v185 = vld [vmem:[%s1 + $0x60] sm:$0xff]
        %v186 = vld [vmem:[%s1 + $0x68] sm:$0xff]
        %v187 = vld [vmem:[%s1 + $0x70] sm:$0xff]
        %v188 = vld [vmem:[%s1 + $0x78] sm:$0xff]
        %v189 = vld [vmem:[%s1 + $0x80] sm:$0xff]
        %v190 = vld [vmem:[%s1 + $0x88] sm:$0xff]
        %v191 = vld [vmem:[%s1 + $0x90] sm:$0xff]
        %v192 = vld [vmem:[%s1 + $0x98] sm:$0xff]
        %v193 = vld [vmem:[%s1 + $0xa0] sm:$0xff]
        %v194 = vld [vmem:[%s1 + $0xa8] sm:$0xff]
        %v195 = vld [vmem:[%s1 + $0xb0] sm:$0xff]
        %v196 = vld [vmem:[%s1 + $0xb8] sm:$0xff]
        %v197 = vld [vmem:[%s1 + $0xc0] sm:$0xff]
        %v198 = vld [vmem:[%s1 + $0xc8] sm:$0xff]
        %v199 = vld [vmem:[%s1 + $0xd0] sm:$0xff]
        %v200 = vld [vmem:[%s1 + $0xd8] sm:$0xff]
        %v201 = vld [vmem:[%s1 + $0xe0] sm:$0xff]
        %v202 = vld [vmem:[%s1 + $0xe8] sm:$0xff]
        %v203 = vld [vmem:[%s1 + $0xf0] sm:$0xff]
        %v204 = vld [vmem:[%s1 + $0xf8] sm:$0xff]
        %v206 = vcombine.high %v172, %v172
        %208 = vmatprep.subr.mxu0 0.0
        %v209 = vand.u32 %v173, 4294901760
        %210 = vmatpush1.msra.mxu0 %v209
        %211 = vmatprep.subr.mxu0 0.0
        %v212 = vand.u32 %v174, 4294901760
        %213 = vmatpush1.msra.mxu0 %v212
        %214 = vmatprep.subr.mxu0 0.0
        %v215 = vand.u32 %v175, 4294901760
        %216 = vmatpush1.msra.mxu0 %v215
        %217 = vmatprep.subr.mxu0 0.0
        %v218 = vand.u32 %v176, 4294901760
        %219 = vmatpush1.msra.mxu0 %v218
        %220 = vmatprep.subr.mxu0 0.0
        %v221 = vand.u32 %v177, 4294901760
        %222 = vmatpush1.msra.mxu0 %v221
        %223 = vmatprep.subr.mxu0 0.0
        %v224 = vand.u32 %v178, 4294901760
        %225 = vmatpush1.msra.mxu0 %v224
        %226 = vmatprep.subr.mxu0 0.0
        %v227 = vand.u32 %v179, 4294901760
        %228 = vmatpush1.msra.mxu0 %v227
        %229 = vmatprep.subr.mxu0 0.0
        %v230 = vand.u32 %v180, 4294901760
        %231 = vmatpush1.msra.mxu0 %v230
        %232 = vmatprep.subr.mxu0 0.0
        %v233 = vand.u32 %v181, 4294901760
        %234 = vmatpush1.msra.mxu0 %v233
        %235 = vmatprep.subr.mxu0 0.0
        %v236 = vand.u32 %v182, 4294901760
        %237 = vmatpush1.msra.mxu0 %v236
        %238 = vmatprep.subr.mxu0 0.0
        %v239 = vand.u32 %v183, 4294901760
        %240 = vmatpush1.msra.mxu0 %v239
        %241 = vmatprep.subr.mxu0 0.0
        %v242 = vand.u32 %v184, 4294901760
        %243 = vmatpush1.msra.mxu0 %v242
        %244 = vmatprep.subr.mxu0 0.0
        %v245 = vand.u32 %v185, 4294901760
        %246 = vmatpush1.msra.mxu0 %v245
        %247 = vmatprep.subr.mxu0 0.0
        %v248 = vand.u32 %v186, 4294901760
        %249 = vmatpush1.msra.mxu0 %v248
        %250 = vmatprep.subr.mxu0 0.0
        %v251 = vand.u32 %v187, 4294901760
        %252 = vmatpush1.msra.mxu0 %v251
        %253 = vmatprep.subr.mxu0 0.0
        %v254 = vand.u32 %v188, 4294901760
        %255 = vmatpush1.msra.mxu0 %v254
        %256 = vmatprep.subr.mxu0 0.0
        %v257 = vand.u32 %v189, 4294901760
        %258 = vmatpush1.msra.mxu0 %v257
        %259 = vmatprep.subr.mxu0 0.0
        %v260 = vand.u32 %v190, 4294901760
        %261 = vmatpush1.msra.mxu0 %v260
        %262 = vmatprep.subr.mxu0 0.0
        %v263 = vand.u32 %v191, 4294901760
        %264 = vmatpush1.msra.mxu0 %v263
        %265 = vmatprep.subr.mxu0 0.0
        %v266 = vand.u32 %v192, 4294901760
        %267 = vmatpush1.msra.mxu0 %v266
        %268 = vmatprep.subr.mxu0 0.0
        %v269 = vand.u32 %v193, 4294901760
        %270 = vmatpush1.msra.mxu0 %v269
        %271 = vmatprep.subr.mxu0 0.0
        %v272 = vand.u32 %v194, 4294901760
        %273 = vmatpush1.msra.mxu0 %v272
        %274 = vmatprep.subr.mxu0 0.0
        %v275 = vand.u32 %v195, 4294901760
        %276 = vmatpush1.msra.mxu0 %v275
        %277 = vmatprep.subr.mxu0 0.0
        %v278 = vand.u32 %v196, 4294901760
        %279 = vmatpush1.msra.mxu0 %v278
        %280 = vmatprep.subr.mxu0 0.0
        %v281 = vand.u32 %v197, 4294901760
        %282 = vmatpush1.msra.mxu0 %v281
        %283 = vmatprep.subr.mxu0 0.0
        %v284 = vand.u32 %v198, 4294901760
        %285 = vmatpush1.msra.mxu0 %v284
        %286 = vmatprep.subr.mxu0 0.0
        %v287 = vand.u32 %v199, 4294901760
        %288 = vmatpush1.msra.mxu0 %v287
        %289 = vmatprep.subr.mxu0 0.0
        %v290 = vand.u32 %v200, 4294901760
        %291 = vmatpush1.msra.mxu0 %v290
        %292 = vmatprep.subr.mxu0 0.0
        %v293 = vand.u32 %v201, 4294901760
        %294 = vmatpush1.msra.mxu0 %v293
        %295 = vmatprep.subr.mxu0 0.0
        %v296 = vand.u32 %v202, 4294901760
        %297 = vmatpush1.msra.mxu0 %v296
        %298 = vmatprep.subr.mxu0 0.0
        %v299 = vand.u32 %v203, 4294901760
        %300 = vmatpush1.msra.mxu0 %v299
        %301 = vmatprep.subr.mxu0 0.0
        %v302 = vand.u32 %v204, 4294901760
        %303 = vmatpush1.msra.mxu0 %v302
        %v304 = vand.u32 %v206, 4294901760
        %v305 = vsub.f32 %v206, %v304
        %v306 = vand.u32 %v305, 4294901760
        %v307 = vsub.f32 %v305, %v306
        %v308 = vand.u32 %v307, 4294901760
        %309 = vmatprep.mubr.f32.mxu0 %v308
        %v310 = vand.u32 %v172, 4294901760
        %v311 = vsub.f32 %v172, %v310
        %v312 = vand.u32 %v311, 4294901760
        %v313 = vsub.f32 %v311, %v312
        %v314 = vand.u32 %v313, 4294901760
        %315 = vmatmul.mubr.f32.gmra.mrb[0].mxu0 %v314
        %v316 = vpop.f32.mrb[0].mxu0
        %v317 = vadd.f32 0.0, %v316
        %v318 = vpop.f32.mrb[0].mxu0
        %319 = vdwg.mxu0
        %320 = vmatprep.subr.mxu0 0.0
        %v321 = vand.u32 %v173, 4294901760
        %v322 = vsub.f32 %v173, %v321
        %v323 = vand.u32 %v322, 4294901760
        %v324 = vsub.f32 %v322, %v323
        %v325 = vand.u32 %v324, 4294901760
        %326 = vmatpush1.msra.mxu0 %v325
        %327 = vmatprep.subr.mxu0 0.0
        %v328 = vand.u32 %v174, 4294901760
        %v329 = vsub.f32 %v174, %v328
        %v330 = vand.u32 %v329, 4294901760
        %v331 = vsub.f32 %v329, %v330
        %v332 = vand.u32 %v331, 4294901760
        %333 = vmatpush1.msra.mxu0 %v332
        %334 = vmatprep.subr.mxu0 0.0
        %v335 = vand.u32 %v175, 4294901760
        %v336 = vsub.f32 %v175, %v335
        %v337 = vand.u32 %v336, 4294901760
        %v338 = vsub.f32 %v336, %v337
        %v339 = vand.u32 %v338, 4294901760
        %340 = vmatpush1.msra.mxu0 %v339
        %341 = vmatprep.subr.mxu0 0.0
        %v342 = vand.u32 %v176, 4294901760
        %v343 = vsub.f32 %v176, %v342
        %v344 = vand.u32 %v343, 4294901760
        %v345 = vsub.f32 %v343, %v344
        %v346 = vand.u32 %v345, 4294901760
        %347 = vmatpush1.msra.mxu0 %v346
        %348 = vmatprep.subr.mxu0 0.0
        %v349 = vand.u32 %v177, 4294901760
        %v350 = vsub.f32 %v177, %v349
        %v351 = vand.u32 %v350, 4294901760
        %v352 = vsub.f32 %v350, %v351
        %v353 = vand.u32 %v352, 4294901760
        %354 = vmatpush1.msra.mxu0 %v353
        %355 = vmatprep.subr.mxu0 0.0
        %v356 = vand.u32 %v178, 4294901760
        %v357 = vsub.f32 %v178, %v356
        %v358 = vand.u32 %v357, 4294901760
        %v359 = vsub.f32 %v357, %v358
        %v360 = vand.u32 %v359, 4294901760
        %361 = vmatpush1.msra.mxu0 %v360
        %362 = vmatprep.subr.mxu0 0.0
        %v363 = vand.u32 %v179, 4294901760
        %v364 = vsub.f32 %v179, %v363
        %v365 = vand.u32 %v364, 4294901760
        %v366 = vsub.f32 %v364, %v365
        %v367 = vand.u32 %v366, 4294901760
        %368 = vmatpush1.msra.mxu0 %v367
        %369 = vmatprep.subr.mxu0 0.0
        %v370 = vand.u32 %v180, 4294901760
        %v371 = vsub.f32 %v180, %v370
        %v372 = vand.u32 %v371, 4294901760
        %v373 = vsub.f32 %v371, %v372
        %v374 = vand.u32 %v373, 4294901760
        %375 = vmatpush1.msra.mxu0 %v374
        %376 = vmatprep.subr.mxu0 0.0
        %v377 = vand.u32 %v181, 4294901760
        %v378 = vsub.f32 %v181, %v377
        %v379 = vand.u32 %v378, 4294901760
        %v380 = vsub.f32 %v378, %v379
        %v381 = vand.u32 %v380, 4294901760
        %382 = vmatpush1.msra.mxu0 %v381
        %383 = vmatprep.subr.mxu0 0.0
        %v384 = vand.u32 %v182, 4294901760
        %v385 = vsub.f32 %v182, %v384
        %v386 = vand.u32 %v385, 4294901760
        %v387 = vsub.f32 %v385, %v386
        %v388 = vand.u32 %v387, 4294901760
        %389 = vmatpush1.msra.mxu0 %v388
        %390 = vmatprep.subr.mxu0 0.0
        %v391 = vand.u32 %v183, 4294901760
        %v392 = vsub.f32 %v183, %v391
        %v393 = vand.u32 %v392, 4294901760
        %v394 = vsub.f32 %v392, %v393
        %v395 = vand.u32 %v394, 4294901760
        %396 = vmatpush1.msra.mxu0 %v395
        %397 = vmatprep.subr.mxu0 0.0
        %v398 = vand.u32 %v184, 4294901760
        %v399 = vsub.f32 %v184, %v398
        %v400 = vand.u32 %v399, 4294901760
        %v401 = vsub.f32 %v399, %v400
        %v402 = vand.u32 %v401, 4294901760
        %403 = vmatpush1.msra.mxu0 %v402
        %404 = vmatprep.subr.mxu0 0.0
        %v405 = vand.u32 %v185, 4294901760
        %v406 = vsub.f32 %v185, %v405
        %v407 = vand.u32 %v406, 4294901760
        %v408 = vsub.f32 %v406, %v407
        %v409 = vand.u32 %v408, 4294901760
        %410 = vmatpush1.msra.mxu0 %v409
        %411 = vmatprep.subr.mxu0 0.0
        %v412 = vand.u32 %v186, 4294901760
        %v413 = vsub.f32 %v186, %v412
        %v414 = vand.u32 %v413, 4294901760
        %v415 = vsub.f32 %v413, %v414
        %v416 = vand.u32 %v415, 4294901760
        %417 = vmatpush1.msra.mxu0 %v416
        %418 = vmatprep.subr.mxu0 0.0
        %v419 = vand.u32 %v187, 4294901760
        %v420 = vsub.f32 %v187, %v419
        %v421 = vand.u32 %v420, 4294901760
        %v422 = vsub.f32 %v420, %v421
        %v423 = vand.u32 %v422, 4294901760
        %424 = vmatpush1.msra.mxu0 %v423
        %425 = vmatprep.subr.mxu0 0.0
        %v426 = vand.u32 %v188, 4294901760
        %v427 = vsub.f32 %v188, %v426
        %v428 = vand.u32 %v427, 4294901760
        %v429 = vsub.f32 %v427, %v428
        %v430 = vand.u32 %v429, 4294901760
        %431 = vmatpush1.msra.mxu0 %v430
        %432 = vmatprep.subr.mxu0 0.0
        %v433 = vand.u32 %v189, 4294901760
        %v434 = vsub.f32 %v189, %v433
        %v435 = vand.u32 %v434, 4294901760
        %v436 = vsub.f32 %v434, %v435
        %v437 = vand.u32 %v436, 4294901760
        %438 = vmatpush1.msra.mxu0 %v437
        %439 = vmatprep.subr.mxu0 0.0
        %v440 = vand.u32 %v190, 4294901760
        %v441 = vsub.f32 %v190, %v440
        %v442 = vand.u32 %v441, 4294901760
        %v443 = vsub.f32 %v441, %v442
        %v444 = vand.u32 %v443, 4294901760
        %445 = vmatpush1.msra.mxu0 %v444
        %446 = vmatprep.subr.mxu0 0.0
        %v447 = vand.u32 %v191, 4294901760
        %v448 = vsub.f32 %v191, %v447
        %v449 = vand.u32 %v448, 4294901760
        %v450 = vsub.f32 %v448, %v449
        %v451 = vand.u32 %v450, 4294901760
        %452 = vmatpush1.msra.mxu0 %v451
        %453 = vmatprep.subr.mxu0 0.0
        %v454 = vand.u32 %v192, 4294901760
        %v455 = vsub.f32 %v192, %v454
        %v456 = vand.u32 %v455, 4294901760
        %v457 = vsub.f32 %v455, %v456
        %v458 = vand.u32 %v457, 4294901760
        %459 = vmatpush1.msra.mxu0 %v458
        %460 = vmatprep.subr.mxu0 0.0
        %v461 = vand.u32 %v193, 4294901760
        %v462 = vsub.f32 %v193, %v461
        %v463 = vand.u32 %v462, 4294901760
        %v464 = vsub.f32 %v462, %v463
        %v465 = vand.u32 %v464, 4294901760
        %466 = vmatpush1.msra.mxu0 %v465
        %467 = vmatprep.subr.mxu0 0.0
        %v468 = vand.u32 %v194, 4294901760
        %v469 = vsub.f32 %v194, %v468
        %v470 = vand.u32 %v469, 4294901760
        %v471 = vsub.f32 %v469, %v470
        %v472 = vand.u32 %v471, 4294901760
        %473 = vmatpush1.msra.mxu0 %v472
        %474 = vmatprep.subr.mxu0 0.0
        %v475 = vand.u32 %v195, 4294901760
        %v476 = vsub.f32 %v195, %v475
        %v477 = vand.u32 %v476, 4294901760
        %v478 = vsub.f32 %v476, %v477
        %v479 = vand.u32 %v478, 4294901760
        %480 = vmatpush1.msra.mxu0 %v479
        %481 = vmatprep.subr.mxu0 0.0
        %v482 = vand.u32 %v196, 4294901760
        %v483 = vsub.f32 %v196, %v482
        %v484 = vand.u32 %v483, 4294901760
        %v485 = vsub.f32 %v483, %v484
        %v486 = vand.u32 %v485, 4294901760
        %487 = vmatpush1.msra.mxu0 %v486
        %488 = vmatprep.subr.mxu0 0.0
        %v489 = vand.u32 %v197, 4294901760
        %v490 = vsub.f32 %v197, %v489
        %v491 = vand.u32 %v490, 4294901760
        %v492 = vsub.f32 %v490, %v491
        %v493 = vand.u32 %v492, 4294901760
        %494 = vmatpush1.msra.mxu0 %v493
        %495 = vmatprep.subr.mxu0 0.0
        %v496 = vand.u32 %v198, 4294901760
        %v497 = vsub.f32 %v198, %v496
        %v498 = vand.u32 %v497, 4294901760
        %v499 = vsub.f32 %v497, %v498
        %v500 = vand.u32 %v499, 4294901760
        %501 = vmatpush1.msra.mxu0 %v500
        %502 = vmatprep.subr.mxu0 0.0
        %v503 = vand.u32 %v199, 4294901760
        %v504 = vsub.f32 %v199, %v503
        %v505 = vand.u32 %v504, 4294901760
        %v506 = vsub.f32 %v504, %v505
        %v507 = vand.u32 %v506, 4294901760
        %508 = vmatpush1.msra.mxu0 %v507
        %509 = vmatprep.subr.mxu0 0.0
        %v510 = vand.u32 %v200, 4294901760
        %v511 = vsub.f32 %v200, %v510
        %v512 = vand.u32 %v511, 4294901760
        %v513 = vsub.f32 %v511, %v512
        %v514 = vand.u32 %v513, 4294901760
        %515 = vmatpush1.msra.mxu0 %v514
        %516 = vmatprep.subr.mxu0 0.0
        %v517 = vand.u32 %v201, 4294901760
        %v518 = vsub.f32 %v201, %v517
        %v519 = vand.u32 %v518, 4294901760
        %v520 = vsub.f32 %v518, %v519
        %v521 = vand.u32 %v520, 4294901760
        %522 = vmatpush1.msra.mxu0 %v521
        %523 = vmatprep.subr.mxu0 0.0
        %v524 = vand.u32 %v202, 4294901760
        %v525 = vsub.f32 %v202, %v524
        %v526 = vand.u32 %v525, 4294901760
        %v527 = vsub.f32 %v525, %v526
        %v528 = vand.u32 %v527, 4294901760
        %529 = vmatpush1.msra.mxu0 %v528
        %530 = vmatprep.subr.mxu0 0.0
        %v531 = vand.u32 %v203, 4294901760
        %v532 = vsub.f32 %v203, %v531
        %v533 = vand.u32 %v532, 4294901760
        %v534 = vsub.f32 %v532, %v533
        %v535 = vand.u32 %v534, 4294901760
        %536 = vmatpush1.msra.mxu0 %v535
        %537 = vmatprep.subr.mxu0 0.0
        %v538 = vand.u32 %v204, 4294901760
        %v539 = vsub.f32 %v204, %v538
        %v540 = vand.u32 %v539, 4294901760
        %v541 = vsub.f32 %v539, %v540
        %v542 = vand.u32 %v541, 4294901760
        %543 = vmatpush1.msra.mxu0 %v542
        %v544 = vand.u32 %v206, 4294901760
        %545 = vmatprep.mubr.f32.mxu0 %v544
        %v546 = vand.u32 %v172, 4294901760
        %547 = vmatmul.mubr.f32.gmra.mrb[0].mxu0 %v546
        %v548 = vpop.f32.mrb[0].mxu0
        %v549 = vadd.f32 %v317, %v548
        %v550 = vpop.f32.mrb[0].mxu0
        %551 = vdwg.mxu0
        %552 = vmatprep.subr.mxu0 0.0
        %v553 = vand.u32 %v173, 4294901760
        %v554 = vsub.f32 %v173, %v553
        %555 = vmatpush1.msra.mxu0 %v554
        %556 = vmatprep.subr.mxu0 0.0
        %v557 = vand.u32 %v174, 4294901760
        %v558 = vsub.f32 %v174, %v557
        %559 = vmatpush1.msra.mxu0 %v558
        %560 = vmatprep.subr.mxu0 0.0
        %v561 = vand.u32 %v175, 4294901760
        %v562 = vsub.f32 %v175, %v561
        %563 = vmatpush1.msra.mxu0 %v562
        %564 = vmatprep.subr.mxu0 0.0
        %v565 = vand.u32 %v176, 4294901760
        %v566 = vsub.f32 %v176, %v565
        %567 = vmatpush1.msra.mxu0 %v566
        %568 = vmatprep.subr.mxu0 0.0
        %v569 = vand.u32 %v177, 4294901760
        %v570 = vsub.f32 %v177, %v569
        %571 = vmatpush1.msra.mxu0 %v570
        %572 = vmatprep.subr.mxu0 0.0
        %v573 = vand.u32 %v178, 4294901760
        %v574 = vsub.f32 %v178, %v573
        %575 = vmatpush1.msra.mxu0 %v574
        %576 = vmatprep.subr.mxu0 0.0
        %v577 = vand.u32 %v179, 4294901760
        %v578 = vsub.f32 %v179, %v577
        %579 = vmatpush1.msra.mxu0 %v578
        %580 = vmatprep.subr.mxu0 0.0
        %v581 = vand.u32 %v180, 4294901760
        %v582 = vsub.f32 %v180, %v581
        %583 = vmatpush1.msra.mxu0 %v582
        %584 = vmatprep.subr.mxu0 0.0
        %v585 = vand.u32 %v181, 4294901760
        %v586 = vsub.f32 %v181, %v585
        %587 = vmatpush1.msra.mxu0 %v586
        %588 = vmatprep.subr.mxu0 0.0
        %v589 = vand.u32 %v182, 4294901760
        %v590 = vsub.f32 %v182, %v589
        %591 = vmatpush1.msra.mxu0 %v590
        %592 = vmatprep.subr.mxu0 0.0
        %v593 = vand.u32 %v183, 4294901760
        %v594 = vsub.f32 %v183, %v593
        %595 = vmatpush1.msra.mxu0 %v594
        %596 = vmatprep.subr.mxu0 0.0
        %v597 = vand.u32 %v184, 4294901760
        %v598 = vsub.f32 %v184, %v597
        %599 = vmatpush1.msra.mxu0 %v598
        %600 = vmatprep.subr.mxu0 0.0
        %v601 = vand.u32 %v185, 4294901760
        %v602 = vsub.f32 %v185, %v601
        %603 = vmatpush1.msra.mxu0 %v602
        %604 = vmatprep.subr.mxu0 0.0
        %v605 = vand.u32 %v186, 4294901760
        %v606 = vsub.f32 %v186, %v605
        %607 = vmatpush1.msra.mxu0 %v606
        %608 = vmatprep.subr.mxu0 0.0
        %v609 = vand.u32 %v187, 4294901760
        %v610 = vsub.f32 %v187, %v609
        %611 = vmatpush1.msra.mxu0 %v610
        %612 = vmatprep.subr.mxu0 0.0
        %v613 = vand.u32 %v188, 4294901760
        %v614 = vsub.f32 %v188, %v613
        %615 = vmatpush1.msra.mxu0 %v614
        %616 = vmatprep.subr.mxu0 0.0
        %v617 = vand.u32 %v189, 4294901760
        %v618 = vsub.f32 %v189, %v617
        %619 = vmatpush1.msra.mxu0 %v618
        %620 = vmatprep.subr.mxu0 0.0
        %v621 = vand.u32 %v190, 4294901760
        %v622 = vsub.f32 %v190, %v621
        %623 = vmatpush1.msra.mxu0 %v622
        %624 = vmatprep.subr.mxu0 0.0
        %v625 = vand.u32 %v191, 4294901760
        %v626 = vsub.f32 %v191, %v625
        %627 = vmatpush1.msra.mxu0 %v626
        %628 = vmatprep.subr.mxu0 0.0
        %v629 = vand.u32 %v192, 4294901760
        %v630 = vsub.f32 %v192, %v629
        %631 = vmatpush1.msra.mxu0 %v630
        %632 = vmatprep.subr.mxu0 0.0
        %v633 = vand.u32 %v193, 4294901760
        %v634 = vsub.f32 %v193, %v633
        %635 = vmatpush1.msra.mxu0 %v634
        %636 = vmatprep.subr.mxu0 0.0
        %v637 = vand.u32 %v194, 4294901760
        %v638 = vsub.f32 %v194, %v637
        %639 = vmatpush1.msra.mxu0 %v638
        %640 = vmatprep.subr.mxu0 0.0
        %v641 = vand.u32 %v195, 4294901760
        %v642 = vsub.f32 %v195, %v641
        %643 = vmatpush1.msra.mxu0 %v642
        %644 = vmatprep.subr.mxu0 0.0
        %v645 = vand.u32 %v196, 4294901760
        %v646 = vsub.f32 %v196, %v645
        %647 = vmatpush1.msra.mxu0 %v646
        %648 = vmatprep.subr.mxu0 0.0
        %v649 = vand.u32 %v197, 4294901760
        %v650 = vsub.f32 %v197, %v649
        %651 = vmatpush1.msra.mxu0 %v650
        %652 = vmatprep.subr.mxu0 0.0
        %v653 = vand.u32 %v198, 4294901760
        %v654 = vsub.f32 %v198, %v653
        %655 = vmatpush1.msra.mxu0 %v654
        %656 = vmatprep.subr.mxu0 0.0
        %v657 = vand.u32 %v199, 4294901760
        %v658 = vsub.f32 %v199, %v657
        %659 = vmatpush1.msra.mxu0 %v658
        %660 = vmatprep.subr.mxu0 0.0
        %v661 = vand.u32 %v200, 4294901760
        %v662 = vsub.f32 %v200, %v661
        %663 = vmatpush1.msra.mxu0 %v662
        %664 = vmatprep.subr.mxu0 0.0
        %v665 = vand.u32 %v201, 4294901760
        %v666 = vsub.f32 %v201, %v665
        %667 = vmatpush1.msra.mxu0 %v666
        %668 = vmatprep.subr.mxu0 0.0
        %v669 = vand.u32 %v202, 4294901760
        %v670 = vsub.f32 %v202, %v669
        %671 = vmatpush1.msra.mxu0 %v670
        %672 = vmatprep.subr.mxu0 0.0
        %v673 = vand.u32 %v203, 4294901760
        %v674 = vsub.f32 %v203, %v673
        %675 = vmatpush1.msra.mxu0 %v674
        %676 = vmatprep.subr.mxu0 0.0
        %v677 = vand.u32 %v204, 4294901760
        %v678 = vsub.f32 %v204, %v677
        %679 = vmatpush1.msra.mxu0 %v678
        %v680 = vand.u32 %v206, 4294901760
        %v681 = vsub.f32 %v206, %v680
        %682 = vmatprep.mubr.f32.mxu0 %v681
        %v683 = vand.u32 %v172, 4294901760
        %v684 = vsub.f32 %v172, %v683
        %685 = vmatmul.mubr.f32.gmra.mrb[0].mxu0 %v684
        %v686 = vpop.f32.mrb[0].mxu0
        %v687 = vadd.f32 %v549, %v686
        %v688 = vpop.f32.mrb[0].mxu0
        %689 = vdwg.mxu0
        %690 = vmatprep.subr.mxu0 0.0
        %v691 = vand.u32 %v173, 4294901760
        %692 = vmatpush1.msra.mxu0 %v691
        %693 = vmatprep.subr.mxu0 0.0
        %v694 = vand.u32 %v174, 4294901760
        %695 = vmatpush1.msra.mxu0 %v694
        %696 = vmatprep.subr.mxu0 0.0
        %v697 = vand.u32 %v175, 4294901760
        %698 = vmatpush1.msra.mxu0 %v697
        %699 = vmatprep.subr.mxu0 0.0
        %v700 = vand.u32 %v176, 4294901760
        %701 = vmatpush1.msra.mxu0 %v700
        %702 = vmatprep.subr.mxu0 0.0
        %v703 = vand.u32 %v177, 4294901760
        %704 = vmatpush1.msra.mxu0 %v703
        %705 = vmatprep.subr.mxu0 0.0
        %v706 = vand.u32 %v178, 4294901760
        %707 = vmatpush1.msra.mxu0 %v706
        %708 = vmatprep.subr.mxu0 0.0
        %v709 = vand.u32 %v179, 4294901760
        %710 = vmatpush1.msra.mxu0 %v709
        %711 = vmatprep.subr.mxu0 0.0
        %v712 = vand.u32 %v180, 4294901760
        %713 = vmatpush1.msra.mxu0 %v712
        %714 = vmatprep.subr.mxu0 0.0
        %v715 = vand.u32 %v181, 4294901760
        %716 = vmatpush1.msra.mxu0 %v715
        %717 = vmatprep.subr.mxu0 0.0
        %v718 = vand.u32 %v182, 4294901760
        %719 = vmatpush1.msra.mxu0 %v718
        %720 = vmatprep.subr.mxu0 0.0
        %v721 = vand.u32 %v183, 4294901760
        %722 = vmatpush1.msra.mxu0 %v721
        %723 = vmatprep.subr.mxu0 0.0
        %v724 = vand.u32 %v184, 4294901760
        %725 = vmatpush1.msra.mxu0 %v724
        %726 = vmatprep.subr.mxu0 0.0
        %v727 = vand.u32 %v185, 4294901760
        %728 = vmatpush1.msra.mxu0 %v727
        %729 = vmatprep.subr.mxu0 0.0
        %v730 = vand.u32 %v186, 4294901760
        %731 = vmatpush1.msra.mxu0 %v730
        %732 = vmatprep.subr.mxu0 0.0
        %v733 = vand.u32 %v187, 4294901760
        %734 = vmatpush1.msra.mxu0 %v733
        %735 = vmatprep.subr.mxu0 0.0
        %v736 = vand.u32 %v188, 4294901760
        %737 = vmatpush1.msra.mxu0 %v736
        %738 = vmatprep.subr.mxu0 0.0
        %v739 = vand.u32 %v189, 4294901760
        %740 = vmatpush1.msra.mxu0 %v739
        %741 = vmatprep.subr.mxu0 0.0
        %v742 = vand.u32 %v190, 4294901760
        %743 = vmatpush1.msra.mxu0 %v742
        %744 = vmatprep.subr.mxu0 0.0
        %v745 = vand.u32 %v191, 4294901760
        %746 = vmatpush1.msra.mxu0 %v745
        %747 = vmatprep.subr.mxu0 0.0
        %v748 = vand.u32 %v192, 4294901760
        %749 = vmatpush1.msra.mxu0 %v748
        %750 = vmatprep.subr.mxu0 0.0
        %v751 = vand.u32 %v193, 4294901760
        %752 = vmatpush1.msra.mxu0 %v751
        %753 = vmatprep.subr.mxu0 0.0
        %v754 = vand.u32 %v194, 4294901760
        %755 = vmatpush1.msra.mxu0 %v754
        %756 = vmatprep.subr.mxu0 0.0
        %v757 = vand.u32 %v195, 4294901760
        %758 = vmatpush1.msra.mxu0 %v757
        %759 = vmatprep.subr.mxu0 0.0
        %v760 = vand.u32 %v196, 4294901760
        %761 = vmatpush1.msra.mxu0 %v760
        %762 = vmatprep.subr.mxu0 0.0
        %v763 = vand.u32 %v197, 4294901760
        %764 = vmatpush1.msra.mxu0 %v763
        %765 = vmatprep.subr.mxu0 0.0
        %v766 = vand.u32 %v198, 4294901760
        %767 = vmatpush1.msra.mxu0 %v766
        %768 = vmatprep.subr.mxu0 0.0
        %v769 = vand.u32 %v199, 4294901760
        %770 = vmatpush1.msra.mxu0 %v769
        %771 = vmatprep.subr.mxu0 0.0
        %v772 = vand.u32 %v200, 4294901760
        %773 = vmatpush1.msra.mxu0 %v772
        %774 = vmatprep.subr.mxu0 0.0
        %v775 = vand.u32 %v201, 4294901760
        %776 = vmatpush1.msra.mxu0 %v775
        %777 = vmatprep.subr.mxu0 0.0
        %v778 = vand.u32 %v202, 4294901760
        %779 = vmatpush1.msra.mxu0 %v778
        %780 = vmatprep.subr.mxu0 0.0
        %v781 = vand.u32 %v203, 4294901760
        %782 = vmatpush1.msra.mxu0 %v781
        %783 = vmatprep.subr.mxu0 0.0
        %v784 = vand.u32 %v204, 4294901760
        %785 = vmatpush1.msra.mxu0 %v784
        %v786 = vand.u32 %v206, 4294901760
        %v787 = vsub.f32 %v206, %v786
        %v788 = vand.u32 %v787, 4294901760
        %789 = vmatprep.mubr.f32.mxu0 %v788
        %v790 = vand.u32 %v172, 4294901760
        %v791 = vsub.f32 %v172, %v790
        %v792 = vand.u32 %v791, 4294901760
        %793 = vmatmul.mubr.f32.gmra.mrb[0].mxu0 %v792
        %v794 = vpop.f32.mrb[0].mxu0
        %v795 = vadd.f32 %v687, %v794
        %v796 = vpop.f32.mrb[0].mxu0
        %797 = vdwg.mxu0
        %798 = vmatprep.subr.mxu0 0.0
        %v799 = vand.u32 %v173, 4294901760
        %v800 = vsub.f32 %v173, %v799
        %v801 = vand.u32 %v800, 4294901760
        %802 = vmatpush1.msra.mxu0 %v801
        %803 = vmatprep.subr.mxu0 0.0
        %v804 = vand.u32 %v174, 4294901760
        %v805 = vsub.f32 %v174, %v804
        %v806 = vand.u32 %v805, 4294901760
        %807 = vmatpush1.msra.mxu0 %v806
        %808 = vmatprep.subr.mxu0 0.0
        %v809 = vand.u32 %v175, 4294901760
        %v810 = vsub.f32 %v175, %v809
        %v811 = vand.u32 %v810, 4294901760
        %812 = vmatpush1.msra.mxu0 %v811
        %813 = vmatprep.subr.mxu0 0.0
        %v814 = vand.u32 %v176, 4294901760
        %v815 = vsub.f32 %v176, %v814
        %v816 = vand.u32 %v815, 4294901760
        %817 = vmatpush1.msra.mxu0 %v816
        %818 = vmatprep.subr.mxu0 0.0
        %v819 = vand.u32 %v177, 4294901760
        %v820 = vsub.f32 %v177, %v819
        %v821 = vand.u32 %v820, 4294901760
        %822 = vmatpush1.msra.mxu0 %v821
        %823 = vmatprep.subr.mxu0 0.0
        %v824 = vand.u32 %v178, 4294901760
        %v825 = vsub.f32 %v178, %v824
        %v826 = vand.u32 %v825, 4294901760
        %827 = vmatpush1.msra.mxu0 %v826
        %828 = vmatprep.subr.mxu0 0.0
        %v829 = vand.u32 %v179, 4294901760
        %v830 = vsub.f32 %v179, %v829
        %v831 = vand.u32 %v830, 4294901760
        %832 = vmatpush1.msra.mxu0 %v831
        %833 = vmatprep.subr.mxu0 0.0
        %v834 = vand.u32 %v180, 4294901760
        %v835 = vsub.f32 %v180, %v834
        %v836 = vand.u32 %v835, 4294901760
        %837 = vmatpush1.msra.mxu0 %v836
        %838 = vmatprep.subr.mxu0 0.0
        %v839 = vand.u32 %v181, 4294901760
        %v840 = vsub.f32 %v181, %v839
        %v841 = vand.u32 %v840, 4294901760
        %842 = vmatpush1.msra.mxu0 %v841
        %843 = vmatprep.subr.mxu0 0.0
        %v844 = vand.u32 %v182, 4294901760
        %v845 = vsub.f32 %v182, %v844
        %v846 = vand.u32 %v845, 4294901760
        %847 = vmatpush1.msra.mxu0 %v846
        %848 = vmatprep.subr.mxu0 0.0
        %v849 = vand.u32 %v183, 4294901760
        %v850 = vsub.f32 %v183, %v849
        %v851 = vand.u32 %v850, 4294901760
        %852 = vmatpush1.msra.mxu0 %v851
        %853 = vmatprep.subr.mxu0 0.0
        %v854 = vand.u32 %v184, 4294901760
        %v855 = vsub.f32 %v184, %v854
        %v856 = vand.u32 %v855, 4294901760
        %857 = vmatpush1.msra.mxu0 %v856
        %858 = vmatprep.subr.mxu0 0.0
        %v859 = vand.u32 %v185, 4294901760
        %v860 = vsub.f32 %v185, %v859
        %v861 = vand.u32 %v860, 4294901760
        %862 = vmatpush1.msra.mxu0 %v861
        %863 = vmatprep.subr.mxu0 0.0
        %v864 = vand.u32 %v186, 4294901760
        %v865 = vsub.f32 %v186, %v864
        %v866 = vand.u32 %v865, 4294901760
        %867 = vmatpush1.msra.mxu0 %v866
        %868 = vmatprep.subr.mxu0 0.0
        %v869 = vand.u32 %v187, 4294901760
        %v870 = vsub.f32 %v187, %v869
        %v871 = vand.u32 %v870, 4294901760
        %872 = vmatpush1.msra.mxu0 %v871
        %873 = vmatprep.subr.mxu0 0.0
        %v874 = vand.u32 %v188, 4294901760
        %v875 = vsub.f32 %v188, %v874
        %v876 = vand.u32 %v875, 4294901760
        %877 = vmatpush1.msra.mxu0 %v876
        %878 = vmatprep.subr.mxu0 0.0
        %v879 = vand.u32 %v189, 4294901760
        %v880 = vsub.f32 %v189, %v879
        %v881 = vand.u32 %v880, 4294901760
        %882 = vmatpush1.msra.mxu0 %v881
        %883 = vmatprep.subr.mxu0 0.0
        %v884 = vand.u32 %v190, 4294901760
        %v885 = vsub.f32 %v190, %v884
        %v886 = vand.u32 %v885, 4294901760
        %887 = vmatpush1.msra.mxu0 %v886
        %888 = vmatprep.subr.mxu0 0.0
        %v889 = vand.u32 %v191, 4294901760
        %v890 = vsub.f32 %v191, %v889
        %v891 = vand.u32 %v890, 4294901760
        %892 = vmatpush1.msra.mxu0 %v891
        %893 = vmatprep.subr.mxu0 0.0
        %v894 = vand.u32 %v192, 4294901760
        %v895 = vsub.f32 %v192, %v894
        %v896 = vand.u32 %v895, 4294901760
        %897 = vmatpush1.msra.mxu0 %v896
        %898 = vmatprep.subr.mxu0 0.0
        %v899 = vand.u32 %v193, 4294901760
        %v900 = vsub.f32 %v193, %v899
        %v901 = vand.u32 %v900, 4294901760
        %902 = vmatpush1.msra.mxu0 %v901
        %903 = vmatprep.subr.mxu0 0.0
        %v904 = vand.u32 %v194, 4294901760
        %v905 = vsub.f32 %v194, %v904
        %v906 = vand.u32 %v905, 4294901760
        %907 = vmatpush1.msra.mxu0 %v906
        %908 = vmatprep.subr.mxu0 0.0
        %v909 = vand.u32 %v195, 4294901760
        %v910 = vsub.f32 %v195, %v909
        %v911 = vand.u32 %v910, 4294901760
        %912 = vmatpush1.msra.mxu0 %v911
        %913 = vmatprep.subr.mxu0 0.0
        %v914 = vand.u32 %v196, 4294901760
        %v915 = vsub.f32 %v196, %v914
        %v916 = vand.u32 %v915, 4294901760
        %917 = vmatpush1.msra.mxu0 %v916
        %918 = vmatprep.subr.mxu0 0.0
        %v919 = vand.u32 %v197, 4294901760
        %v920 = vsub.f32 %v197, %v919
        %v921 = vand.u32 %v920, 4294901760
        %922 = vmatpush1.msra.mxu0 %v921
        %923 = vmatprep.subr.mxu0 0.0
        %v924 = vand.u32 %v198, 4294901760
        %v925 = vsub.f32 %v198, %v924
        %v926 = vand.u32 %v925, 4294901760
        %927 = vmatpush1.msra.mxu0 %v926
        %928 = vmatprep.subr.mxu0 0.0
        %v929 = vand.u32 %v199, 4294901760
        %v930 = vsub.f32 %v199, %v929
        %v931 = vand.u32 %v930, 4294901760
        %932 = vmatpush1.msra.mxu0 %v931
        %933 = vmatprep.subr.mxu0 0.0
        %v934 = vand.u32 %v200, 4294901760
        %v935 = vsub.f32 %v200, %v934
        %v936 = vand.u32 %v935, 4294901760
        %937 = vmatpush1.msra.mxu0 %v936
        %938 = vmatprep.subr.mxu0 0.0
        %v939 = vand.u32 %v201, 4294901760
        %v940 = vsub.f32 %v201, %v939
        %v941 = vand.u32 %v940, 4294901760
        %942 = vmatpush1.msra.mxu0 %v941
        %943 = vmatprep.subr.mxu0 0.0
        %v944 = vand.u32 %v202, 4294901760
        %v945 = vsub.f32 %v202, %v944
        %v946 = vand.u32 %v945, 4294901760
        %947 = vmatpush1.msra.mxu0 %v946
        %948 = vmatprep.subr.mxu0 0.0
        %v949 = vand.u32 %v203, 4294901760
        %v950 = vsub.f32 %v203, %v949
        %v951 = vand.u32 %v950, 4294901760
        %952 = vmatpush1.msra.mxu0 %v951
        %953 = vmatprep.subr.mxu0 0.0
        %v954 = vand.u32 %v204, 4294901760
        %v955 = vsub.f32 %v204, %v954
        %v956 = vand.u32 %v955, 4294901760
        %957 = vmatpush1.msra.mxu0 %v956
        %v958 = vand.u32 %v206, 4294901760
        %959 = vmatprep.mubr.f32.mxu0 %v958
        %v960 = vand.u32 %v172, 4294901760
        %961 = vmatmul.mubr.f32.gmra.mrb[0].mxu0 %v960
        %v962 = vpop.f32.mrb[0].mxu0
        %v963 = vadd.f32 %v795, %v962
        %v964 = vpop.f32.mrb[0].mxu0
        %965 = vdwg.mxu0
        %966 = vmatprep.subr.mxu0 0.0
        %v967 = vand.u32 %v173, 4294901760
        %968 = vmatpush1.msra.mxu0 %v967
        %969 = vmatprep.subr.mxu0 0.0
        %v970 = vand.u32 %v174, 4294901760
        %971 = vmatpush1.msra.mxu0 %v970
        %972 = vmatprep.subr.mxu0 0.0
        %v973 = vand.u32 %v175, 4294901760
        %974 = vmatpush1.msra.mxu0 %v973
        %975 = vmatprep.subr.mxu0 0.0
        %v976 = vand.u32 %v176, 4294901760
        %977 = vmatpush1.msra.mxu0 %v976
        %978 = vmatprep.subr.mxu0 0.0
        %v979 = vand.u32 %v177, 4294901760
        %980 = vmatpush1.msra.mxu0 %v979
        %981 = vmatprep.subr.mxu0 0.0
        %v982 = vand.u32 %v178, 4294901760
        %983 = vmatpush1.msra.mxu0 %v982
        %984 = vmatprep.subr.mxu0 0.0
        %v985 = vand.u32 %v179, 4294901760
        %986 = vmatpush1.msra.mxu0 %v985
        %987 = vmatprep.subr.mxu0 0.0
        %v988 = vand.u32 %v180, 4294901760
        %989 = vmatpush1.msra.mxu0 %v988
        %990 = vmatprep.subr.mxu0 0.0
        %v991 = vand.u32 %v181, 4294901760
        %992 = vmatpush1.msra.mxu0 %v991
        %993 = vmatprep.subr.mxu0 0.0
        %v994 = vand.u32 %v182, 4294901760
        %995 = vmatpush1.msra.mxu0 %v994
        %996 = vmatprep.subr.mxu0 0.0
        %v997 = vand.u32 %v183, 4294901760
        %998 = vmatpush1.msra.mxu0 %v997
        %999 = vmatprep.subr.mxu0 0.0
        %v1000 = vand.u32 %v184, 4294901760
        %1001 = vmatpush1.msra.mxu0 %v1000
        %1002 = vmatprep.subr.mxu0 0.0
        %v1003 = vand.u32 %v185, 4294901760
        %1004 = vmatpush1.msra.mxu0 %v1003
        %1005 = vmatprep.subr.mxu0 0.0
        %v1006 = vand.u32 %v186, 4294901760
        %1007 = vmatpush1.msra.mxu0 %v1006
        %1008 = vmatprep.subr.mxu0 0.0
        %v1009 = vand.u32 %v187, 4294901760
        %1010 = vmatpush1.msra.mxu0 %v1009
        %1011 = vmatprep.subr.mxu0 0.0
        %v1012 = vand.u32 %v188, 4294901760
        %1013 = vmatpush1.msra.mxu0 %v1012
        %1014 = vmatprep.subr.mxu0 0.0
        %v1015 = vand.u32 %v189, 4294901760
        %1016 = vmatpush1.msra.mxu0 %v1015
        %1017 = vmatprep.subr.mxu0 0.0
        %v1018 = vand.u32 %v190, 4294901760
        %1019 = vmatpush1.msra.mxu0 %v1018
        %1020 = vmatprep.subr.mxu0 0.0
        %v1021 = vand.u32 %v191, 4294901760
        %1022 = vmatpush1.msra.mxu0 %v1021
        %1023 = vmatprep.subr.mxu0 0.0
        %v1024 = vand.u32 %v192, 4294901760
        %1025 = vmatpush1.msra.mxu0 %v1024
        %1026 = vmatprep.subr.mxu0 0.0
        %v1027 = vand.u32 %v193, 4294901760
        %1028 = vmatpush1.msra.mxu0 %v1027
        %1029 = vmatprep.subr.mxu0 0.0
        %v1030 = vand.u32 %v194, 4294901760
        %1031 = vmatpush1.msra.mxu0 %v1030
        %1032 = vmatprep.subr.mxu0 0.0
        %v1033 = vand.u32 %v195, 4294901760
        %1034 = vmatpush1.msra.mxu0 %v1033
        %1035 = vmatprep.subr.mxu0 0.0
        %v1036 = vand.u32 %v196, 4294901760
        %1037 = vmatpush1.msra.mxu0 %v1036
        %1038 = vmatprep.subr.mxu0 0.0
        %v1039 = vand.u32 %v197, 4294901760
        %1040 = vmatpush1.msra.mxu0 %v1039
        %1041 = vmatprep.subr.mxu0 0.0
        %v1042 = vand.u32 %v198, 4294901760
        %1043 = vmatpush1.msra.mxu0 %v1042
        %1044 = vmatprep.subr.mxu0 0.0
        %v1045 = vand.u32 %v199, 4294901760
        %1046 = vmatpush1.msra.mxu0 %v1045
        %1047 = vmatprep.subr.mxu0 0.0
        %v1048 = vand.u32 %v200, 4294901760
        %1049 = vmatpush1.msra.mxu0 %v1048
        %1050 = vmatprep.subr.mxu0 0.0
        %v1051 = vand.u32 %v201, 4294901760
        %1052 = vmatpush1.msra.mxu0 %v1051
        %1053 = vmatprep.subr.mxu0 0.0
        %v1054 = vand.u32 %v202, 4294901760
        %1055 = vmatpush1.msra.mxu0 %v1054
        %1056 = vmatprep.subr.mxu0 0.0
        %v1057 = vand.u32 %v203, 4294901760
        %1058 = vmatpush1.msra.mxu0 %v1057
        %1059 = vmatprep.subr.mxu0 0.0
        %v1060 = vand.u32 %v204, 4294901760
        %1061 = vmatpush1.msra.mxu0 %v1060
        %v1062 = vand.u32 %v206, 4294901760
        %1063 = vmatprep.mubr.f32.mxu0 %v1062
        %v1064 = vand.u32 %v172, 4294901760
        %1065 = vmatmul.mubr.f32.gmra.mrb[0].mxu0 %v1064
        %v1066 = vpop.f32.mrb[0].mxu0
        %v1067 = vadd.f32 %v963, %v1066
        %v1068 = vpop.f32.mrb[0].mxu0
        %1069 = vdwg.mxu0
        %vm1070 = vcmask 519168
        %1071 = vst.msk [vmem:[%s161] sm:$0xf] %vm1070, %v1067
        %s1072 = scalar_lea.vmem %s1, 256
        %v1073 = vld [vmem:[%s1072] sm:$0xff]
        %v1074 = vld [vmem:[%s1072 + $0x8] sm:$0xff]
        %v1075 = vld [vmem:[%s1072 + $0x10] sm:$0xff]
        %v1076 = vld [vmem:[%s1072 + $0x18] sm:$0xff]
        %v1077 = vld [vmem:[%s1072 + $0x20] sm:$0xff]
        %v1078 = vld [vmem:[%s1072 + $0x28] sm:$0xff]
        %v1079 = vld [vmem:[%s1072 + $0x30] sm:$0xff]
        %v1080 = vld [vmem:[%s1072 + $0x38] sm:$0xff]
        %v1081 = vld [vmem:[%s1072 + $0x40] sm:$0xff]
        %v1082 = vld [vmem:[%s1072 + $0x48] sm:$0xff]
        %v1083 = vld [vmem:[%s1072 + $0x50] sm:$0xff]
        %v1084 = vld [vmem:[%s1072 + $0x58] sm:$0xff]
        %v1085 = vld [vmem:[%s1072 + $0x60] sm:$0xff]
        %v1086 = vld [vmem:[%s1072 + $0x68] sm:$0xff]
        %v1087 = vld [vmem:[%s1072 + $0x70] sm:$0xff]
        %v1088 = vld [vmem:[%s1072 + $0x78] sm:$0xff]
        %v1089 = vld [vmem:[%s1072 + $0x80] sm:$0xff]
        %v1090 = vld [vmem:[%s1072 + $0x88] sm:$0xff]
        %v1091 = vld [vmem:[%s1072 + $0x90] sm:$0xff]
        %v1092 = vld [vmem:[%s1072 + $0x98] sm:$0xff]
        %v1093 = vld [vmem:[%s1072 + $0xa0] sm:$0xff]
        %v1094 = vld [vmem:[%s1072 + $0xa8] sm:$0xff]
        %v1095 = vld [vmem:[%s1072 + $0xb0] sm:$0xff]
        %v1096 = vld [vmem:[%s1072 + $0xb8] sm:$0xff]
        %v1097 = vld [vmem:[%s1072 + $0xc0] sm:$0xff]
        %v1098 = vld [vmem:[%s1072 + $0xc8] sm:$0xff]
        %v1099 = vld [vmem:[%s1072 + $0xd0] sm:$0xff]
        %v1100 = vld [vmem:[%s1072 + $0xd8] sm:$0xff]
        %v1101 = vld [vmem:[%s1072 + $0xe0] sm:$0xff]
        %v1102 = vld [vmem:[%s1072 + $0xe8] sm:$0xff]
        %v1103 = vld [vmem:[%s1072 + $0xf0] sm:$0xff]
        %v1104 = vld [vmem:[%s1072 + $0xf8] sm:$0xff]
        %1105 = vmatprep.subr.mxu0 0.0
        %v1106 = vand.u32 %v1073, 4294901760
        %1107 = vmatpush1.msra.mxu0 %v1106
        %1108 = vmatprep.subr.mxu0 0.0
        %v1109 = vand.u32 %v1074, 4294901760
        %1110 = vmatpush1.msra.mxu0 %v1109
        %1111 = vmatprep.subr.mxu0 0.0
        %v1112 = vand.u32 %v1075, 4294901760
        %1113 = vmatpush1.msra.mxu0 %v1112
        %1114 = vmatprep.subr.mxu0 0.0
        %v1115 = vand.u32 %v1076, 4294901760
        %1116 = vmatpush1.msra.mxu0 %v1115
        %1117 = vmatprep.subr.mxu0 0.0
        %v1118 = vand.u32 %v1077, 4294901760
        %1119 = vmatpush1.msra.mxu0 %v1118
        %1120 = vmatprep.subr.mxu0 0.0
        %v1121 = vand.u32 %v1078, 4294901760
        %1122 = vmatpush1.msra.mxu0 %v1121
        %1123 = vmatprep.subr.mxu0 0.0
        %v1124 = vand.u32 %v1079, 4294901760
        %1125 = vmatpush1.msra.mxu0 %v1124
        %1126 = vmatprep.subr.mxu0 0.0
        %v1127 = vand.u32 %v1080, 4294901760
        %1128 = vmatpush1.msra.mxu0 %v1127
        %1129 = vmatprep.subr.mxu0 0.0
        %v1130 = vand.u32 %v1081, 4294901760
        %1131 = vmatpush1.msra.mxu0 %v1130
        %1132 = vmatprep.subr.mxu0 0.0
        %v1133 = vand.u32 %v1082, 4294901760
        %1134 = vmatpush1.msra.mxu0 %v1133
        %1135 = vmatprep.subr.mxu0 0.0
        %v1136 = vand.u32 %v1083, 4294901760
        %1137 = vmatpush1.msra.mxu0 %v1136
        %1138 = vmatprep.subr.mxu0 0.0
        %v1139 = vand.u32 %v1084, 4294901760
        %1140 = vmatpush1.msra.mxu0 %v1139
        %1141 = vmatprep.subr.mxu0 0.0
        %v1142 = vand.u32 %v1085, 4294901760
        %1143 = vmatpush1.msra.mxu0 %v1142
        %1144 = vmatprep.subr.mxu0 0.0
        %v1145 = vand.u32 %v1086, 4294901760
        %1146 = vmatpush1.msra.mxu0 %v1145
        %1147 = vmatprep.subr.mxu0 0.0
        %v1148 = vand.u32 %v1087, 4294901760
        %1149 = vmatpush1.msra.mxu0 %v1148
        %1150 = vmatprep.subr.mxu0 0.0
        %v1151 = vand.u32 %v1088, 4294901760
        %1152 = vmatpush1.msra.mxu0 %v1151
        %1153 = vmatprep.subr.mxu0 0.0
        %v1154 = vand.u32 %v1089, 4294901760
        %1155 = vmatpush1.msra.mxu0 %v1154
        %1156 = vmatprep.subr.mxu0 0.0
        %v1157 = vand.u32 %v1090, 4294901760
        %1158 = vmatpush1.msra.mxu0 %v1157
        %1159 = vmatprep.subr.mxu0 0.0
        %v1160 = vand.u32 %v1091, 4294901760
        %1161 = vmatpush1.msra.mxu0 %v1160
        %1162 = vmatprep.subr.mxu0 0.0
        %v1163 = vand.u32 %v1092, 4294901760
        %1164 = vmatpush1.msra.mxu0 %v1163
        %1165 = vmatprep.subr.mxu0 0.0
        %v1166 = vand.u32 %v1093, 4294901760
        %1167 = vmatpush1.msra.mxu0 %v1166
        %1168 = vmatprep.subr.mxu0 0.0
        %v1169 = vand.u32 %v1094, 4294901760
        %1170 = vmatpush1.msra.mxu0 %v1169
        %1171 = vmatprep.subr.mxu0 0.0
        %v1172 = vand.u32 %v1095, 4294901760
        %1173 = vmatpush1.msra.mxu0 %v1172
        %1174 = vmatprep.subr.mxu0 0.0
        %v1175 = vand.u32 %v1096, 4294901760
        %1176 = vmatpush1.msra.mxu0 %v1175
        %1177 = vmatprep.subr.mxu0 0.0
        %v1178 = vand.u32 %v1097, 4294901760
        %1179 = vmatpush1.msra.mxu0 %v1178
        %1180 = vmatprep.subr.mxu0 0.0
        %v1181 = vand.u32 %v1098, 4294901760
        %1182 = vmatpush1.msra.mxu0 %v1181
        %1183 = vmatprep.subr.mxu0 0.0
        %v1184 = vand.u32 %v1099, 4294901760
        %1185 = vmatpush1.msra.mxu0 %v1184
        %1186 = vmatprep.subr.mxu0 0.0
        %v1187 = vand.u32 %v1100, 4294901760
        %1188 = vmatpush1.msra.mxu0 %v1187
        %1189 = vmatprep.subr.mxu0 0.0
        %v1190 = vand.u32 %v1101, 4294901760
        %1191 = vmatpush1.msra.mxu0 %v1190
        %1192 = vmatprep.subr.mxu0 0.0
        %v1193 = vand.u32 %v1102, 4294901760
        %1194 = vmatpush1.msra.mxu0 %v1193
        %1195 = vmatprep.subr.mxu0 0.0
        %v1196 = vand.u32 %v1103, 4294901760
        %1197 = vmatpush1.msra.mxu0 %v1196
        %1198 = vmatprep.subr.mxu0 0.0
        %v1199 = vand.u32 %v1104, 4294901760
        %1200 = vmatpush1.msra.mxu0 %v1199
        %v1201 = vand.u32 %v206, 4294901760
        %v1202 = vsub.f32 %v206, %v1201
        %v1203 = vand.u32 %v1202, 4294901760
        %v1204 = vsub.f32 %v1202, %v1203
        %v1205 = vand.u32 %v1204, 4294901760
        %1206 = vmatprep.mubr.f32.mxu0 %v1205
        %v1207 = vand.u32 %v172, 4294901760
        %v1208 = vsub.f32 %v172, %v1207
        %v1209 = vand.u32 %v1208, 4294901760
        %v1210 = vsub.f32 %v1208, %v1209
        %v1211 = vand.u32 %v1210, 4294901760
        %1212 = vmatmul.mubr.f32.gmra.mrb[0].mxu0 %v1211
        %v1213 = vpop.f32.mrb[0].mxu0
        %v1214 = vadd.f32 0.0, %v1213
        %v1215 = vpop.f32.mrb[0].mxu0
        %1216 = vdwg.mxu0
        %1217 = vmatprep.subr.mxu0 0.0
        %v1218 = vand.u32 %v1073, 4294901760
        %v1219 = vsub.f32 %v1073, %v1218
        %v1220 = vand.u32 %v1219, 4294901760
        %v1221 = vsub.f32 %v1219, %v1220
        %v1222 = vand.u32 %v1221, 4294901760
        %1223 = vmatpush1.msra.mxu0 %v1222
        %1224 = vmatprep.subr.mxu0 0.0
        %v1225 = vand.u32 %v1074, 4294901760
        %v1226 = vsub.f32 %v1074, %v1225
        %v1227 = vand.u32 %v1226, 4294901760
        %v1228 = vsub.f32 %v1226, %v1227
        %v1229 = vand.u32 %v1228, 4294901760
        %1230 = vmatpush1.msra.mxu0 %v1229
        %1231 = vmatprep.subr.mxu0 0.0
        %v1232 = vand.u32 %v1075, 4294901760
        %v1233 = vsub.f32 %v1075, %v1232
        %v1234 = vand.u32 %v1233, 4294901760
        %v1235 = vsub.f32 %v1233, %v1234
        %v1236 = vand.u32 %v1235, 4294901760
        %1237 = vmatpush1.msra.mxu0 %v1236
        %1238 = vmatprep.subr.mxu0 0.0
        %v1239 = vand.u32 %v1076, 4294901760
        %v1240 = vsub.f32 %v1076, %v1239
        %v1241 = vand.u32 %v1240, 4294901760
        %v1242 = vsub.f32 %v1240, %v1241
        %v1243 = vand.u32 %v1242, 4294901760
        %1244 = vmatpush1.msra.mxu0 %v1243
        %1245 = vmatprep.subr.mxu0 0.0
        %v1246 = vand.u32 %v1077, 4294901760
        %v1247 = vsub.f32 %v1077, %v1246
        %v1248 = vand.u32 %v1247, 4294901760
        %v1249 = vsub.f32 %v1247, %v1248
        %v1250 = vand.u32 %v1249, 4294901760
        %1251 = vmatpush1.msra.mxu0 %v1250
        %1252 = vmatprep.subr.mxu0 0.0
        %v1253 = vand.u32 %v1078, 4294901760
        %v1254 = vsub.f32 %v1078, %v1253
        %v1255 = vand.u32 %v1254, 4294901760
        %v1256 = vsub.f32 %v1254, %v1255
        %v1257 = vand.u32 %v1256, 4294901760
        %1258 = vmatpush1.msra.mxu0 %v1257
        %1259 = vmatprep.subr.mxu0 0.0
        %v1260 = vand.u32 %v1079, 4294901760
        %v1261 = vsub.f32 %v1079, %v1260
        %v1262 = vand.u32 %v1261, 4294901760
        %v1263 = vsub.f32 %v1261, %v1262
        %v1264 = vand.u32 %v1263, 4294901760
        %1265 = vmatpush1.msra.mxu0 %v1264
        %1266 = vmatprep.subr.mxu0 0.0
        %v1267 = vand.u32 %v1080, 4294901760
        %v1268 = vsub.f32 %v1080, %v1267
        %v1269 = vand.u32 %v1268, 4294901760
        %v1270 = vsub.f32 %v1268, %v1269
        %v1271 = vand.u32 %v1270, 4294901760
        %1272 = vmatpush1.msra.mxu0 %v1271
        %1273 = vmatprep.subr.mxu0 0.0
        %v1274 = vand.u32 %v1081, 4294901760
        %v1275 = vsub.f32 %v1081, %v1274
        %v1276 = vand.u32 %v1275, 4294901760
        %v1277 = vsub.f32 %v1275, %v1276
        %v1278 = vand.u32 %v1277, 4294901760
        %1279 = vmatpush1.msra.mxu0 %v1278
        %1280 = vmatprep.subr.mxu0 0.0
        %v1281 = vand.u32 %v1082, 4294901760
        %v1282 = vsub.f32 %v1082, %v1281
        %v1283 = vand.u32 %v1282, 4294901760
        %v1284 = vsub.f32 %v1282, %v1283
        %v1285 = vand.u32 %v1284, 4294901760
        %1286 = vmatpush1.msra.mxu0 %v1285
        %1287 = vmatprep.subr.mxu0 0.0
        %v1288 = vand.u32 %v1083, 4294901760
        %v1289 = vsub.f32 %v1083, %v1288
        %v1290 = vand.u32 %v1289, 4294901760
        %v1291 = vsub.f32 %v1289, %v1290
        %v1292 = vand.u32 %v1291, 4294901760
        %1293 = vmatpush1.msra.mxu0 %v1292
        %1294 = vmatprep.subr.mxu0 0.0
        %v1295 = vand.u32 %v1084, 4294901760
        %v1296 = vsub.f32 %v1084, %v1295
        %v1297 = vand.u32 %v1296, 4294901760
        %v1298 = vsub.f32 %v1296, %v1297
        %v1299 = vand.u32 %v1298, 4294901760
        %1300 = vmatpush1.msra.mxu0 %v1299
        %1301 = vmatprep.subr.mxu0 0.0
        %v1302 = vand.u32 %v1085, 4294901760
        %v1303 = vsub.f32 %v1085, %v1302
        %v1304 = vand.u32 %v1303, 4294901760
        %v1305 = vsub.f32 %v1303, %v1304
        %v1306 = vand.u32 %v1305, 4294901760
        %1307 = vmatpush1.msra.mxu0 %v1306
        %1308 = vmatprep.subr.mxu0 0.0
        %v1309 = vand.u32 %v1086, 4294901760
        %v1310 = vsub.f32 %v1086, %v1309
        %v1311 = vand.u32 %v1310, 4294901760
        %v1312 = vsub.f32 %v1310, %v1311
        %v1313 = vand.u32 %v1312, 4294901760
        %1314 = vmatpush1.msra.mxu0 %v1313
        %1315 = vmatprep.subr.mxu0 0.0
        %v1316 = vand.u32 %v1087, 4294901760
        %v1317 = vsub.f32 %v1087, %v1316
        %v1318 = vand.u32 %v1317, 4294901760
        %v1319 = vsub.f32 %v1317, %v1318
        %v1320 = vand.u32 %v1319, 4294901760
        %1321 = vmatpush1.msra.mxu0 %v1320
        %1322 = vmatprep.subr.mxu0 0.0
        %v1323 = vand.u32 %v1088, 4294901760
        %v1324 = vsub.f32 %v1088, %v1323
        %v1325 = vand.u32 %v1324, 4294901760
        %v1326 = vsub.f32 %v1324, %v1325
        %v1327 = vand.u32 %v1326, 4294901760
        %1328 = vmatpush1.msra.mxu0 %v1327
        %1329 = vmatprep.subr.mxu0 0.0
        %v1330 = vand.u32 %v1089, 4294901760
        %v1331 = vsub.f32 %v1089, %v1330
        %v1332 = vand.u32 %v1331, 4294901760
        %v1333 = vsub.f32 %v1331, %v1332
        %v1334 = vand.u32 %v1333, 4294901760
        %1335 = vmatpush1.msra.mxu0 %v1334
        %1336 = vmatprep.subr.mxu0 0.0
        %v1337 = vand.u32 %v1090, 4294901760
        %v1338 = vsub.f32 %v1090, %v1337
        %v1339 = vand.u32 %v1338, 4294901760
        %v1340 = vsub.f32 %v1338, %v1339
        %v1341 = vand.u32 %v1340, 4294901760
        %1342 = vmatpush1.msra.mxu0 %v1341
        %1343 = vmatprep.subr.mxu0 0.0
        %v1344 = vand.u32 %v1091, 4294901760
        %v1345 = vsub.f32 %v1091, %v1344
        %v1346 = vand.u32 %v1345, 4294901760
        %v1347 = vsub.f32 %v1345, %v1346
        %v1348 = vand.u32 %v1347, 4294901760
        %1349 = vmatpush1.msra.mxu0 %v1348
        %1350 = vmatprep.subr.mxu0 0.0
        %v1351 = vand.u32 %v1092, 4294901760
        %v1352 = vsub.f32 %v1092, %v1351
        %v1353 = vand.u32 %v1352, 4294901760
        %v1354 = vsub.f32 %v1352, %v1353
        %v1355 = vand.u32 %v1354, 4294901760
        %1356 = vmatpush1.msra.mxu0 %v1355
        %1357 = vmatprep.subr.mxu0 0.0
        %v1358 = vand.u32 %v1093, 4294901760
        %v1359 = vsub.f32 %v1093, %v1358
        %v1360 = vand.u32 %v1359, 4294901760
        %v1361 = vsub.f32 %v1359, %v1360
        %v1362 = vand.u32 %v1361, 4294901760
        %1363 = vmatpush1.msra.mxu0 %v1362
        %1364 = vmatprep.subr.mxu0 0.0
        %v1365 = vand.u32 %v1094, 4294901760
        %v1366 = vsub.f32 %v1094, %v1365
        %v1367 = vand.u32 %v1366, 4294901760
        %v1368 = vsub.f32 %v1366, %v1367
        %v1369 = vand.u32 %v1368, 4294901760
        %1370 = vmatpush1.msra.mxu0 %v1369
        %1371 = vmatprep.subr.mxu0 0.0
        %v1372 = vand.u32 %v1095, 4294901760
        %v1373 = vsub.f32 %v1095, %v1372
        %v1374 = vand.u32 %v1373, 4294901760
        %v1375 = vsub.f32 %v1373, %v1374
        %v1376 = vand.u32 %v1375, 4294901760
        %1377 = vmatpush1.msra.mxu0 %v1376
        %1378 = vmatprep.subr.mxu0 0.0
        %v1379 = vand.u32 %v1096, 4294901760
        %v1380 = vsub.f32 %v1096, %v1379
        %v1381 = vand.u32 %v1380, 4294901760
        %v1382 = vsub.f32 %v1380, %v1381
        %v1383 = vand.u32 %v1382, 4294901760
        %1384 = vmatpush1.msra.mxu0 %v1383
        %1385 = vmatprep.subr.mxu0 0.0
        %v1386 = vand.u32 %v1097, 4294901760
        %v1387 = vsub.f32 %v1097, %v1386
        %v1388 = vand.u32 %v1387, 4294901760
        %v1389 = vsub.f32 %v1387, %v1388
        %v1390 = vand.u32 %v1389, 4294901760
        %1391 = vmatpush1.msra.mxu0 %v1390
        %1392 = vmatprep.subr.mxu0 0.0
        %v1393 = vand.u32 %v1098, 4294901760
        %v1394 = vsub.f32 %v1098, %v1393
        %v1395 = vand.u32 %v1394, 4294901760
        %v1396 = vsub.f32 %v1394, %v1395
        %v1397 = vand.u32 %v1396, 4294901760
        %1398 = vmatpush1.msra.mxu0 %v1397
        %1399 = vmatprep.subr.mxu0 0.0
        %v1400 = vand.u32 %v1099, 4294901760
        %v1401 = vsub.f32 %v1099, %v1400
        %v1402 = vand.u32 %v1401, 4294901760
        %v1403 = vsub.f32 %v1401, %v1402
        %v1404 = vand.u32 %v1403, 4294901760
        %1405 = vmatpush1.msra.mxu0 %v1404
        %1406 = vmatprep.subr.mxu0 0.0
        %v1407 = vand.u32 %v1100, 4294901760
        %v1408 = vsub.f32 %v1100, %v1407
        %v1409 = vand.u32 %v1408, 4294901760
        %v1410 = vsub.f32 %v1408, %v1409
        %v1411 = vand.u32 %v1410, 4294901760
        %1412 = vmatpush1.msra.mxu0 %v1411
        %1413 = vmatprep.subr.mxu0 0.0
        %v1414 = vand.u32 %v1101, 4294901760
        %v1415 = vsub.f32 %v1101, %v1414
        %v1416 = vand.u32 %v1415, 4294901760
        %v1417 = vsub.f32 %v1415, %v1416
        %v1418 = vand.u32 %v1417, 4294901760
        %1419 = vmatpush1.msra.mxu0 %v1418
        %1420 = vmatprep.subr.mxu0 0.0
        %v1421 = vand.u32 %v1102, 4294901760
        %v1422 = vsub.f32 %v1102, %v1421
        %v1423 = vand.u32 %v1422, 4294901760
        %v1424 = vsub.f32 %v1422, %v1423
        %v1425 = vand.u32 %v1424, 4294901760
        %1426 = vmatpush1.msra.mxu0 %v1425
        %1427 = vmatprep.subr.mxu0 0.0
        %v1428 = vand.u32 %v1103, 4294901760
        %v1429 = vsub.f32 %v1103, %v1428
        %v1430 = vand.u32 %v1429, 4294901760
        %v1431 = vsub.f32 %v1429, %v1430
        %v1432 = vand.u32 %v1431, 4294901760
        %1433 = vmatpush1.msra.mxu0 %v1432
        %1434 = vmatprep.subr.mxu0 0.0
        %v1435 = vand.u32 %v1104, 4294901760
        %v1436 = vsub.f32 %v1104, %v1435
        %v1437 = vand.u32 %v1436, 4294901760
        %v1438 = vsub.f32 %v1436, %v1437
        %v1439 = vand.u32 %v1438, 4294901760
        %1440 = vmatpush1.msra.mxu0 %v1439
        %v1441 = vand.u32 %v206, 4294901760
        %1442 = vmatprep.mubr.f32.mxu0 %v1441
        %v1443 = vand.u32 %v172, 4294901760
        %1444 = vmatmul.mubr.f32.gmra.mrb[0].mxu0 %v1443
        %v1445 = vpop.f32.mrb[0].mxu0
        %v1446 = vadd.f32 %v1214, %v1445
        %v1447 = vpop.f32.mrb[0].mxu0
        %1448 = vdwg.mxu0
        %1449 = vmatprep.subr.mxu0 0.0
        %v1450 = vand.u32 %v1073, 4294901760
        %v1451 = vsub.f32 %v1073, %v1450
        %1452 = vmatpush1.msra.mxu0 %v1451
        %1453 = vmatprep.subr.mxu0 0.0
        %v1454 = vand.u32 %v1074, 4294901760
        %v1455 = vsub.f32 %v1074, %v1454
        %1456 = vmatpush1.msra.mxu0 %v1455
        %1457 = vmatprep.subr.mxu0 0.0
        %v1458 = vand.u32 %v1075, 4294901760
        %v1459 = vsub.f32 %v1075, %v1458
        %1460 = vmatpush1.msra.mxu0 %v1459
        %1461 = vmatprep.subr.mxu0 0.0
        %v1462 = vand.u32 %v1076, 4294901760
        %v1463 = vsub.f32 %v1076, %v1462
        %1464 = vmatpush1.msra.mxu0 %v1463
        %1465 = vmatprep.subr.mxu0 0.0
        %v1466 = vand.u32 %v1077, 4294901760
        %v1467 = vsub.f32 %v1077, %v1466
        %1468 = vmatpush1.msra.mxu0 %v1467
        %1469 = vmatprep.subr.mxu0 0.0
        %v1470 = vand.u32 %v1078, 4294901760
        %v1471 = vsub.f32 %v1078, %v1470
        %1472 = vmatpush1.msra.mxu0 %v1471
        %1473 = vmatprep.subr.mxu0 0.0
        %v1474 = vand.u32 %v1079, 4294901760
        %v1475 = vsub.f32 %v1079, %v1474
        %1476 = vmatpush1.msra.mxu0 %v1475
        %1477 = vmatprep.subr.mxu0 0.0
        %v1478 = vand.u32 %v1080, 4294901760
        %v1479 = vsub.f32 %v1080, %v1478
        %1480 = vmatpush1.msra.mxu0 %v1479
        %1481 = vmatprep.subr.mxu0 0.0
        %v1482 = vand.u32 %v1081, 4294901760
        %v1483 = vsub.f32 %v1081, %v1482
        %1484 = vmatpush1.msra.mxu0 %v1483
        %1485 = vmatprep.subr.mxu0 0.0
        %v1486 = vand.u32 %v1082, 4294901760
        %v1487 = vsub.f32 %v1082, %v1486
        %1488 = vmatpush1.msra.mxu0 %v1487
        %1489 = vmatprep.subr.mxu0 0.0
        %v1490 = vand.u32 %v1083, 4294901760
        %v1491 = vsub.f32 %v1083, %v1490
        %1492 = vmatpush1.msra.mxu0 %v1491
        %1493 = vmatprep.subr.mxu0 0.0
        %v1494 = vand.u32 %v1084, 4294901760
        %v1495 = vsub.f32 %v1084, %v1494
        %1496 = vmatpush1.msra.mxu0 %v1495
        %1497 = vmatprep.subr.mxu0 0.0
        %v1498 = vand.u32 %v1085, 4294901760
        %v1499 = vsub.f32 %v1085, %v1498
        %1500 = vmatpush1.msra.mxu0 %v1499
        %1501 = vmatprep.subr.mxu0 0.0
        %v1502 = vand.u32 %v1086, 4294901760
        %v1503 = vsub.f32 %v1086, %v1502
        %1504 = vmatpush1.msra.mxu0 %v1503
        %1505 = vmatprep.subr.mxu0 0.0
        %v1506 = vand.u32 %v1087, 4294901760
        %v1507 = vsub.f32 %v1087, %v1506
        %1508 = vmatpush1.msra.mxu0 %v1507
        %1509 = vmatprep.subr.mxu0 0.0
        %v1510 = vand.u32 %v1088, 4294901760
        %v1511 = vsub.f32 %v1088, %v1510
        %1512 = vmatpush1.msra.mxu0 %v1511
        %1513 = vmatprep.subr.mxu0 0.0
        %v1514 = vand.u32 %v1089, 4294901760
        %v1515 = vsub.f32 %v1089, %v1514
        %1516 = vmatpush1.msra.mxu0 %v1515
        %1517 = vmatprep.subr.mxu0 0.0
        %v1518 = vand.u32 %v1090, 4294901760
        %v1519 = vsub.f32 %v1090, %v1518
        %1520 = vmatpush1.msra.mxu0 %v1519
        %1521 = vmatprep.subr.mxu0 0.0
        %v1522 = vand.u32 %v1091, 4294901760
        %v1523 = vsub.f32 %v1091, %v1522
        %1524 = vmatpush1.msra.mxu0 %v1523
        %1525 = vmatprep.subr.mxu0 0.0
        %v1526 = vand.u32 %v1092, 4294901760
        %v1527 = vsub.f32 %v1092, %v1526
        %1528 = vmatpush1.msra.mxu0 %v1527
        %1529 = vmatprep.subr.mxu0 0.0
        %v1530 = vand.u32 %v1093, 4294901760
        %v1531 = vsub.f32 %v1093, %v1530
        %1532 = vmatpush1.msra.mxu0 %v1531
        %1533 = vmatprep.subr.mxu0 0.0
        %v1534 = vand.u32 %v1094, 4294901760
        %v1535 = vsub.f32 %v1094, %v1534
        %1536 = vmatpush1.msra.mxu0 %v1535
        %1537 = vmatprep.subr.mxu0 0.0
        %v1538 = vand.u32 %v1095, 4294901760
        %v1539 = vsub.f32 %v1095, %v1538
        %1540 = vmatpush1.msra.mxu0 %v1539
        %1541 = vmatprep.subr.mxu0 0.0
        %v1542 = vand.u32 %v1096, 4294901760
        %v1543 = vsub.f32 %v1096, %v1542
        %1544 = vmatpush1.msra.mxu0 %v1543
        %1545 = vmatprep.subr.mxu0 0.0
        %v1546 = vand.u32 %v1097, 4294901760
        %v1547 = vsub.f32 %v1097, %v1546
        %1548 = vmatpush1.msra.mxu0 %v1547
        %1549 = vmatprep.subr.mxu0 0.0
        %v1550 = vand.u32 %v1098, 4294901760
        %v1551 = vsub.f32 %v1098, %v1550
        %1552 = vmatpush1.msra.mxu0 %v1551
        %1553 = vmatprep.subr.mxu0 0.0
        %v1554 = vand.u32 %v1099, 4294901760
        %v1555 = vsub.f32 %v1099, %v1554
        %1556 = vmatpush1.msra.mxu0 %v1555
        %1557 = vmatprep.subr.mxu0 0.0
        %v1558 = vand.u32 %v1100, 4294901760
        %v1559 = vsub.f32 %v1100, %v1558
        %1560 = vmatpush1.msra.mxu0 %v1559
        %1561 = vmatprep.subr.mxu0 0.0
        %v1562 = vand.u32 %v1101, 4294901760
        %v1563 = vsub.f32 %v1101, %v1562
        %1564 = vmatpush1.msra.mxu0 %v1563
        %1565 = vmatprep.subr.mxu0 0.0
        %v1566 = vand.u32 %v1102, 4294901760
        %v1567 = vsub.f32 %v1102, %v1566
        %1568 = vmatpush1.msra.mxu0 %v1567
        %1569 = vmatprep.subr.mxu0 0.0
        %v1570 = vand.u32 %v1103, 4294901760
        %v1571 = vsub.f32 %v1103, %v1570
        %1572 = vmatpush1.msra.mxu0 %v1571
        %1573 = vmatprep.subr.mxu0 0.0
        %v1574 = vand.u32 %v1104, 4294901760
        %v1575 = vsub.f32 %v1104, %v1574
        %1576 = vmatpush1.msra.mxu0 %v1575
        %v1577 = vand.u32 %v206, 4294901760
        %v1578 = vsub.f32 %v206, %v1577
        %1579 = vmatprep.mubr.f32.mxu0 %v1578
        %v1580 = vand.u32 %v172, 4294901760
        %v1581 = vsub.f32 %v172, %v1580
        %1582 = vmatmul.mubr.f32.gmra.mrb[0].mxu0 %v1581
        %v1583 = vpop.f32.mrb[0].mxu0
        %v1584 = vadd.f32 %v1446, %v1583
        %v1585 = vpop.f32.mrb[0].mxu0
        %1586 = vdwg.mxu0
        %1587 = vmatprep.subr.mxu0 0.0
        %v1588 = vand.u32 %v1073, 4294901760
        %1589 = vmatpush1.msra.mxu0 %v1588
        %1590 = vmatprep.subr.mxu0 0.0
        %v1591 = vand.u32 %v1074, 4294901760
        %1592 = vmatpush1.msra.mxu0 %v1591
        %1593 = vmatprep.subr.mxu0 0.0
        %v1594 = vand.u32 %v1075, 4294901760
        %1595 = vmatpush1.msra.mxu0 %v1594
        %1596 = vmatprep.subr.mxu0 0.0
        %v1597 = vand.u32 %v1076, 4294901760
        %1598 = vmatpush1.msra.mxu0 %v1597
        %1599 = vmatprep.subr.mxu0 0.0
        %v1600 = vand.u32 %v1077, 4294901760
        %1601 = vmatpush1.msra.mxu0 %v1600
        %1602 = vmatprep.subr.mxu0 0.0
        %v1603 = vand.u32 %v1078, 4294901760
        %1604 = vmatpush1.msra.mxu0 %v1603
        %1605 = vmatprep.subr.mxu0 0.0
        %v1606 = vand.u32 %v1079, 4294901760
        %1607 = vmatpush1.msra.mxu0 %v1606
        %1608 = vmatprep.subr.mxu0 0.0
        %v1609 = vand.u32 %v1080, 4294901760
        %1610 = vmatpush1.msra.mxu0 %v1609
        %1611 = vmatprep.subr.mxu0 0.0
        %v1612 = vand.u32 %v1081, 4294901760
        %1613 = vmatpush1.msra.mxu0 %v1612
        %1614 = vmatprep.subr.mxu0 0.0
        %v1615 = vand.u32 %v1082, 4294901760
        %1616 = vmatpush1.msra.mxu0 %v1615
        %1617 = vmatprep.subr.mxu0 0.0
        %v1618 = vand.u32 %v1083, 4294901760
        %1619 = vmatpush1.msra.mxu0 %v1618
        %1620 = vmatprep.subr.mxu0 0.0
        %v1621 = vand.u32 %v1084, 4294901760
        %1622 = vmatpush1.msra.mxu0 %v1621
        %1623 = vmatprep.subr.mxu0 0.0
        %v1624 = vand.u32 %v1085, 4294901760
        %1625 = vmatpush1.msra.mxu0 %v1624
        %1626 = vmatprep.subr.mxu0 0.0
        %v1627 = vand.u32 %v1086, 4294901760
        %1628 = vmatpush1.msra.mxu0 %v1627
        %1629 = vmatprep.subr.mxu0 0.0
        %v1630 = vand.u32 %v1087, 4294901760
        %1631 = vmatpush1.msra.mxu0 %v1630
        %1632 = vmatprep.subr.mxu0 0.0
        %v1633 = vand.u32 %v1088, 4294901760
        %1634 = vmatpush1.msra.mxu0 %v1633
        %1635 = vmatprep.subr.mxu0 0.0
        %v1636 = vand.u32 %v1089, 4294901760
        %1637 = vmatpush1.msra.mxu0 %v1636
        %1638 = vmatprep.subr.mxu0 0.0
        %v1639 = vand.u32 %v1090, 4294901760
        %1640 = vmatpush1.msra.mxu0 %v1639
        %1641 = vmatprep.subr.mxu0 0.0
        %v1642 = vand.u32 %v1091, 4294901760
        %1643 = vmatpush1.msra.mxu0 %v1642
        %1644 = vmatprep.subr.mxu0 0.0
        %v1645 = vand.u32 %v1092, 4294901760
        %1646 = vmatpush1.msra.mxu0 %v1645
        %1647 = vmatprep.subr.mxu0 0.0
        %v1648 = vand.u32 %v1093, 4294901760
        %1649 = vmatpush1.msra.mxu0 %v1648
        %1650 = vmatprep.subr.mxu0 0.0
        %v1651 = vand.u32 %v1094, 4294901760
        %1652 = vmatpush1.msra.mxu0 %v1651
        %1653 = vmatprep.subr.mxu0 0.0
        %v1654 = vand.u32 %v1095, 4294901760
        %1655 = vmatpush1.msra.mxu0 %v1654
        %1656 = vmatprep.subr.mxu0 0.0
        %v1657 = vand.u32 %v1096, 4294901760
        %1658 = vmatpush1.msra.mxu0 %v1657
        %1659 = vmatprep.subr.mxu0 0.0
        %v1660 = vand.u32 %v1097, 4294901760
        %1661 = vmatpush1.msra.mxu0 %v1660
        %1662 = vmatprep.subr.mxu0 0.0
        %v1663 = vand.u32 %v1098, 4294901760
        %1664 = vmatpush1.msra.mxu0 %v1663
        %1665 = vmatprep.subr.mxu0 0.0
        %v1666 = vand.u32 %v1099, 4294901760
        %1667 = vmatpush1.msra.mxu0 %v1666
        %1668 = vmatprep.subr.mxu0 0.0
        %v1669 = vand.u32 %v1100, 4294901760
        %1670 = vmatpush1.msra.mxu0 %v1669
        %1671 = vmatprep.subr.mxu0 0.0
        %v1672 = vand.u32 %v1101, 4294901760
        %1673 = vmatpush1.msra.mxu0 %v1672
        %1674 = vmatprep.subr.mxu0 0.0
        %v1675 = vand.u32 %v1102, 4294901760
        %1676 = vmatpush1.msra.mxu0 %v1675
        %1677 = vmatprep.subr.mxu0 0.0
        %v1678 = vand.u32 %v1103, 4294901760
        %1679 = vmatpush1.msra.mxu0 %v1678
        %1680 = vmatprep.subr.mxu0 0.0
        %v1681 = vand.u32 %v1104, 4294901760
        %1682 = vmatpush1.msra.mxu0 %v1681
        %v1683 = vand.u32 %v206, 4294901760
        %v1684 = vsub.f32 %v206, %v1683
        %v1685 = vand.u32 %v1684, 4294901760
        %1686 = vmatprep.mubr.f32.mxu0 %v1685
        %v1687 = vand.u32 %v172, 4294901760
        %v1688 = vsub.f32 %v172, %v1687
        %v1689 = vand.u32 %v1688, 4294901760
        %1690 = vmatmul.mubr.f32.gmra.mrb[0].mxu0 %v1689
        %v1691 = vpop.f32.mrb[0].mxu0
        %v1692 = vadd.f32 %v1584, %v1691
        %v1693 = vpop.f32.mrb[0].mxu0
        %1694 = vdwg.mxu0
        %1695 = vmatprep.subr.mxu0 0.0
        %v1696 = vand.u32 %v1073, 4294901760
        %v1697 = vsub.f32 %v1073, %v1696
        %v1698 = vand.u32 %v1697, 4294901760
        %1699 = vmatpush1.msra.mxu0 %v1698
        %1700 = vmatprep.subr.mxu0 0.0
        %v1701 = vand.u32 %v1074, 4294901760
        %v1702 = vsub.f32 %v1074, %v1701
        %v1703 = vand.u32 %v1702, 4294901760
        %1704 = vmatpush1.msra.mxu0 %v1703
        %1705 = vmatprep.subr.mxu0 0.0
        %v1706 = vand.u32 %v1075, 4294901760
        %v1707 = vsub.f32 %v1075, %v1706
        %v1708 = vand.u32 %v1707, 4294901760
        %1709 = vmatpush1.msra.mxu0 %v1708
        %1710 = vmatprep.subr.mxu0 0.0
        %v1711 = vand.u32 %v1076, 4294901760
        %v1712 = vsub.f32 %v1076, %v1711
        %v1713 = vand.u32 %v1712, 4294901760
        %1714 = vmatpush1.msra.mxu0 %v1713
        %1715 = vmatprep.subr.mxu0 0.0
        %v1716 = vand.u32 %v1077, 4294901760
        %v1717 = vsub.f32 %v1077, %v1716
        %v1718 = vand.u32 %v1717, 4294901760
        %1719 = vmatpush1.msra.mxu0 %v1718
        %1720 = vmatprep.subr.mxu0 0.0
        %v1721 = vand.u32 %v1078, 4294901760
        %v1722 = vsub.f32 %v1078, %v1721
        %v1723 = vand.u32 %v1722, 4294901760
        %1724 = vmatpush1.msra.mxu0 %v1723
        %1725 = vmatprep.subr.mxu0 0.0
        %v1726 = vand.u32 %v1079, 4294901760
        %v1727 = vsub.f32 %v1079, %v1726
        %v1728 = vand.u32 %v1727, 4294901760
        %1729 = vmatpush1.msra.mxu0 %v1728
        %1730 = vmatprep.subr.mxu0 0.0
        %v1731 = vand.u32 %v1080, 4294901760
        %v1732 = vsub.f32 %v1080, %v1731
        %v1733 = vand.u32 %v1732, 4294901760
        %1734 = vmatpush1.msra.mxu0 %v1733
        %1735 = vmatprep.subr.mxu0 0.0
        %v1736 = vand.u32 %v1081, 4294901760
        %v1737 = vsub.f32 %v1081, %v1736
        %v1738 = vand.u32 %v1737, 4294901760
        %1739 = vmatpush1.msra.mxu0 %v1738
        %1740 = vmatprep.subr.mxu0 0.0
        %v1741 = vand.u32 %v1082, 4294901760
        %v1742 = vsub.f32 %v1082, %v1741
        %v1743 = vand.u32 %v1742, 4294901760
        %1744 = vmatpush1.msra.mxu0 %v1743
        %1745 = vmatprep.subr.mxu0 0.0
        %v1746 = vand.u32 %v1083, 4294901760
        %v1747 = vsub.f32 %v1083, %v1746
        %v1748 = vand.u32 %v1747, 4294901760
        %1749 = vmatpush1.msra.mxu0 %v1748
        %1750 = vmatprep.subr.mxu0 0.0
        %v1751 = vand.u32 %v1084, 4294901760
        %v1752 = vsub.f32 %v1084, %v1751
        %v1753 = vand.u32 %v1752, 4294901760
        %1754 = vmatpush1.msra.mxu0 %v1753
        %1755 = vmatprep.subr.mxu0 0.0
        %v1756 = vand.u32 %v1085, 4294901760
        %v1757 = vsub.f32 %v1085, %v1756
        %v1758 = vand.u32 %v1757, 4294901760
        %1759 = vmatpush1.msra.mxu0 %v1758
        %1760 = vmatprep.subr.mxu0 0.0
        %v1761 = vand.u32 %v1086, 4294901760
        %v1762 = vsub.f32 %v1086, %v1761
        %v1763 = vand.u32 %v1762, 4294901760
        %1764 = vmatpush1.msra.mxu0 %v1763
        %1765 = vmatprep.subr.mxu0 0.0
        %v1766 = vand.u32 %v1087, 4294901760
        %v1767 = vsub.f32 %v1087, %v1766
        %v1768 = vand.u32 %v1767, 4294901760
        %1769 = vmatpush1.msra.mxu0 %v1768
        %1770 = vmatprep.subr.mxu0 0.0
        %v1771 = vand.u32 %v1088, 4294901760
        %v1772 = vsub.f32 %v1088, %v1771
        %v1773 = vand.u32 %v1772, 4294901760
        %1774 = vmatpush1.msra.mxu0 %v1773
        %1775 = vmatprep.subr.mxu0 0.0
        %v1776 = vand.u32 %v1089, 4294901760
        %v1777 = vsub.f32 %v1089, %v1776
        %v1778 = vand.u32 %v1777, 4294901760
        %1779 = vmatpush1.msra.mxu0 %v1778
        %1780 = vmatprep.subr.mxu0 0.0
        %v1781 = vand.u32 %v1090, 4294901760
        %v1782 = vsub.f32 %v1090, %v1781
        %v1783 = vand.u32 %v1782, 4294901760
        %1784 = vmatpush1.msra.mxu0 %v1783
        %1785 = vmatprep.subr.mxu0 0.0
        %v1786 = vand.u32 %v1091, 4294901760
        %v1787 = vsub.f32 %v1091, %v1786
        %v1788 = vand.u32 %v1787, 4294901760
        %1789 = vmatpush1.msra.mxu0 %v1788
        %1790 = vmatprep.subr.mxu0 0.0
        %v1791 = vand.u32 %v1092, 4294901760
        %v1792 = vsub.f32 %v1092, %v1791
        %v1793 = vand.u32 %v1792, 4294901760
        %1794 = vmatpush1.msra.mxu0 %v1793
        %1795 = vmatprep.subr.mxu0 0.0
        %v1796 = vand.u32 %v1093, 4294901760
        %v1797 = vsub.f32 %v1093, %v1796
        %v1798 = vand.u32 %v1797, 4294901760
        %1799 = vmatpush1.msra.mxu0 %v1798
        %1800 = vmatprep.subr.mxu0 0.0
        %v1801 = vand.u32 %v1094, 4294901760
        %v1802 = vsub.f32 %v1094, %v1801
        %v1803 = vand.u32 %v1802, 4294901760
        %1804 = vmatpush1.msra.mxu0 %v1803
        %1805 = vmatprep.subr.mxu0 0.0
        %v1806 = vand.u32 %v1095, 4294901760
        %v1807 = vsub.f32 %v1095, %v1806
        %v1808 = vand.u32 %v1807, 4294901760
        %1809 = vmatpush1.msra.mxu0 %v1808
        %1810 = vmatprep.subr.mxu0 0.0
        %v1811 = vand.u32 %v1096, 4294901760
        %v1812 = vsub.f32 %v1096, %v1811
        %v1813 = vand.u32 %v1812, 4294901760
        %1814 = vmatpush1.msra.mxu0 %v1813
        %1815 = vmatprep.subr.mxu0 0.0
        %v1816 = vand.u32 %v1097, 4294901760
        %v1817 = vsub.f32 %v1097, %v1816
        %v1818 = vand.u32 %v1817, 4294901760
        %1819 = vmatpush1.msra.mxu0 %v1818
        %1820 = vmatprep.subr.mxu0 0.0
        %v1821 = vand.u32 %v1098, 4294901760
        %v1822 = vsub.f32 %v1098, %v1821
        %v1823 = vand.u32 %v1822, 4294901760
        %1824 = vmatpush1.msra.mxu0 %v1823
        %1825 = vmatprep.subr.mxu0 0.0
        %v1826 = vand.u32 %v1099, 4294901760
        %v1827 = vsub.f32 %v1099, %v1826
        %v1828 = vand.u32 %v1827, 4294901760
        %1829 = vmatpush1.msra.mxu0 %v1828
        %1830 = vmatprep.subr.mxu0 0.0
        %v1831 = vand.u32 %v1100, 4294901760
        %v1832 = vsub.f32 %v1100, %v1831
        %v1833 = vand.u32 %v1832, 4294901760
        %1834 = vmatpush1.msra.mxu0 %v1833
        %1835 = vmatprep.subr.mxu0 0.0
        %v1836 = vand.u32 %v1101, 4294901760
        %v1837 = vsub.f32 %v1101, %v1836
        %v1838 = vand.u32 %v1837, 4294901760
        %1839 = vmatpush1.msra.mxu0 %v1838
        %1840 = vmatprep.subr.mxu0 0.0
        %v1841 = vand.u32 %v1102, 4294901760
        %v1842 = vsub.f32 %v1102, %v1841
        %v1843 = vand.u32 %v1842, 4294901760
        %1844 = vmatpush1.msra.mxu0 %v1843
        %1845 = vmatprep.subr.mxu0 0.0
        %v1846 = vand.u32 %v1103, 4294901760
        %v1847 = vsub.f32 %v1103, %v1846
        %v1848 = vand.u32 %v1847, 4294901760
        %1849 = vmatpush1.msra.mxu0 %v1848
        %1850 = vmatprep.subr.mxu0 0.0
        %v1851 = vand.u32 %v1104, 4294901760
        %v1852 = vsub.f32 %v1104, %v1851
        %v1853 = vand.u32 %v1852, 4294901760
        %1854 = vmatpush1.msra.mxu0 %v1853
        %v1855 = vand.u32 %v206, 4294901760
        %1856 = vmatprep.mubr.f32.mxu0 %v1855
        %v1857 = vand.u32 %v172, 4294901760
        %1858 = vmatmul.mubr.f32.gmra.mrb[0].mxu0 %v1857
        %v1859 = vpop.f32.mrb[0].mxu0
        %v1860 = vadd.f32 %v1692, %v1859
        %v1861 = vpop.f32.mrb[0].mxu0
        %1862 = vdwg.mxu0
        %1863 = vmatprep.subr.mxu0 0.0
        %v1864 = vand.u32 %v1073, 4294901760
        %1865 = vmatpush1.msra.mxu0 %v1864
        %1866 = vmatprep.subr.mxu0 0.0
        %v1867 = vand.u32 %v1074, 4294901760
        %1868 = vmatpush1.msra.mxu0 %v1867
        %1869 = vmatprep.subr.mxu0 0.0
        %v1870 = vand.u32 %v1075, 4294901760
        %1871 = vmatpush1.msra.mxu0 %v1870
        %1872 = vmatprep.subr.mxu0 0.0
        %v1873 = vand.u32 %v1076, 4294901760
        %1874 = vmatpush1.msra.mxu0 %v1873
        %1875 = vmatprep.subr.mxu0 0.0
        %v1876 = vand.u32 %v1077, 4294901760
        %1877 = vmatpush1.msra.mxu0 %v1876
        %1878 = vmatprep.subr.mxu0 0.0
        %v1879 = vand.u32 %v1078, 4294901760
        %1880 = vmatpush1.msra.mxu0 %v1879
        %1881 = vmatprep.subr.mxu0 0.0
        %v1882 = vand.u32 %v1079, 4294901760
        %1883 = vmatpush1.msra.mxu0 %v1882
        %1884 = vmatprep.subr.mxu0 0.0
        %v1885 = vand.u32 %v1080, 4294901760
        %1886 = vmatpush1.msra.mxu0 %v1885
        %1887 = vmatprep.subr.mxu0 0.0
        %v1888 = vand.u32 %v1081, 4294901760
        %1889 = vmatpush1.msra.mxu0 %v1888
        %1890 = vmatprep.subr.mxu0 0.0
        %v1891 = vand.u32 %v1082, 4294901760
        %1892 = vmatpush1.msra.mxu0 %v1891
        %1893 = vmatprep.subr.mxu0 0.0
        %v1894 = vand.u32 %v1083, 4294901760
        %1895 = vmatpush1.msra.mxu0 %v1894
        %1896 = vmatprep.subr.mxu0 0.0
        %v1897 = vand.u32 %v1084, 4294901760
        %1898 = vmatpush1.msra.mxu0 %v1897
        %1899 = vmatprep.subr.mxu0 0.0
        %v1900 = vand.u32 %v1085, 4294901760
        %1901 = vmatpush1.msra.mxu0 %v1900
        %1902 = vmatprep.subr.mxu0 0.0
        %v1903 = vand.u32 %v1086, 4294901760
        %1904 = vmatpush1.msra.mxu0 %v1903
        %1905 = vmatprep.subr.mxu0 0.0
        %v1906 = vand.u32 %v1087, 4294901760
        %1907 = vmatpush1.msra.mxu0 %v1906
        %1908 = vmatprep.subr.mxu0 0.0
        %v1909 = vand.u32 %v1088, 4294901760
        %1910 = vmatpush1.msra.mxu0 %v1909
        %1911 = vmatprep.subr.mxu0 0.0
        %v1912 = vand.u32 %v1089, 4294901760
        %1913 = vmatpush1.msra.mxu0 %v1912
        %1914 = vmatprep.subr.mxu0 0.0
        %v1915 = vand.u32 %v1090, 4294901760
        %1916 = vmatpush1.msra.mxu0 %v1915
        %1917 = vmatprep.subr.mxu0 0.0
        %v1918 = vand.u32 %v1091, 4294901760
        %1919 = vmatpush1.msra.mxu0 %v1918
        %1920 = vmatprep.subr.mxu0 0.0
        %v1921 = vand.u32 %v1092, 4294901760
        %1922 = vmatpush1.msra.mxu0 %v1921
        %1923 = vmatprep.subr.mxu0 0.0
        %v1924 = vand.u32 %v1093, 4294901760
        %1925 = vmatpush1.msra.mxu0 %v1924
        %1926 = vmatprep.subr.mxu0 0.0
        %v1927 = vand.u32 %v1094, 4294901760
        %1928 = vmatpush1.msra.mxu0 %v1927
        %1929 = vmatprep.subr.mxu0 0.0
        %v1930 = vand.u32 %v1095, 4294901760
        %1931 = vmatpush1.msra.mxu0 %v1930
        %1932 = vmatprep.subr.mxu0 0.0
        %v1933 = vand.u32 %v1096, 4294901760
        %1934 = vmatpush1.msra.mxu0 %v1933
        %1935 = vmatprep.subr.mxu0 0.0
        %v1936 = vand.u32 %v1097, 4294901760
        %1937 = vmatpush1.msra.mxu0 %v1936
        %1938 = vmatprep.subr.mxu0 0.0
        %v1939 = vand.u32 %v1098, 4294901760
        %1940 = vmatpush1.msra.mxu0 %v1939
        %1941 = vmatprep.subr.mxu0 0.0
        %v1942 = vand.u32 %v1099, 4294901760
        %1943 = vmatpush1.msra.mxu0 %v1942
        %1944 = vmatprep.subr.mxu0 0.0
        %v1945 = vand.u32 %v1100, 4294901760
        %1946 = vmatpush1.msra.mxu0 %v1945
        %1947 = vmatprep.subr.mxu0 0.0
        %v1948 = vand.u32 %v1101, 4294901760
        %1949 = vmatpush1.msra.mxu0 %v1948
        %1950 = vmatprep.subr.mxu0 0.0
        %v1951 = vand.u32 %v1102, 4294901760
        %1952 = vmatpush1.msra.mxu0 %v1951
        %1953 = vmatprep.subr.mxu0 0.0
        %v1954 = vand.u32 %v1103, 4294901760
        %1955 = vmatpush1.msra.mxu0 %v1954
        %1956 = vmatprep.subr.mxu0 0.0
        %v1957 = vand.u32 %v1104, 4294901760
        %1958 = vmatpush1.msra.mxu0 %v1957
        %v1959 = vand.u32 %v206, 4294901760
        %1960 = vmatprep.mubr.f32.mxu0 %v1959
        %v1961 = vand.u32 %v172, 4294901760
        %1962 = vmatmul.mubr.f32.gmra.mrb[0].mxu0 %v1961
        %v1963 = vpop.f32.mrb[0].mxu0
        %v1964 = vadd.f32 %v1860, %v1963
        %v1965 = vpop.f32.mrb[0].mxu0
        %1966 = vdwg.mxu0
        %s1967 = scalar_lea.vmem %s161, 4 [#allocation2]
        %1968 = vst.msk [vmem:[%s1967] sm:$0xf] %vm1070, %v1964
        %s1969 = scalar_lea.vmem %s1, 512
        %v1970 = vld [vmem:[%s1969] sm:$0xff]
        %v1971 = vld [vmem:[%s1969 + $0x8] sm:$0xff]
        %v1972 = vld [vmem:[%s1969 + $0x10] sm:$0xff]
        %v1973 = vld [vmem:[%s1969 + $0x18] sm:$0xff]
        %v1974 = vld [vmem:[%s1969 + $0x20] sm:$0xff]
        %v1975 = vld [vmem:[%s1969 + $0x28] sm:$0xff]
        %v1976 = vld [vmem:[%s1969 + $0x30] sm:$0xff]
        %v1977 = vld [vmem:[%s1969 + $0x38] sm:$0xff]
        %v1978 = vld [vmem:[%s1969 + $0x40] sm:$0xff]
        %v1979 = vld [vmem:[%s1969 + $0x48] sm:$0xff]
        %v1980 = vld [vmem:[%s1969 + $0x50] sm:$0xff]
        %v1981 = vld [vmem:[%s1969 + $0x58] sm:$0xff]
        %v1982 = vld [vmem:[%s1969 + $0x60] sm:$0xff]
        %v1983 = vld [vmem:[%s1969 + $0x68] sm:$0xff]
        %v1984 = vld [vmem:[%s1969 + $0x70] sm:$0xff]
        %v1985 = vld [vmem:[%s1969 + $0x78] sm:$0xff]
        %v1986 = vld [vmem:[%s1969 + $0x80] sm:$0xff]
        %v1987 = vld [vmem:[%s1969 + $0x88] sm:$0xff]
        %v1988 = vld [vmem:[%s1969 + $0x90] sm:$0xff]
        %v1989 = vld [vmem:[%s1969 + $0x98] sm:$0xff]
        %v1990 = vld [vmem:[%s1969 + $0xa0] sm:$0xff]
        %v1991 = vld [vmem:[%s1969 + $0xa8] sm:$0xff]
        %v1992 = vld [vmem:[%s1969 + $0xb0] sm:$0xff]
        %v1993 = vld [vmem:[%s1969 + $0xb8] sm:$0xff]
        %v1994 = vld [vmem:[%s1969 + $0xc0] sm:$0xff]
        %v1995 = vld [vmem:[%s1969 + $0xc8] sm:$0xff]
        %v1996 = vld [vmem:[%s1969 + $0xd0] sm:$0xff]
        %v1997 = vld [vmem:[%s1969 + $0xd8] sm:$0xff]
        %v1998 = vld [vmem:[%s1969 + $0xe0] sm:$0xff]
        %v1999 = vld [vmem:[%s1969 + $0xe8] sm:$0xff]
        %v2000 = vld [vmem:[%s1969 + $0xf0] sm:$0xff]
        %v2001 = vld [vmem:[%s1969 + $0xf8] sm:$0xff]
        %2002 = vmatprep.subr.mxu0 0.0
        %v2003 = vand.u32 %v1970, 4294901760
        %2004 = vmatpush1.msra.mxu0 %v2003
        %2005 = vmatprep.subr.mxu0 0.0
        %v2006 = vand.u32 %v1971, 4294901760
        %2007 = vmatpush1.msra.mxu0 %v2006
        %2008 = vmatprep.subr.mxu0 0.0
        %v2009 = vand.u32 %v1972, 4294901760
        %2010 = vmatpush1.msra.mxu0 %v2009
        %2011 = vmatprep.subr.mxu0 0.0
        %v2012 = vand.u32 %v1973, 4294901760
        %2013 = vmatpush1.msra.mxu0 %v2012
        %2014 = vmatprep.subr.mxu0 0.0
        %v2015 = vand.u32 %v1974, 4294901760
        %2016 = vmatpush1.msra.mxu0 %v2015
        %2017 = vmatprep.subr.mxu0 0.0
        %v2018 = vand.u32 %v1975, 4294901760
        %2019 = vmatpush1.msra.mxu0 %v2018
        %2020 = vmatprep.subr.mxu0 0.0
        %v2021 = vand.u32 %v1976, 4294901760
        %2022 = vmatpush1.msra.mxu0 %v2021
        %2023 = vmatprep.subr.mxu0 0.0
        %v2024 = vand.u32 %v1977, 4294901760
        %2025 = vmatpush1.msra.mxu0 %v2024
        %2026 = vmatprep.subr.mxu0 0.0
        %v2027 = vand.u32 %v1978, 4294901760
        %2028 = vmatpush1.msra.mxu0 %v2027
        %2029 = vmatprep.subr.mxu0 0.0
        %v2030 = vand.u32 %v1979, 4294901760
        %2031 = vmatpush1.msra.mxu0 %v2030
        %2032 = vmatprep.subr.mxu0 0.0
        %v2033 = vand.u32 %v1980, 4294901760
        %2034 = vmatpush1.msra.mxu0 %v2033
        %2035 = vmatprep.subr.mxu0 0.0
        %v2036 = vand.u32 %v1981, 4294901760
        %2037 = vmatpush1.msra.mxu0 %v2036
        %2038 = vmatprep.subr.mxu0 0.0
        %v2039 = vand.u32 %v1982, 4294901760
        %2040 = vmatpush1.msra.mxu0 %v2039
        %2041 = vmatprep.subr.mxu0 0.0
        %v2042 = vand.u32 %v1983, 4294901760
        %2043 = vmatpush1.msra.mxu0 %v2042
        %2044 = vmatprep.subr.mxu0 0.0
        %v2045 = vand.u32 %v1984, 4294901760
        %2046 = vmatpush1.msra.mxu0 %v2045
        %2047 = vmatprep.subr.mxu0 0.0
        %v2048 = vand.u32 %v1985, 4294901760
        %2049 = vmatpush1.msra.mxu0 %v2048
        %2050 = vmatprep.subr.mxu0 0.0
        %v2051 = vand.u32 %v1986, 4294901760
        %2052 = vmatpush1.msra.mxu0 %v2051
        %2053 = vmatprep.subr.mxu0 0.0
        %v2054 = vand.u32 %v1987, 4294901760
        %2055 = vmatpush1.msra.mxu0 %v2054
        %2056 = vmatprep.subr.mxu0 0.0
        %v2057 = vand.u32 %v1988, 4294901760
        %2058 = vmatpush1.msra.mxu0 %v2057
        %2059 = vmatprep.subr.mxu0 0.0
        %v2060 = vand.u32 %v1989, 4294901760
        %2061 = vmatpush1.msra.mxu0 %v2060
        %2062 = vmatprep.subr.mxu0 0.0
        %v2063 = vand.u32 %v1990, 4294901760
        %2064 = vmatpush1.msra.mxu0 %v2063
        %2065 = vmatprep.subr.mxu0 0.0
        %v2066 = vand.u32 %v1991, 4294901760
        %2067 = vmatpush1.msra.mxu0 %v2066
        %2068 = vmatprep.subr.mxu0 0.0
        %v2069 = vand.u32 %v1992, 4294901760
        %2070 = vmatpush1.msra.mxu0 %v2069
        %2071 = vmatprep.subr.mxu0 0.0
        %v2072 = vand.u32 %v1993, 4294901760
        %2073 = vmatpush1.msra.mxu0 %v2072
        %2074 = vmatprep.subr.mxu0 0.0
        %v2075 = vand.u32 %v1994, 4294901760
        %2076 = vmatpush1.msra.mxu0 %v2075
        %2077 = vmatprep.subr.mxu0 0.0
        %v2078 = vand.u32 %v1995, 4294901760
        %2079 = vmatpush1.msra.mxu0 %v2078
        %2080 = vmatprep.subr.mxu0 0.0
        %v2081 = vand.u32 %v1996, 4294901760
        %2082 = vmatpush1.msra.mxu0 %v2081
        %2083 = vmatprep.subr.mxu0 0.0
        %v2084 = vand.u32 %v1997, 4294901760
        %2085 = vmatpush1.msra.mxu0 %v2084
        %2086 = vmatprep.subr.mxu0 0.0
        %v2087 = vand.u32 %v1998, 4294901760
        %2088 = vmatpush1.msra.mxu0 %v2087
        %2089 = vmatprep.subr.mxu0 0.0
        %v2090 = vand.u32 %v1999, 4294901760
        %2091 = vmatpush1.msra.mxu0 %v2090
        %2092 = vmatprep.subr.mxu0 0.0
        %v2093 = vand.u32 %v2000, 4294901760
        %2094 = vmatpush1.msra.mxu0 %v2093
        %2095 = vmatprep.subr.mxu0 0.0
        %v2096 = vand.u32 %v2001, 4294901760
        %2097 = vmatpush1.msra.mxu0 %v2096
        %v2098 = vand.u32 %v206, 4294901760
        %v2099 = vsub.f32 %v206, %v2098
        %v2100 = vand.u32 %v2099, 4294901760
        %v2101 = vsub.f32 %v2099, %v2100
        %v2102 = vand.u32 %v2101, 4294901760
        %2103 = vmatprep.mubr.f32.mxu0 %v2102
        %v2104 = vand.u32 %v172, 4294901760
        %v2105 = vsub.f32 %v172, %v2104
        %v2106 = vand.u32 %v2105, 4294901760
        %v2107 = vsub.f32 %v2105, %v2106
        %v2108 = vand.u32 %v2107, 4294901760
        %2109 = vmatmul.mubr.f32.gmra.mrb[0].mxu0 %v2108
        %v2110 = vpop.f32.mrb[0].mxu0
        %v2111 = vadd.f32 0.0, %v2110
        %v2112 = vpop.f32.mrb[0].mxu0
        %2113 = vdwg.mxu0
        %2114 = vmatprep.subr.mxu0 0.0
        %v2115 = vand.u32 %v1970, 4294901760
        %v2116 = vsub.f32 %v1970, %v2115
        %v2117 = vand.u32 %v2116, 4294901760
        %v2118 = vsub.f32 %v2116, %v2117
        %v2119 = vand.u32 %v2118, 4294901760
        %2120 = vmatpush1.msra.mxu0 %v2119
        %2121 = vmatprep.subr.mxu0 0.0
        %v2122 = vand.u32 %v1971, 4294901760
        %v2123 = vsub.f32 %v1971, %v2122
        %v2124 = vand.u32 %v2123, 4294901760
        %v2125 = vsub.f32 %v2123, %v2124
        %v2126 = vand.u32 %v2125, 4294901760
        %2127 = vmatpush1.msra.mxu0 %v2126
        %2128 = vmatprep.subr.mxu0 0.0
        %v2129 = vand.u32 %v1972, 4294901760
        %v2130 = vsub.f32 %v1972, %v2129
        %v2131 = vand.u32 %v2130, 4294901760
        %v2132 = vsub.f32 %v2130, %v2131
        %v2133 = vand.u32 %v2132, 4294901760
        %2134 = vmatpush1.msra.mxu0 %v2133
        %2135 = vmatprep.subr.mxu0 0.0
        %v2136 = vand.u32 %v1973, 4294901760
        %v2137 = vsub.f32 %v1973, %v2136
        %v2138 = vand.u32 %v2137, 4294901760
        %v2139 = vsub.f32 %v2137, %v2138
        %v2140 = vand.u32 %v2139, 4294901760
        %2141 = vmatpush1.msra.mxu0 %v2140
        %2142 = vmatprep.subr.mxu0 0.0
        %v2143 = vand.u32 %v1974, 4294901760
        %v2144 = vsub.f32 %v1974, %v2143
        %v2145 = vand.u32 %v2144, 4294901760
        %v2146 = vsub.f32 %v2144, %v2145
        %v2147 = vand.u32 %v2146, 4294901760
        %2148 = vmatpush1.msra.mxu0 %v2147
        %2149 = vmatprep.subr.mxu0 0.0
        %v2150 = vand.u32 %v1975, 4294901760
        %v2151 = vsub.f32 %v1975, %v2150
        %v2152 = vand.u32 %v2151, 4294901760
        %v2153 = vsub.f32 %v2151, %v2152
        %v2154 = vand.u32 %v2153, 4294901760
        %2155 = vmatpush1.msra.mxu0 %v2154
        %2156 = vmatprep.subr.mxu0 0.0
        %v2157 = vand.u32 %v1976, 4294901760
        %v2158 = vsub.f32 %v1976, %v2157
        %v2159 = vand.u32 %v2158, 4294901760
        %v2160 = vsub.f32 %v2158, %v2159
        %v2161 = vand.u32 %v2160, 4294901760
        %2162 = vmatpush1.msra.mxu0 %v2161
        %2163 = vmatprep.subr.mxu0 0.0
        %v2164 = vand.u32 %v1977, 4294901760
        %v2165 = vsub.f32 %v1977, %v2164
        %v2166 = vand.u32 %v2165, 4294901760
        %v2167 = vsub.f32 %v2165, %v2166
        %v2168 = vand.u32 %v2167, 4294901760
        %2169 = vmatpush1.msra.mxu0 %v2168
        %2170 = vmatprep.subr.mxu0 0.0
        %v2171 = vand.u32 %v1978, 4294901760
        %v2172 = vsub.f32 %v1978, %v2171
        %v2173 = vand.u32 %v2172, 4294901760
        %v2174 = vsub.f32 %v2172, %v2173
        %v2175 = vand.u32 %v2174, 4294901760
        %2176 = vmatpush1.msra.mxu0 %v2175
        %2177 = vmatprep.subr.mxu0 0.0
        %v2178 = vand.u32 %v1979, 4294901760
        %v2179 = vsub.f32 %v1979, %v2178
        %v2180 = vand.u32 %v2179, 4294901760
        %v2181 = vsub.f32 %v2179, %v2180
        %v2182 = vand.u32 %v2181, 4294901760
        %2183 = vmatpush1.msra.mxu0 %v2182
        %2184 = vmatprep.subr.mxu0 0.0
        %v2185 = vand.u32 %v1980, 4294901760
        %v2186 = vsub.f32 %v1980, %v2185
        %v2187 = vand.u32 %v2186, 4294901760
        %v2188 = vsub.f32 %v2186, %v2187
        %v2189 = vand.u32 %v2188, 4294901760
        %2190 = vmatpush1.msra.mxu0 %v2189
        %2191 = vmatprep.subr.mxu0 0.0
        %v2192 = vand.u32 %v1981, 4294901760
        %v2193 = vsub.f32 %v1981, %v2192
        %v2194 = vand.u32 %v2193, 4294901760
        %v2195 = vsub.f32 %v2193, %v2194
        %v2196 = vand.u32 %v2195, 4294901760
        %2197 = vmatpush1.msra.mxu0 %v2196
        %2198 = vmatprep.subr.mxu0 0.0
        %v2199 = vand.u32 %v1982, 4294901760
        %v2200 = vsub.f32 %v1982, %v2199
        %v2201 = vand.u32 %v2200, 4294901760
        %v2202 = vsub.f32 %v2200, %v2201
        %v2203 = vand.u32 %v2202, 4294901760
        %2204 = vmatpush1.msra.mxu0 %v2203
        %2205 = vmatprep.subr.mxu0 0.0
        %v2206 = vand.u32 %v1983, 4294901760
        %v2207 = vsub.f32 %v1983, %v2206
        %v2208 = vand.u32 %v2207, 4294901760
        %v2209 = vsub.f32 %v2207, %v2208
        %v2210 = vand.u32 %v2209, 4294901760
        %2211 = vmatpush1.msra.mxu0 %v2210
        %2212 = vmatprep.subr.mxu0 0.0
        %v2213 = vand.u32 %v1984, 4294901760
        %v2214 = vsub.f32 %v1984, %v2213
        %v2215 = vand.u32 %v2214, 4294901760
        %v2216 = vsub.f32 %v2214, %v2215
        %v2217 = vand.u32 %v2216, 4294901760
        %2218 = vmatpush1.msra.mxu0 %v2217
        %2219 = vmatprep.subr.mxu0 0.0
        %v2220 = vand.u32 %v1985, 4294901760
        %v2221 = vsub.f32 %v1985, %v2220
        %v2222 = vand.u32 %v2221, 4294901760
        %v2223 = vsub.f32 %v2221, %v2222
        %v2224 = vand.u32 %v2223, 4294901760
        %2225 = vmatpush1.msra.mxu0 %v2224
        %2226 = vmatprep.subr.mxu0 0.0
        %v2227 = vand.u32 %v1986, 4294901760
        %v2228 = vsub.f32 %v1986, %v2227
        %v2229 = vand.u32 %v2228, 4294901760
        %v2230 = vsub.f32 %v2228, %v2229
        %v2231 = vand.u32 %v2230, 4294901760
        %2232 = vmatpush1.msra.mxu0 %v2231
        %2233 = vmatprep.subr.mxu0 0.0
        %v2234 = vand.u32 %v1987, 4294901760
        %v2235 = vsub.f32 %v1987, %v2234
        %v2236 = vand.u32 %v2235, 4294901760
        %v2237 = vsub.f32 %v2235, %v2236
        %v2238 = vand.u32 %v2237, 4294901760
        %2239 = vmatpush1.msra.mxu0 %v2238
        %2240 = vmatprep.subr.mxu0 0.0
        %v2241 = vand.u32 %v1988, 4294901760
        %v2242 = vsub.f32 %v1988, %v2241
        %v2243 = vand.u32 %v2242, 4294901760
        %v2244 = vsub.f32 %v2242, %v2243
        %v2245 = vand.u32 %v2244, 4294901760
        %2246 = vmatpush1.msra.mxu0 %v2245
        %2247 = vmatprep.subr.mxu0 0.0
        %v2248 = vand.u32 %v1989, 4294901760
        %v2249 = vsub.f32 %v1989, %v2248
        %v2250 = vand.u32 %v2249, 4294901760
        %v2251 = vsub.f32 %v2249, %v2250
        %v2252 = vand.u32 %v2251, 4294901760
        %2253 = vmatpush1.msra.mxu0 %v2252
        %2254 = vmatprep.subr.mxu0 0.0
        %v2255 = vand.u32 %v1990, 4294901760
        %v2256 = vsub.f32 %v1990, %v2255
        %v2257 = vand.u32 %v2256, 4294901760
        %v2258 = vsub.f32 %v2256, %v2257
        %v2259 = vand.u32 %v2258, 4294901760
        %2260 = vmatpush1.msra.mxu0 %v2259
        %2261 = vmatprep.subr.mxu0 0.0
        %v2262 = vand.u32 %v1991, 4294901760
        %v2263 = vsub.f32 %v1991, %v2262
        %v2264 = vand.u32 %v2263, 4294901760
        %v2265 = vsub.f32 %v2263, %v2264
        %v2266 = vand.u32 %v2265, 4294901760
        %2267 = vmatpush1.msra.mxu0 %v2266
        %2268 = vmatprep.subr.mxu0 0.0
        %v2269 = vand.u32 %v1992, 4294901760
        %v2270 = vsub.f32 %v1992, %v2269
        %v2271 = vand.u32 %v2270, 4294901760
        %v2272 = vsub.f32 %v2270, %v2271
        %v2273 = vand.u32 %v2272, 4294901760
        %2274 = vmatpush1.msra.mxu0 %v2273
        %2275 = vmatprep.subr.mxu0 0.0
        %v2276 = vand.u32 %v1993, 4294901760
        %v2277 = vsub.f32 %v1993, %v2276
        %v2278 = vand.u32 %v2277, 4294901760
        %v2279 = vsub.f32 %v2277, %v2278
        %v2280 = vand.u32 %v2279, 4294901760
        %2281 = vmatpush1.msra.mxu0 %v2280
        %2282 = vmatprep.subr.mxu0 0.0
        %v2283 = vand.u32 %v1994, 4294901760
        %v2284 = vsub.f32 %v1994, %v2283
        %v2285 = vand.u32 %v2284, 4294901760
        %v2286 = vsub.f32 %v2284, %v2285
        %v2287 = vand.u32 %v2286, 4294901760
        %2288 = vmatpush1.msra.mxu0 %v2287
        %2289 = vmatprep.subr.mxu0 0.0
        %v2290 = vand.u32 %v1995, 4294901760
        %v2291 = vsub.f32 %v1995, %v2290
        %v2292 = vand.u32 %v2291, 4294901760
        %v2293 = vsub.f32 %v2291, %v2292
        %v2294 = vand.u32 %v2293, 4294901760
        %2295 = vmatpush1.msra.mxu0 %v2294
        %2296 = vmatprep.subr.mxu0 0.0
        %v2297 = vand.u32 %v1996, 4294901760
        %v2298 = vsub.f32 %v1996, %v2297
        %v2299 = vand.u32 %v2298, 4294901760
        %v2300 = vsub.f32 %v2298, %v2299
        %v2301 = vand.u32 %v2300, 4294901760
        %2302 = vmatpush1.msra.mxu0 %v2301
        %2303 = vmatprep.subr.mxu0 0.0
        %v2304 = vand.u32 %v1997, 4294901760
        %v2305 = vsub.f32 %v1997, %v2304
        %v2306 = vand.u32 %v2305, 4294901760
        %v2307 = vsub.f32 %v2305, %v2306
        %v2308 = vand.u32 %v2307, 4294901760
        %2309 = vmatpush1.msra.mxu0 %v2308
        %2310 = vmatprep.subr.mxu0 0.0
        %v2311 = vand.u32 %v1998, 4294901760
        %v2312 = vsub.f32 %v1998, %v2311
        %v2313 = vand.u32 %v2312, 4294901760
        %v2314 = vsub.f32 %v2312, %v2313
        %v2315 = vand.u32 %v2314, 4294901760
        %2316 = vmatpush1.msra.mxu0 %v2315
        %2317 = vmatprep.subr.mxu0 0.0
        %v2318 = vand.u32 %v1999, 4294901760
        %v2319 = vsub.f32 %v1999, %v2318
        %v2320 = vand.u32 %v2319, 4294901760
        %v2321 = vsub.f32 %v2319, %v2320
        %v2322 = vand.u32 %v2321, 4294901760
        %2323 = vmatpush1.msra.mxu0 %v2322
        %2324 = vmatprep.subr.mxu0 0.0
        %v2325 = vand.u32 %v2000, 4294901760
        %v2326 = vsub.f32 %v2000, %v2325
        %v2327 = vand.u32 %v2326, 4294901760
        %v2328 = vsub.f32 %v2326, %v2327
        %v2329 = vand.u32 %v2328, 4294901760
        %2330 = vmatpush1.msra.mxu0 %v2329
        %2331 = vmatprep.subr.mxu0 0.0
        %v2332 = vand.u32 %v2001, 4294901760
        %v2333 = vsub.f32 %v2001, %v2332
        %v2334 = vand.u32 %v2333, 4294901760
        %v2335 = vsub.f32 %v2333, %v2334
        %v2336 = vand.u32 %v2335, 4294901760
        %2337 = vmatpush1.msra.mxu0 %v2336
        %v2338 = vand.u32 %v206, 4294901760
        %2339 = vmatprep.mubr.f32.mxu0 %v2338
        %v2340 = vand.u32 %v172, 4294901760
        %2341 = vmatmul.mubr.f32.gmra.mrb[0].mxu0 %v2340
        %v2342 = vpop.f32.mrb[0].mxu0
        %v2343 = vadd.f32 %v2111, %v2342
        %v2344 = vpop.f32.mrb[0].mxu0
        %2345 = vdwg.mxu0
        %2346 = vmatprep.subr.mxu0 0.0
        %v2347 = vand.u32 %v1970, 4294901760
        %v2348 = vsub.f32 %v1970, %v2347
        %2349 = vmatpush1.msra.mxu0 %v2348
        %2350 = vmatprep.subr.mxu0 0.0
        %v2351 = vand.u32 %v1971, 4294901760
        %v2352 = vsub.f32 %v1971, %v2351
        %2353 = vmatpush1.msra.mxu0 %v2352
        %2354 = vmatprep.subr.mxu0 0.0
        %v2355 = vand.u32 %v1972, 4294901760
        %v2356 = vsub.f32 %v1972, %v2355
        %2357 = vmatpush1.msra.mxu0 %v2356
        %2358 = vmatprep.subr.mxu0 0.0
        %v2359 = vand.u32 %v1973, 4294901760
        %v2360 = vsub.f32 %v1973, %v2359
        %2361 = vmatpush1.msra.mxu0 %v2360
        %2362 = vmatprep.subr.mxu0 0.0
        %v2363 = vand.u32 %v1974, 4294901760
        %v2364 = vsub.f32 %v1974, %v2363
        %2365 = vmatpush1.msra.mxu0 %v2364
        %2366 = vmatprep.subr.mxu0 0.0
        %v2367 = vand.u32 %v1975, 4294901760
        %v2368 = vsub.f32 %v1975, %v2367
        %2369 = vmatpush1.msra.mxu0 %v2368
        %2370 = vmatprep.subr.mxu0 0.0
        %v2371 = vand.u32 %v1976, 4294901760
        %v2372 = vsub.f32 %v1976, %v2371
        %2373 = vmatpush1.msra.mxu0 %v2372
        %2374 = vmatprep.subr.mxu0 0.0
        %v2375 = vand.u32 %v1977, 4294901760
        %v2376 = vsub.f32 %v1977, %v2375
        %2377 = vmatpush1.msra.mxu0 %v2376
        %2378 = vmatprep.subr.mxu0 0.0
        %v2379 = vand.u32 %v1978, 4294901760
        %v2380 = vsub.f32 %v1978, %v2379
        %2381 = vmatpush1.msra.mxu0 %v2380
        %2382 = vmatprep.subr.mxu0 0.0
        %v2383 = vand.u32 %v1979, 4294901760
        %v2384 = vsub.f32 %v1979, %v2383
        %2385 = vmatpush1.msra.mxu0 %v2384
        %2386 = vmatprep.subr.mxu0 0.0
        %v2387 = vand.u32 %v1980, 4294901760
        %v2388 = vsub.f32 %v1980, %v2387
        %2389 = vmatpush1.msra.mxu0 %v2388
        %2390 = vmatprep.subr.mxu0 0.0
        %v2391 = vand.u32 %v1981, 4294901760
        %v2392 = vsub.f32 %v1981, %v2391
        %2393 = vmatpush1.msra.mxu0 %v2392
        %2394 = vmatprep.subr.mxu0 0.0
        %v2395 = vand.u32 %v1982, 4294901760
        %v2396 = vsub.f32 %v1982, %v2395
        %2397 = vmatpush1.msra.mxu0 %v2396
        %2398 = vmatprep.subr.mxu0 0.0
        %v2399 = vand.u32 %v1983, 4294901760
        %v2400 = vsub.f32 %v1983, %v2399
        %2401 = vmatpush1.msra.mxu0 %v2400
        %2402 = vmatprep.subr.mxu0 0.0
        %v2403 = vand.u32 %v1984, 4294901760
        %v2404 = vsub.f32 %v1984, %v2403
        %2405 = vmatpush1.msra.mxu0 %v2404
        %2406 = vmatprep.subr.mxu0 0.0
        %v2407 = vand.u32 %v1985, 4294901760
        %v2408 = vsub.f32 %v1985, %v2407
        %2409 = vmatpush1.msra.mxu0 %v2408
        %2410 = vmatprep.subr.mxu0 0.0
        %v2411 = vand.u32 %v1986, 4294901760
        %v2412 = vsub.f32 %v1986, %v2411
        %2413 = vmatpush1.msra.mxu0 %v2412
        %2414 = vmatprep.subr.mxu0 0.0
        %v2415 = vand.u32 %v1987, 4294901760
        %v2416 = vsub.f32 %v1987, %v2415
        %2417 = vmatpush1.msra.mxu0 %v2416
        %2418 = vmatprep.subr.mxu0 0.0
        %v2419 = vand.u32 %v1988, 4294901760
        %v2420 = vsub.f32 %v1988, %v2419
        %2421 = vmatpush1.msra.mxu0 %v2420
        %2422 = vmatprep.subr.mxu0 0.0
        %v2423 = vand.u32 %v1989, 4294901760
        %v2424 = vsub.f32 %v1989, %v2423
        %2425 = vmatpush1.msra.mxu0 %v2424
        %2426 = vmatprep.subr.mxu0 0.0
        %v2427 = vand.u32 %v1990, 4294901760
        %v2428 = vsub.f32 %v1990, %v2427
        %2429 = vmatpush1.msra.mxu0 %v2428
        %2430 = vmatprep.subr.mxu0 0.0
        %v2431 = vand.u32 %v1991, 4294901760
        %v2432 = vsub.f32 %v1991, %v2431
        %2433 = vmatpush1.msra.mxu0 %v2432
        %2434 = vmatprep.subr.mxu0 0.0
        %v2435 = vand.u32 %v1992, 4294901760
        %v2436 = vsub.f32 %v1992, %v2435
        %2437 = vmatpush1.msra.mxu0 %v2436
        %2438 = vmatprep.subr.mxu0 0.0
        %v2439 = vand.u32 %v1993, 4294901760
        %v2440 = vsub.f32 %v1993, %v2439
        %2441 = vmatpush1.msra.mxu0 %v2440
        %2442 = vmatprep.subr.mxu0 0.0
        %v2443 = vand.u32 %v1994, 4294901760
        %v2444 = vsub.f32 %v1994, %v2443
        %2445 = vmatpush1.msra.mxu0 %v2444
        %2446 = vmatprep.subr.mxu0 0.0
        %v2447 = vand.u32 %v1995, 4294901760
        %v2448 = vsub.f32 %v1995, %v2447
        %2449 = vmatpush1.msra.mxu0 %v2448
        %2450 = vmatprep.subr.mxu0 0.0
        %v2451 = vand.u32 %v1996, 4294901760
        %v2452 = vsub.f32 %v1996, %v2451
        %2453 = vmatpush1.msra.mxu0 %v2452
        %2454 = vmatprep.subr.mxu0 0.0
        %v2455 = vand.u32 %v1997, 4294901760
        %v2456 = vsub.f32 %v1997, %v2455
        %2457 = vmatpush1.msra.mxu0 %v2456
        %2458 = vmatprep.subr.mxu0 0.0
        %v2459 = vand.u32 %v1998, 4294901760
        %v2460 = vsub.f32 %v1998, %v2459
        %2461 = vmatpush1.msra.mxu0 %v2460
        %2462 = vmatprep.subr.mxu0 0.0
        %v2463 = vand.u32 %v1999, 4294901760
        %v2464 = vsub.f32 %v1999, %v2463
        %2465 = vmatpush1.msra.mxu0 %v2464
        %2466 = vmatprep.subr.mxu0 0.0
        %v2467 = vand.u32 %v2000, 4294901760
        %v2468 = vsub.f32 %v2000, %v2467
        %2469 = vmatpush1.msra.mxu0 %v2468
        %2470 = vmatprep.subr.mxu0 0.0
        %v2471 = vand.u32 %v2001, 4294901760
        %v2472 = vsub.f32 %v2001, %v2471
        %2473 = vmatpush1.msra.mxu0 %v2472
        %v2474 = vand.u32 %v206, 4294901760
        %v2475 = vsub.f32 %v206, %v2474
        %2476 = vmatprep.mubr.f32.mxu0 %v2475
        %v2477 = vand.u32 %v172, 4294901760
        %v2478 = vsub.f32 %v172, %v2477
        %2479 = vmatmul.mubr.f32.gmra.mrb[0].mxu0 %v2478
        %v2480 = vpop.f32.mrb[0].mxu0
        %v2481 = vadd.f32 %v2343, %v2480
        %v2482 = vpop.f32.mrb[0].mxu0
        %2483 = vdwg.mxu0
        %2484 = vmatprep.subr.mxu0 0.0
        %v2485 = vand.u32 %v1970, 4294901760
        %2486 = vmatpush1.msra.mxu0 %v2485
        %2487 = vmatprep.subr.mxu0 0.0
        %v2488 = vand.u32 %v1971, 4294901760
        %2489 = vmatpush1.msra.mxu0 %v2488
        %2490 = vmatprep.subr.mxu0 0.0
        %v2491 = vand.u32 %v1972, 4294901760
        %2492 = vmatpush1.msra.mxu0 %v2491
        %2493 = vmatprep.subr.mxu0 0.0
        %v2494 = vand.u32 %v1973, 4294901760
        %2495 = vmatpush1.msra.mxu0 %v2494
        %2496 = vmatprep.subr.mxu0 0.0
        %v2497 = vand.u32 %v1974, 4294901760
        %2498 = vmatpush1.msra.mxu0 %v2497
        %2499 = vmatprep.subr.mxu0 0.0
        %v2500 = vand.u32 %v1975, 4294901760
        %2501 = vmatpush1.msra.mxu0 %v2500
        %2502 = vmatprep.subr.mxu0 0.0
        %v2503 = vand.u32 %v1976, 4294901760
        %2504 = vmatpush1.msra.mxu0 %v2503
        %2505 = vmatprep.subr.mxu0 0.0
        %v2506 = vand.u32 %v1977, 4294901760
        %2507 = vmatpush1.msra.mxu0 %v2506
        %2508 = vmatprep.subr.mxu0 0.0
        %v2509 = vand.u32 %v1978, 4294901760
        %2510 = vmatpush1.msra.mxu0 %v2509
        %2511 = vmatprep.subr.mxu0 0.0
        %v2512 = vand.u32 %v1979, 4294901760
        %2513 = vmatpush1.msra.mxu0 %v2512
        %2514 = vmatprep.subr.mxu0 0.0
        %v2515 = vand.u32 %v1980, 4294901760
        %2516 = vmatpush1.msra.mxu0 %v2515
        %2517 = vmatprep.subr.mxu0 0.0
        %v2518 = vand.u32 %v1981, 4294901760
        %2519 = vmatpush1.msra.mxu0 %v2518
        %2520 = vmatprep.subr.mxu0 0.0
        %v2521 = vand.u32 %v1982, 4294901760
        %2522 = vmatpush1.msra.mxu0 %v2521
        %2523 = vmatprep.subr.mxu0 0.0
        %v2524 = vand.u32 %v1983, 4294901760
        %2525 = vmatpush1.msra.mxu0 %v2524
        %2526 = vmatprep.subr.mxu0 0.0
        %v2527 = vand.u32 %v1984, 4294901760
        %2528 = vmatpush1.msra.mxu0 %v2527
        %2529 = vmatprep.subr.mxu0 0.0
        %v2530 = vand.u32 %v1985, 4294901760
        %2531 = vmatpush1.msra.mxu0 %v2530
        %2532 = vmatprep.subr.mxu0 0.0
        %v2533 = vand.u32 %v1986, 4294901760
        %2534 = vmatpush1.msra.mxu0 %v2533
        %2535 = vmatprep.subr.mxu0 0.0
        %v2536 = vand.u32 %v1987, 4294901760
        %2537 = vmatpush1.msra.mxu0 %v2536
        %2538 = vmatprep.subr.mxu0 0.0
        %v2539 = vand.u32 %v1988, 4294901760
        %2540 = vmatpush1.msra.mxu0 %v2539
        %2541 = vmatprep.subr.mxu0 0.0
        %v2542 = vand.u32 %v1989, 4294901760
        %2543 = vmatpush1.msra.mxu0 %v2542
        %2544 = vmatprep.subr.mxu0 0.0
        %v2545 = vand.u32 %v1990, 4294901760
        %2546 = vmatpush1.msra.mxu0 %v2545
        %2547 = vmatprep.subr.mxu0 0.0
        %v2548 = vand.u32 %v1991, 4294901760
        %2549 = vmatpush1.msra.mxu0 %v2548
        %2550 = vmatprep.subr.mxu0 0.0
        %v2551 = vand.u32 %v1992, 4294901760
        %2552 = vmatpush1.msra.mxu0 %v2551
        %2553 = vmatprep.subr.mxu0 0.0
        %v2554 = vand.u32 %v1993, 4294901760
        %2555 = vmatpush1.msra.mxu0 %v2554
        %2556 = vmatprep.subr.mxu0 0.0
        %v2557 = vand.u32 %v1994, 4294901760
        %2558 = vmatpush1.msra.mxu0 %v2557
        %2559 = vmatprep.subr.mxu0 0.0
        %v2560 = vand.u32 %v1995, 4294901760
        %2561 = vmatpush1.msra.mxu0 %v2560
        %2562 = vmatprep.subr.mxu0 0.0
        %v2563 = vand.u32 %v1996, 4294901760
        %2564 = vmatpush1.msra.mxu0 %v2563
        %2565 = vmatprep.subr.mxu0 0.0
        %v2566 = vand.u32 %v1997, 4294901760
        %2567 = vmatpush1.msra.mxu0 %v2566
        %2568 = vmatprep.subr.mxu0 0.0
        %v2569 = vand.u32 %v1998, 4294901760
        %2570 = vmatpush1.msra.mxu0 %v2569
        %2571 = vmatprep.subr.mxu0 0.0
        %v2572 = vand.u32 %v1999, 4294901760
        %2573 = vmatpush1.msra.mxu0 %v2572
        %2574 = vmatprep.subr.mxu0 0.0
        %v2575 = vand.u32 %v2000, 4294901760
        %2576 = vmatpush1.msra.mxu0 %v2575
        %2577 = vmatprep.subr.mxu0 0.0
        %v2578 = vand.u32 %v2001, 4294901760
        %2579 = vmatpush1.msra.mxu0 %v2578
        %v2580 = vand.u32 %v206, 4294901760
        %v2581 = vsub.f32 %v206, %v2580
        %v2582 = vand.u32 %v2581, 4294901760
        %2583 = vmatprep.mubr.f32.mxu0 %v2582
        %v2584 = vand.u32 %v172, 4294901760
        %v2585 = vsub.f32 %v172, %v2584
        %v2586 = vand.u32 %v2585, 4294901760
        %2587 = vmatmul.mubr.f32.gmra.mrb[0].mxu0 %v2586
        %v2588 = vpop.f32.mrb[0].mxu0
        %v2589 = vadd.f32 %v2481, %v2588
        %v2590 = vpop.f32.mrb[0].mxu0
        %2591 = vdwg.mxu0
        %2592 = vmatprep.subr.mxu0 0.0
        %v2593 = vand.u32 %v1970, 4294901760
        %v2594 = vsub.f32 %v1970, %v2593
        %v2595 = vand.u32 %v2594, 4294901760
        %2596 = vmatpush1.msra.mxu0 %v2595
        %2597 = vmatprep.subr.mxu0 0.0
        %v2598 = vand.u32 %v1971, 4294901760
        %v2599 = vsub.f32 %v1971, %v2598
        %v2600 = vand.u32 %v2599, 4294901760
        %2601 = vmatpush1.msra.mxu0 %v2600
        %2602 = vmatprep.subr.mxu0 0.0
        %v2603 = vand.u32 %v1972, 4294901760
        %v2604 = vsub.f32 %v1972, %v2603
        %v2605 = vand.u32 %v2604, 4294901760
        %2606 = vmatpush1.msra.mxu0 %v2605
        %2607 = vmatprep.subr.mxu0 0.0
        %v2608 = vand.u32 %v1973, 4294901760
        %v2609 = vsub.f32 %v1973, %v2608
        %v2610 = vand.u32 %v2609, 4294901760
        %2611 = vmatpush1.msra.mxu0 %v2610
        %2612 = vmatprep.subr.mxu0 0.0
        %v2613 = vand.u32 %v1974, 4294901760
        %v2614 = vsub.f32 %v1974, %v2613
        %v2615 = vand.u32 %v2614, 4294901760
        %2616 = vmatpush1.msra.mxu0 %v2615
        %2617 = vmatprep.subr.mxu0 0.0
        %v2618 = vand.u32 %v1975, 4294901760
        %v2619 = vsub.f32 %v1975, %v2618
        %v2620 = vand.u32 %v2619, 4294901760
        %2621 = vmatpush1.msra.mxu0 %v2620
        %2622 = vmatprep.subr.mxu0 0.0
        %v2623 = vand.u32 %v1976, 4294901760
        %v2624 = vsub.f32 %v1976, %v2623
        %v2625 = vand.u32 %v2624, 4294901760
        %2626 = vmatpush1.msra.mxu0 %v2625
        %2627 = vmatprep.subr.mxu0 0.0
        %v2628 = vand.u32 %v1977, 4294901760
        %v2629 = vsub.f32 %v1977, %v2628
        %v2630 = vand.u32 %v2629, 4294901760
        %2631 = vmatpush1.msra.mxu0 %v2630
        %2632 = vmatprep.subr.mxu0 0.0
        %v2633 = vand.u32 %v1978, 4294901760
        %v2634 = vsub.f32 %v1978, %v2633
        %v2635 = vand.u32 %v2634, 4294901760
        %2636 = vmatpush1.msra.mxu0 %v2635
        %2637 = vmatprep.subr.mxu0 0.0
        %v2638 = vand.u32 %v1979, 4294901760
        %v2639 = vsub.f32 %v1979, %v2638
        %v2640 = vand.u32 %v2639, 4294901760
        %2641 = vmatpush1.msra.mxu0 %v2640
        %2642 = vmatprep.subr.mxu0 0.0
        %v2643 = vand.u32 %v1980, 4294901760
        %v2644 = vsub.f32 %v1980, %v2643
        %v2645 = vand.u32 %v2644, 4294901760
        %2646 = vmatpush1.msra.mxu0 %v2645
        %2647 = vmatprep.subr.mxu0 0.0
        %v2648 = vand.u32 %v1981, 4294901760
        %v2649 = vsub.f32 %v1981, %v2648
        %v2650 = vand.u32 %v2649, 4294901760
        %2651 = vmatpush1.msra.mxu0 %v2650
        %2652 = vmatprep.subr.mxu0 0.0
        %v2653 = vand.u32 %v1982, 4294901760
        %v2654 = vsub.f32 %v1982, %v2653
        %v2655 = vand.u32 %v2654, 4294901760
        %2656 = vmatpush1.msra.mxu0 %v2655
        %2657 = vmatprep.subr.mxu0 0.0
        %v2658 = vand.u32 %v1983, 4294901760
        %v2659 = vsub.f32 %v1983, %v2658
        %v2660 = vand.u32 %v2659, 4294901760
        %2661 = vmatpush1.msra.mxu0 %v2660
        %2662 = vmatprep.subr.mxu0 0.0
        %v2663 = vand.u32 %v1984, 4294901760
        %v2664 = vsub.f32 %v1984, %v2663
        %v2665 = vand.u32 %v2664, 4294901760
        %2666 = vmatpush1.msra.mxu0 %v2665
        %2667 = vmatprep.subr.mxu0 0.0
        %v2668 = vand.u32 %v1985, 4294901760
        %v2669 = vsub.f32 %v1985, %v2668
        %v2670 = vand.u32 %v2669, 4294901760
        %2671 = vmatpush1.msra.mxu0 %v2670
        %2672 = vmatprep.subr.mxu0 0.0
        %v2673 = vand.u32 %v1986, 4294901760
        %v2674 = vsub.f32 %v1986, %v2673
        %v2675 = vand.u32 %v2674, 4294901760
        %2676 = vmatpush1.msra.mxu0 %v2675
        %2677 = vmatprep.subr.mxu0 0.0
        %v2678 = vand.u32 %v1987, 4294901760
        %v2679 = vsub.f32 %v1987, %v2678
        %v2680 = vand.u32 %v2679, 4294901760
        %2681 = vmatpush1.msra.mxu0 %v2680
        %2682 = vmatprep.subr.mxu0 0.0
        %v2683 = vand.u32 %v1988, 4294901760
        %v2684 = vsub.f32 %v1988, %v2683
        %v2685 = vand.u32 %v2684, 4294901760
        %2686 = vmatpush1.msra.mxu0 %v2685
        %2687 = vmatprep.subr.mxu0 0.0
        %v2688 = vand.u32 %v1989, 4294901760
        %v2689 = vsub.f32 %v1989, %v2688
        %v2690 = vand.u32 %v2689, 4294901760
        %2691 = vmatpush1.msra.mxu0 %v2690
        %2692 = vmatprep.subr.mxu0 0.0
        %v2693 = vand.u32 %v1990, 4294901760
        %v2694 = vsub.f32 %v1990, %v2693
        %v2695 = vand.u32 %v2694, 4294901760
        %2696 = vmatpush1.msra.mxu0 %v2695
        %2697 = vmatprep.subr.mxu0 0.0
        %v2698 = vand.u32 %v1991, 4294901760
        %v2699 = vsub.f32 %v1991, %v2698
        %v2700 = vand.u32 %v2699, 4294901760
        %2701 = vmatpush1.msra.mxu0 %v2700
        %2702 = vmatprep.subr.mxu0 0.0
        %v2703 = vand.u32 %v1992, 4294901760
        %v2704 = vsub.f32 %v1992, %v2703
        %v2705 = vand.u32 %v2704, 4294901760
        %2706 = vmatpush1.msra.mxu0 %v2705
        %2707 = vmatprep.subr.mxu0 0.0
        %v2708 = vand.u32 %v1993, 4294901760
        %v2709 = vsub.f32 %v1993, %v2708
        %v2710 = vand.u32 %v2709, 4294901760
        %2711 = vmatpush1.msra.mxu0 %v2710
        %2712 = vmatprep.subr.mxu0 0.0
        %v2713 = vand.u32 %v1994, 4294901760
        %v2714 = vsub.f32 %v1994, %v2713
        %v2715 = vand.u32 %v2714, 4294901760
        %2716 = vmatpush1.msra.mxu0 %v2715
        %2717 = vmatprep.subr.mxu0 0.0
        %v2718 = vand.u32 %v1995, 4294901760
        %v2719 = vsub.f32 %v1995, %v2718
        %v2720 = vand.u32 %v2719, 4294901760
        %2721 = vmatpush1.msra.mxu0 %v2720
        %2722 = vmatprep.subr.mxu0 0.0
        %v2723 = vand.u32 %v1996, 4294901760
        %v2724 = vsub.f32 %v1996, %v2723
        %v2725 = vand.u32 %v2724, 4294901760
        %2726 = vmatpush1.msra.mxu0 %v2725
        %2727 = vmatprep.subr.mxu0 0.0
        %v2728 = vand.u32 %v1997, 4294901760
        %v2729 = vsub.f32 %v1997, %v2728
        %v2730 = vand.u32 %v2729, 4294901760
        %2731 = vmatpush1.msra.mxu0 %v2730
        %2732 = vmatprep.subr.mxu0 0.0
        %v2733 = vand.u32 %v1998, 4294901760
        %v2734 = vsub.f32 %v1998, %v2733
        %v2735 = vand.u32 %v2734, 4294901760
        %2736 = vmatpush1.msra.mxu0 %v2735
        %2737 = vmatprep.subr.mxu0 0.0
        %v2738 = vand.u32 %v1999, 4294901760
        %v2739 = vsub.f32 %v1999, %v2738
        %v2740 = vand.u32 %v2739, 4294901760
        %2741 = vmatpush1.msra.mxu0 %v2740
        %2742 = vmatprep.subr.mxu0 0.0
        %v2743 = vand.u32 %v2000, 4294901760
        %v2744 = vsub.f32 %v2000, %v2743
        %v2745 = vand.u32 %v2744, 4294901760
        %2746 = vmatpush1.msra.mxu0 %v2745
        %2747 = vmatprep.subr.mxu0 0.0
        %v2748 = vand.u32 %v2001, 4294901760
        %v2749 = vsub.f32 %v2001, %v2748
        %v2750 = vand.u32 %v2749, 4294901760
        %2751 = vmatpush1.msra.mxu0 %v2750
        %v2752 = vand.u32 %v206, 4294901760
        %2753 = vmatprep.mubr.f32.mxu0 %v2752
        %v2754 = vand.u32 %v172, 4294901760
        %2755 = vmatmul.mubr.f32.gmra.mrb[0].mxu0 %v2754
        %v2756 = vpop.f32.mrb[0].mxu0
        %v2757 = vadd.f32 %v2589, %v2756
        %v2758 = vpop.f32.mrb[0].mxu0
        %2759 = vdwg.mxu0
        %2760 = vmatprep.subr.mxu0 0.0
        %v2761 = vand.u32 %v1970, 4294901760
        %2762 = vmatpush1.msra.mxu0 %v2761
        %2763 = vmatprep.subr.mxu0 0.0
        %v2764 = vand.u32 %v1971, 4294901760
        %2765 = vmatpush1.msra.mxu0 %v2764
        %2766 = vmatprep.subr.mxu0 0.0
        %v2767 = vand.u32 %v1972, 4294901760
        %2768 = vmatpush1.msra.mxu0 %v2767
        %2769 = vmatprep.subr.mxu0 0.0
        %v2770 = vand.u32 %v1973, 4294901760
        %2771 = vmatpush1.msra.mxu0 %v2770
        %2772 = vmatprep.subr.mxu0 0.0
        %v2773 = vand.u32 %v1974, 4294901760
        %2774 = vmatpush1.msra.mxu0 %v2773
        %2775 = vmatprep.subr.mxu0 0.0
        %v2776 = vand.u32 %v1975, 4294901760
        %2777 = vmatpush1.msra.mxu0 %v2776
        %2778 = vmatprep.subr.mxu0 0.0
        %v2779 = vand.u32 %v1976, 4294901760
        %2780 = vmatpush1.msra.mxu0 %v2779
        %2781 = vmatprep.subr.mxu0 0.0
        %v2782 = vand.u32 %v1977, 4294901760
        %2783 = vmatpush1.msra.mxu0 %v2782
        %2784 = vmatprep.subr.mxu0 0.0
        %v2785 = vand.u32 %v1978, 4294901760
        %2786 = vmatpush1.msra.mxu0 %v2785
        %2787 = vmatprep.subr.mxu0 0.0
        %v2788 = vand.u32 %v1979, 4294901760
        %2789 = vmatpush1.msra.mxu0 %v2788
        %2790 = vmatprep.subr.mxu0 0.0
        %v2791 = vand.u32 %v1980, 4294901760
        %2792 = vmatpush1.msra.mxu0 %v2791
        %2793 = vmatprep.subr.mxu0 0.0
        %v2794 = vand.u32 %v1981, 4294901760
        %2795 = vmatpush1.msra.mxu0 %v2794
        %2796 = vmatprep.subr.mxu0 0.0
        %v2797 = vand.u32 %v1982, 4294901760
        %2798 = vmatpush1.msra.mxu0 %v2797
        %2799 = vmatprep.subr.mxu0 0.0
        %v2800 = vand.u32 %v1983, 4294901760
        %2801 = vmatpush1.msra.mxu0 %v2800
        %2802 = vmatprep.subr.mxu0 0.0
        %v2803 = vand.u32 %v1984, 4294901760
        %2804 = vmatpush1.msra.mxu0 %v2803
        %2805 = vmatprep.subr.mxu0 0.0
        %v2806 = vand.u32 %v1985, 4294901760
        %2807 = vmatpush1.msra.mxu0 %v2806
        %2808 = vmatprep.subr.mxu0 0.0
        %v2809 = vand.u32 %v1986, 4294901760
        %2810 = vmatpush1.msra.mxu0 %v2809
        %2811 = vmatprep.subr.mxu0 0.0
        %v2812 = vand.u32 %v1987, 4294901760
        %2813 = vmatpush1.msra.mxu0 %v2812
        %2814 = vmatprep.subr.mxu0 0.0
        %v2815 = vand.u32 %v1988, 4294901760
        %2816 = vmatpush1.msra.mxu0 %v2815
        %2817 = vmatprep.subr.mxu0 0.0
        %v2818 = vand.u32 %v1989, 4294901760
        %2819 = vmatpush1.msra.mxu0 %v2818
        %2820 = vmatprep.subr.mxu0 0.0
        %v2821 = vand.u32 %v1990, 4294901760
        %2822 = vmatpush1.msra.mxu0 %v2821
        %2823 = vmatprep.subr.mxu0 0.0
        %v2824 = vand.u32 %v1991, 4294901760
        %2825 = vmatpush1.msra.mxu0 %v2824
        %2826 = vmatprep.subr.mxu0 0.0
        %v2827 = vand.u32 %v1992, 4294901760
        %2828 = vmatpush1.msra.mxu0 %v2827
        %2829 = vmatprep.subr.mxu0 0.0
        %v2830 = vand.u32 %v1993, 4294901760
        %2831 = vmatpush1.msra.mxu0 %v2830
        %2832 = vmatprep.subr.mxu0 0.0
        %v2833 = vand.u32 %v1994, 4294901760
        %2834 = vmatpush1.msra.mxu0 %v2833
        %2835 = vmatprep.subr.mxu0 0.0
        %v2836 = vand.u32 %v1995, 4294901760
        %2837 = vmatpush1.msra.mxu0 %v2836
        %2838 = vmatprep.subr.mxu0 0.0
        %v2839 = vand.u32 %v1996, 4294901760
        %2840 = vmatpush1.msra.mxu0 %v2839
        %2841 = vmatprep.subr.mxu0 0.0
        %v2842 = vand.u32 %v1997, 4294901760
        %2843 = vmatpush1.msra.mxu0 %v2842
        %2844 = vmatprep.subr.mxu0 0.0
        %v2845 = vand.u32 %v1998, 4294901760
        %2846 = vmatpush1.msra.mxu0 %v2845
        %2847 = vmatprep.subr.mxu0 0.0
        %v2848 = vand.u32 %v1999, 4294901760
        %2849 = vmatpush1.msra.mxu0 %v2848
        %2850 = vmatprep.subr.mxu0 0.0
        %v2851 = vand.u32 %v2000, 4294901760
        %2852 = vmatpush1.msra.mxu0 %v2851
        %2853 = vmatprep.subr.mxu0 0.0
        %v2854 = vand.u32 %v2001, 4294901760
        %2855 = vmatpush1.msra.mxu0 %v2854
        %v2856 = vand.u32 %v206, 4294901760
        %2857 = vmatprep.mubr.f32.mxu0 %v2856
        %v2858 = vand.u32 %v172, 4294901760
        %2859 = vmatmul.mubr.f32.gmra.mrb[0].mxu0 %v2858
        %v2860 = vpop.f32.mrb[0].mxu0
        %v2861 = vadd.f32 %v2757, %v2860
        %v2862 = vpop.f32.mrb[0].mxu0
        %2863 = vdwg.mxu0
        %s2864 = scalar_lea.vmem %s161, 8 [#allocation2]
        %2865 = vst.msk [vmem:[%s2864] sm:$0xf] %vm1070, %v2861
        %s2866 = scalar_lea.vmem %s1, 768
        %v2867 = vld [vmem:[%s2866] sm:$0xff]
        %v2868 = vld [vmem:[%s2866 + $0x8] sm:$0xff]
        %v2869 = vld [vmem:[%s2866 + $0x10] sm:$0xff]
        %v2870 = vld [vmem:[%s2866 + $0x18] sm:$0xff]
        %v2871 = vld [vmem:[%s2866 + $0x20] sm:$0xff]
        %v2872 = vld [vmem:[%s2866 + $0x28] sm:$0xff]
        %v2873 = vld [vmem:[%s2866 + $0x30] sm:$0xff]
        %v2874 = vld [vmem:[%s2866 + $0x38] sm:$0xff]
        %v2875 = vld [vmem:[%s2866 + $0x40] sm:$0xff]
        %v2876 = vld [vmem:[%s2866 + $0x48] sm:$0xff]
        %v2877 = vld [vmem:[%s2866 + $0x50] sm:$0xff]
        %v2878 = vld [vmem:[%s2866 + $0x58] sm:$0xff]
        %v2879 = vld [vmem:[%s2866 + $0x60] sm:$0xff]
        %v2880 = vld [vmem:[%s2866 + $0x68] sm:$0xff]
        %v2881 = vld [vmem:[%s2866 + $0x70] sm:$0xff]
        %v2882 = vld [vmem:[%s2866 + $0x78] sm:$0xff]
        %v2883 = vld [vmem:[%s2866 + $0x80] sm:$0xff]
        %v2884 = vld [vmem:[%s2866 + $0x88] sm:$0xff]
        %v2885 = vld [vmem:[%s2866 + $0x90] sm:$0xff]
        %v2886 = vld [vmem:[%s2866 + $0x98] sm:$0xff]
        %v2887 = vld [vmem:[%s2866 + $0xa0] sm:$0xff]
        %v2888 = vld [vmem:[%s2866 + $0xa8] sm:$0xff]
        %v2889 = vld [vmem:[%s2866 + $0xb0] sm:$0xff]
        %v2890 = vld [vmem:[%s2866 + $0xb8] sm:$0xff]
        %v2891 = vld [vmem:[%s2866 + $0xc0] sm:$0xff]
        %v2892 = vld [vmem:[%s2866 + $0xc8] sm:$0xff]
        %v2893 = vld [vmem:[%s2866 + $0xd0] sm:$0xff]
        %v2894 = vld [vmem:[%s2866 + $0xd8] sm:$0xff]
        %v2895 = vld [vmem:[%s2866 + $0xe0] sm:$0xff]
        %v2896 = vld [vmem:[%s2866 + $0xe8] sm:$0xff]
        %v2897 = vld [vmem:[%s2866 + $0xf0] sm:$0xff]
        %v2898 = vld [vmem:[%s2866 + $0xf8] sm:$0xff]
        %2899 = vmatprep.subr.mxu0 0.0
        %v2900 = vand.u32 %v2867, 4294901760
        %2901 = vmatpush1.msra.mxu0 %v2900
        %2902 = vmatprep.subr.mxu0 0.0
        %v2903 = vand.u32 %v2868, 4294901760
        %2904 = vmatpush1.msra.mxu0 %v2903
        %2905 = vmatprep.subr.mxu0 0.0
        %v2906 = vand.u32 %v2869, 4294901760
        %2907 = vmatpush1.msra.mxu0 %v2906
        %2908 = vmatprep.subr.mxu0 0.0
        %v2909 = vand.u32 %v2870, 4294901760
        %2910 = vmatpush1.msra.mxu0 %v2909
        %2911 = vmatprep.subr.mxu0 0.0
        %v2912 = vand.u32 %v2871, 4294901760
        %2913 = vmatpush1.msra.mxu0 %v2912
        %2914 = vmatprep.subr.mxu0 0.0
        %v2915 = vand.u32 %v2872, 4294901760
        %2916 = vmatpush1.msra.mxu0 %v2915
        %2917 = vmatprep.subr.mxu0 0.0
        %v2918 = vand.u32 %v2873, 4294901760
        %2919 = vmatpush1.msra.mxu0 %v2918
        %2920 = vmatprep.subr.mxu0 0.0
        %v2921 = vand.u32 %v2874, 4294901760
        %2922 = vmatpush1.msra.mxu0 %v2921
        %2923 = vmatprep.subr.mxu0 0.0
        %v2924 = vand.u32 %v2875, 4294901760
        %2925 = vmatpush1.msra.mxu0 %v2924
        %2926 = vmatprep.subr.mxu0 0.0
        %v2927 = vand.u32 %v2876, 4294901760
        %2928 = vmatpush1.msra.mxu0 %v2927
        %2929 = vmatprep.subr.mxu0 0.0
        %v2930 = vand.u32 %v2877, 4294901760
        %2931 = vmatpush1.msra.mxu0 %v2930
        %2932 = vmatprep.subr.mxu0 0.0
        %v2933 = vand.u32 %v2878, 4294901760
        %2934 = vmatpush1.msra.mxu0 %v2933
        %2935 = vmatprep.subr.mxu0 0.0
        %v2936 = vand.u32 %v2879, 4294901760
        %2937 = vmatpush1.msra.mxu0 %v2936
        %2938 = vmatprep.subr.mxu0 0.0
        %v2939 = vand.u32 %v2880, 4294901760
        %2940 = vmatpush1.msra.mxu0 %v2939
        %2941 = vmatprep.subr.mxu0 0.0
        %v2942 = vand.u32 %v2881, 4294901760
        %2943 = vmatpush1.msra.mxu0 %v2942
        %2944 = vmatprep.subr.mxu0 0.0
        %v2945 = vand.u32 %v2882, 4294901760
        %2946 = vmatpush1.msra.mxu0 %v2945
        %2947 = vmatprep.subr.mxu0 0.0
        %v2948 = vand.u32 %v2883, 4294901760
        %2949 = vmatpush1.msra.mxu0 %v2948
        %2950 = vmatprep.subr.mxu0 0.0
        %v2951 = vand.u32 %v2884, 4294901760
        %2952 = vmatpush1.msra.mxu0 %v2951
        %2953 = vmatprep.subr.mxu0 0.0
        %v2954 = vand.u32 %v2885, 4294901760
        %2955 = vmatpush1.msra.mxu0 %v2954
        %2956 = vmatprep.subr.mxu0 0.0
        %v2957 = vand.u32 %v2886, 4294901760
        %2958 = vmatpush1.msra.mxu0 %v2957
        %2959 = vmatprep.subr.mxu0 0.0
        %v2960 = vand.u32 %v2887, 4294901760
        %2961 = vmatpush1.msra.mxu0 %v2960
        %2962 = vmatprep.subr.mxu0 0.0
        %v2963 = vand.u32 %v2888, 4294901760
        %2964 = vmatpush1.msra.mxu0 %v2963
        %2965 = vmatprep.subr.mxu0 0.0
        %v2966 = vand.u32 %v2889, 4294901760
        %2967 = vmatpush1.msra.mxu0 %v2966
        %2968 = vmatprep.subr.mxu0 0.0
        %v2969 = vand.u32 %v2890, 4294901760
        %2970 = vmatpush1.msra.mxu0 %v2969
        %2971 = vmatprep.subr.mxu0 0.0
        %v2972 = vand.u32 %v2891, 4294901760
        %2973 = vmatpush1.msra.mxu0 %v2972
        %2974 = vmatprep.subr.mxu0 0.0
        %v2975 = vand.u32 %v2892, 4294901760
        %2976 = vmatpush1.msra.mxu0 %v2975
        %2977 = vmatprep.subr.mxu0 0.0
        %v2978 = vand.u32 %v2893, 4294901760
        %2979 = vmatpush1.msra.mxu0 %v2978
        %2980 = vmatprep.subr.mxu0 0.0
        %v2981 = vand.u32 %v2894, 4294901760
        %2982 = vmatpush1.msra.mxu0 %v2981
        %2983 = vmatprep.subr.mxu0 0.0
        %v2984 = vand.u32 %v2895, 4294901760
        %2985 = vmatpush1.msra.mxu0 %v2984
        %2986 = vmatprep.subr.mxu0 0.0
        %v2987 = vand.u32 %v2896, 4294901760
        %2988 = vmatpush1.msra.mxu0 %v2987
        %2989 = vmatprep.subr.mxu0 0.0
        %v2990 = vand.u32 %v2897, 4294901760
        %2991 = vmatpush1.msra.mxu0 %v2990
        %2992 = vmatprep.subr.mxu0 0.0
        %v2993 = vand.u32 %v2898, 4294901760
        %2994 = vmatpush1.msra.mxu0 %v2993
        %v2995 = vand.u32 %v206, 4294901760
        %v2996 = vsub.f32 %v206, %v2995
        %v2997 = vand.u32 %v2996, 4294901760
        %v2998 = vsub.f32 %v2996, %v2997
        %v2999 = vand.u32 %v2998, 4294901760
        %3000 = vmatprep.mubr.f32.mxu0 %v2999
        %v3001 = vand.u32 %v172, 4294901760
        %v3002 = vsub.f32 %v172, %v3001
        %v3003 = vand.u32 %v3002, 4294901760
        %v3004 = vsub.f32 %v3002, %v3003
        %v3005 = vand.u32 %v3004, 4294901760
        %3006 = vmatmul.mubr.f32.gmra.mrb[0].mxu0 %v3005
        %v3007 = vpop.f32.mrb[0].mxu0
        %v3008 = vadd.f32 0.0, %v3007
        %v3009 = vpop.f32.mrb[0].mxu0
        %3010 = vdwg.mxu0
        %3011 = vmatprep.subr.mxu0 0.0
        %v3012 = vand.u32 %v2867, 4294901760
        %v3013 = vsub.f32 %v2867, %v3012
        %v3014 = vand.u32 %v3013, 4294901760
        %v3015 = vsub.f32 %v3013, %v3014
        %v3016 = vand.u32 %v3015, 4294901760
        %3017 = vmatpush1.msra.mxu0 %v3016
        %3018 = vmatprep.subr.mxu0 0.0
        %v3019 = vand.u32 %v2868, 4294901760
        %v3020 = vsub.f32 %v2868, %v3019
        %v3021 = vand.u32 %v3020, 4294901760
        %v3022 = vsub.f32 %v3020, %v3021
        %v3023 = vand.u32 %v3022, 4294901760
        %3024 = vmatpush1.msra.mxu0 %v3023
        %3025 = vmatprep.subr.mxu0 0.0
        %v3026 = vand.u32 %v2869, 4294901760
        %v3027 = vsub.f32 %v2869, %v3026
        %v3028 = vand.u32 %v3027, 4294901760
        %v3029 = vsub.f32 %v3027, %v3028
        %v3030 = vand.u32 %v3029, 4294901760
        %3031 = vmatpush1.msra.mxu0 %v3030
        %3032 = vmatprep.subr.mxu0 0.0
        %v3033 = vand.u32 %v2870, 4294901760
        %v3034 = vsub.f32 %v2870, %v3033
        %v3035 = vand.u32 %v3034, 4294901760
        %v3036 = vsub.f32 %v3034, %v3035
        %v3037 = vand.u32 %v3036, 4294901760
        %3038 = vmatpush1.msra.mxu0 %v3037
        %3039 = vmatprep.subr.mxu0 0.0
        %v3040 = vand.u32 %v2871, 4294901760
        %v3041 = vsub.f32 %v2871, %v3040
        %v3042 = vand.u32 %v3041, 4294901760
        %v3043 = vsub.f32 %v3041, %v3042
        %v3044 = vand.u32 %v3043, 4294901760
        %3045 = vmatpush1.msra.mxu0 %v3044
        %3046 = vmatprep.subr.mxu0 0.0
        %v3047 = vand.u32 %v2872, 4294901760
        %v3048 = vsub.f32 %v2872, %v3047
        %v3049 = vand.u32 %v3048, 4294901760
        %v3050 = vsub.f32 %v3048, %v3049
        %v3051 = vand.u32 %v3050, 4294901760
        %3052 = vmatpush1.msra.mxu0 %v3051
        %3053 = vmatprep.subr.mxu0 0.0
        %v3054 = vand.u32 %v2873, 4294901760
        %v3055 = vsub.f32 %v2873, %v3054
        %v3056 = vand.u32 %v3055, 4294901760
        %v3057 = vsub.f32 %v3055, %v3056
        %v3058 = vand.u32 %v3057, 4294901760
        %3059 = vmatpush1.msra.mxu0 %v3058
        %3060 = vmatprep.subr.mxu0 0.0
        %v3061 = vand.u32 %v2874, 4294901760
        %v3062 = vsub.f32 %v2874, %v3061
        %v3063 = vand.u32 %v3062, 4294901760
        %v3064 = vsub.f32 %v3062, %v3063
        %v3065 = vand.u32 %v3064, 4294901760
        %3066 = vmatpush1.msra.mxu0 %v3065
        %3067 = vmatprep.subr.mxu0 0.0
        %v3068 = vand.u32 %v2875, 4294901760
        %v3069 = vsub.f32 %v2875, %v3068
        %v3070 = vand.u32 %v3069, 4294901760
        %v3071 = vsub.f32 %v3069, %v3070
        %v3072 = vand.u32 %v3071, 4294901760
        %3073 = vmatpush1.msra.mxu0 %v3072
        %3074 = vmatprep.subr.mxu0 0.0
        %v3075 = vand.u32 %v2876, 4294901760
        %v3076 = vsub.f32 %v2876, %v3075
        %v3077 = vand.u32 %v3076, 4294901760
        %v3078 = vsub.f32 %v3076, %v3077
        %v3079 = vand.u32 %v3078, 4294901760
        %3080 = vmatpush1.msra.mxu0 %v3079
        %3081 = vmatprep.subr.mxu0 0.0
        %v3082 = vand.u32 %v2877, 4294901760
        %v3083 = vsub.f32 %v2877, %v3082
        %v3084 = vand.u32 %v3083, 4294901760
        %v3085 = vsub.f32 %v3083, %v3084
        %v3086 = vand.u32 %v3085, 4294901760
        %3087 = vmatpush1.msra.mxu0 %v3086
        %3088 = vmatprep.subr.mxu0 0.0
        %v3089 = vand.u32 %v2878, 4294901760
        %v3090 = vsub.f32 %v2878, %v3089
        %v3091 = vand.u32 %v3090, 4294901760
        %v3092 = vsub.f32 %v3090, %v3091
        %v3093 = vand.u32 %v3092, 4294901760
        %3094 = vmatpush1.msra.mxu0 %v3093
        %3095 = vmatprep.subr.mxu0 0.0
        %v3096 = vand.u32 %v2879, 4294901760
        %v3097 = vsub.f32 %v2879, %v3096
        %v3098 = vand.u32 %v3097, 4294901760
        %v3099 = vsub.f32 %v3097, %v3098
        %v3100 = vand.u32 %v3099, 4294901760
        %3101 = vmatpush1.msra.mxu0 %v3100
        %3102 = vmatprep.subr.mxu0 0.0
        %v3103 = vand.u32 %v2880, 4294901760
        %v3104 = vsub.f32 %v2880, %v3103
        %v3105 = vand.u32 %v3104, 4294901760
        %v3106 = vsub.f32 %v3104, %v3105
        %v3107 = vand.u32 %v3106, 4294901760
        %3108 = vmatpush1.msra.mxu0 %v3107
        %3109 = vmatprep.subr.mxu0 0.0
        %v3110 = vand.u32 %v2881, 4294901760
        %v3111 = vsub.f32 %v2881, %v3110
        %v3112 = vand.u32 %v3111, 4294901760
        %v3113 = vsub.f32 %v3111, %v3112
        %v3114 = vand.u32 %v3113, 4294901760
        %3115 = vmatpush1.msra.mxu0 %v3114
        %3116 = vmatprep.subr.mxu0 0.0
        %v3117 = vand.u32 %v2882, 4294901760
        %v3118 = vsub.f32 %v2882, %v3117
        %v3119 = vand.u32 %v3118, 4294901760
        %v3120 = vsub.f32 %v3118, %v3119
        %v3121 = vand.u32 %v3120, 4294901760
        %3122 = vmatpush1.msra.mxu0 %v3121
        %3123 = vmatprep.subr.mxu0 0.0
        %v3124 = vand.u32 %v2883, 4294901760
        %v3125 = vsub.f32 %v2883, %v3124
        %v3126 = vand.u32 %v3125, 4294901760
        %v3127 = vsub.f32 %v3125, %v3126
        %v3128 = vand.u32 %v3127, 4294901760
        %3129 = vmatpush1.msra.mxu0 %v3128
        %3130 = vmatprep.subr.mxu0 0.0
        %v3131 = vand.u32 %v2884, 4294901760
        %v3132 = vsub.f32 %v2884, %v3131
        %v3133 = vand.u32 %v3132, 4294901760
        %v3134 = vsub.f32 %v3132, %v3133
        %v3135 = vand.u32 %v3134, 4294901760
        %3136 = vmatpush1.msra.mxu0 %v3135
        %3137 = vmatprep.subr.mxu0 0.0
        %v3138 = vand.u32 %v2885, 4294901760
        %v3139 = vsub.f32 %v2885, %v3138
        %v3140 = vand.u32 %v3139, 4294901760
        %v3141 = vsub.f32 %v3139, %v3140
        %v3142 = vand.u32 %v3141, 4294901760
        %3143 = vmatpush1.msra.mxu0 %v3142
        %3144 = vmatprep.subr.mxu0 0.0
        %v3145 = vand.u32 %v2886, 4294901760
        %v3146 = vsub.f32 %v2886, %v3145
        %v3147 = vand.u32 %v3146, 4294901760
        %v3148 = vsub.f32 %v3146, %v3147
        %v3149 = vand.u32 %v3148, 4294901760
        %3150 = vmatpush1.msra.mxu0 %v3149
        %3151 = vmatprep.subr.mxu0 0.0
        %v3152 = vand.u32 %v2887, 4294901760
        %v3153 = vsub.f32 %v2887, %v3152
        %v3154 = vand.u32 %v3153, 4294901760
        %v3155 = vsub.f32 %v3153, %v3154
        %v3156 = vand.u32 %v3155, 4294901760
        %3157 = vmatpush1.msra.mxu0 %v3156
        %3158 = vmatprep.subr.mxu0 0.0
        %v3159 = vand.u32 %v2888, 4294901760
        %v3160 = vsub.f32 %v2888, %v3159
        %v3161 = vand.u32 %v3160, 4294901760
        %v3162 = vsub.f32 %v3160, %v3161
        %v3163 = vand.u32 %v3162, 4294901760
        %3164 = vmatpush1.msra.mxu0 %v3163
        %3165 = vmatprep.subr.mxu0 0.0
        %v3166 = vand.u32 %v2889, 4294901760
        %v3167 = vsub.f32 %v2889, %v3166
        %v3168 = vand.u32 %v3167, 4294901760
        %v3169 = vsub.f32 %v3167, %v3168
        %v3170 = vand.u32 %v3169, 4294901760
        %3171 = vmatpush1.msra.mxu0 %v3170
        %3172 = vmatprep.subr.mxu0 0.0
        %v3173 = vand.u32 %v2890, 4294901760
        %v3174 = vsub.f32 %v2890, %v3173
        %v3175 = vand.u32 %v3174, 4294901760
        %v3176 = vsub.f32 %v3174, %v3175
        %v3177 = vand.u32 %v3176, 4294901760
        %3178 = vmatpush1.msra.mxu0 %v3177
        %3179 = vmatprep.subr.mxu0 0.0
        %v3180 = vand.u32 %v2891, 4294901760
        %v3181 = vsub.f32 %v2891, %v3180
        %v3182 = vand.u32 %v3181, 4294901760
        %v3183 = vsub.f32 %v3181, %v3182
        %v3184 = vand.u32 %v3183, 4294901760
        %3185 = vmatpush1.msra.mxu0 %v3184
        %3186 = vmatprep.subr.mxu0 0.0
        %v3187 = vand.u32 %v2892, 4294901760
        %v3188 = vsub.f32 %v2892, %v3187
        %v3189 = vand.u32 %v3188, 4294901760
        %v3190 = vsub.f32 %v3188, %v3189
        %v3191 = vand.u32 %v3190, 4294901760
        %3192 = vmatpush1.msra.mxu0 %v3191
        %3193 = vmatprep.subr.mxu0 0.0
        %v3194 = vand.u32 %v2893, 4294901760
        %v3195 = vsub.f32 %v2893, %v3194
        %v3196 = vand.u32 %v3195, 4294901760
        %v3197 = vsub.f32 %v3195, %v3196
        %v3198 = vand.u32 %v3197, 4294901760
        %3199 = vmatpush1.msra.mxu0 %v3198
        %3200 = vmatprep.subr.mxu0 0.0
        %v3201 = vand.u32 %v2894, 4294901760
        %v3202 = vsub.f32 %v2894, %v3201
        %v3203 = vand.u32 %v3202, 4294901760
        %v3204 = vsub.f32 %v3202, %v3203
        %v3205 = vand.u32 %v3204, 4294901760
        %3206 = vmatpush1.msra.mxu0 %v3205
        %3207 = vmatprep.subr.mxu0 0.0
        %v3208 = vand.u32 %v2895, 4294901760
        %v3209 = vsub.f32 %v2895, %v3208
        %v3210 = vand.u32 %v3209, 4294901760
        %v3211 = vsub.f32 %v3209, %v3210
        %v3212 = vand.u32 %v3211, 4294901760
        %3213 = vmatpush1.msra.mxu0 %v3212
        %3214 = vmatprep.subr.mxu0 0.0
        %v3215 = vand.u32 %v2896, 4294901760
        %v3216 = vsub.f32 %v2896, %v3215
        %v3217 = vand.u32 %v3216, 4294901760
        %v3218 = vsub.f32 %v3216, %v3217
        %v3219 = vand.u32 %v3218, 4294901760
        %3220 = vmatpush1.msra.mxu0 %v3219
        %3221 = vmatprep.subr.mxu0 0.0
        %v3222 = vand.u32 %v2897, 4294901760
        %v3223 = vsub.f32 %v2897, %v3222
        %v3224 = vand.u32 %v3223, 4294901760
        %v3225 = vsub.f32 %v3223, %v3224
        %v3226 = vand.u32 %v3225, 4294901760
        %3227 = vmatpush1.msra.mxu0 %v3226
        %3228 = vmatprep.subr.mxu0 0.0
        %v3229 = vand.u32 %v2898, 4294901760
        %v3230 = vsub.f32 %v2898, %v3229
        %v3231 = vand.u32 %v3230, 4294901760
        %v3232 = vsub.f32 %v3230, %v3231
        %v3233 = vand.u32 %v3232, 4294901760
        %3234 = vmatpush1.msra.mxu0 %v3233
        %v3235 = vand.u32 %v206, 4294901760
        %3236 = vmatprep.mubr.f32.mxu0 %v3235
        %v3237 = vand.u32 %v172, 4294901760
        %3238 = vmatmul.mubr.f32.gmra.mrb[0].mxu0 %v3237
        %v3239 = vpop.f32.mrb[0].mxu0
        %v3240 = vadd.f32 %v3008, %v3239
        %v3241 = vpop.f32.mrb[0].mxu0
        %3242 = vdwg.mxu0
        %3243 = vmatprep.subr.mxu0 0.0
        %v3244 = vand.u32 %v2867, 4294901760
        %v3245 = vsub.f32 %v2867, %v3244
        %3246 = vmatpush1.msra.mxu0 %v3245
        %3247 = vmatprep.subr.mxu0 0.0
        %v3248 = vand.u32 %v2868, 4294901760
        %v3249 = vsub.f32 %v2868, %v3248
        %3250 = vmatpush1.msra.mxu0 %v3249
        %3251 = vmatprep.subr.mxu0 0.0
        %v3252 = vand.u32 %v2869, 4294901760
        %v3253 = vsub.f32 %v2869, %v3252
        %3254 = vmatpush1.msra.mxu0 %v3253
        %3255 = vmatprep.subr.mxu0 0.0
        %v3256 = vand.u32 %v2870, 4294901760
        %v3257 = vsub.f32 %v2870, %v3256
        %3258 = vmatpush1.msra.mxu0 %v3257
        %3259 = vmatprep.subr.mxu0 0.0
        %v3260 = vand.u32 %v2871, 4294901760
        %v3261 = vsub.f32 %v2871, %v3260
        %3262 = vmatpush1.msra.mxu0 %v3261
        %3263 = vmatprep.subr.mxu0 0.0
        %v3264 = vand.u32 %v2872, 4294901760
        %v3265 = vsub.f32 %v2872, %v3264
        %3266 = vmatpush1.msra.mxu0 %v3265
        %3267 = vmatprep.subr.mxu0 0.0
        %v3268 = vand.u32 %v2873, 4294901760
        %v3269 = vsub.f32 %v2873, %v3268
        %3270 = vmatpush1.msra.mxu0 %v3269
        %3271 = vmatprep.subr.mxu0 0.0
        %v3272 = vand.u32 %v2874, 4294901760
        %v3273 = vsub.f32 %v2874, %v3272
        %3274 = vmatpush1.msra.mxu0 %v3273
        %3275 = vmatprep.subr.mxu0 0.0
        %v3276 = vand.u32 %v2875, 4294901760
        %v3277 = vsub.f32 %v2875, %v3276
        %3278 = vmatpush1.msra.mxu0 %v3277
        %3279 = vmatprep.subr.mxu0 0.0
        %v3280 = vand.u32 %v2876, 4294901760
        %v3281 = vsub.f32 %v2876, %v3280
        %3282 = vmatpush1.msra.mxu0 %v3281
        %3283 = vmatprep.subr.mxu0 0.0
        %v3284 = vand.u32 %v2877, 4294901760
        %v3285 = vsub.f32 %v2877, %v3284
        %3286 = vmatpush1.msra.mxu0 %v3285
        %3287 = vmatprep.subr.mxu0 0.0
        %v3288 = vand.u32 %v2878, 4294901760
        %v3289 = vsub.f32 %v2878, %v3288
        %3290 = vmatpush1.msra.mxu0 %v3289
        %3291 = vmatprep.subr.mxu0 0.0
        %v3292 = vand.u32 %v2879, 4294901760
        %v3293 = vsub.f32 %v2879, %v3292
        %3294 = vmatpush1.msra.mxu0 %v3293
        %3295 = vmatprep.subr.mxu0 0.0
        %v3296 = vand.u32 %v2880, 4294901760
        %v3297 = vsub.f32 %v2880, %v3296
        %3298 = vmatpush1.msra.mxu0 %v3297
        %3299 = vmatprep.subr.mxu0 0.0
        %v3300 = vand.u32 %v2881, 4294901760
        %v3301 = vsub.f32 %v2881, %v3300
        %3302 = vmatpush1.msra.mxu0 %v3301
        %3303 = vmatprep.subr.mxu0 0.0
        %v3304 = vand.u32 %v2882, 4294901760
        %v3305 = vsub.f32 %v2882, %v3304
        %3306 = vmatpush1.msra.mxu0 %v3305
        %3307 = vmatprep.subr.mxu0 0.0
        %v3308 = vand.u32 %v2883, 4294901760
        %v3309 = vsub.f32 %v2883, %v3308
        %3310 = vmatpush1.msra.mxu0 %v3309
        %3311 = vmatprep.subr.mxu0 0.0
        %v3312 = vand.u32 %v2884, 4294901760
        %v3313 = vsub.f32 %v2884, %v3312
        %3314 = vmatpush1.msra.mxu0 %v3313
        %3315 = vmatprep.subr.mxu0 0.0
        %v3316 = vand.u32 %v2885, 4294901760
        %v3317 = vsub.f32 %v2885, %v3316
        %3318 = vmatpush1.msra.mxu0 %v3317
        %3319 = vmatprep.subr.mxu0 0.0
        %v3320 = vand.u32 %v2886, 4294901760
        %v3321 = vsub.f32 %v2886, %v3320
        %3322 = vmatpush1.msra.mxu0 %v3321
        %3323 = vmatprep.subr.mxu0 0.0
        %v3324 = vand.u32 %v2887, 4294901760
        %v3325 = vsub.f32 %v2887, %v3324
        %3326 = vmatpush1.msra.mxu0 %v3325
        %3327 = vmatprep.subr.mxu0 0.0
        %v3328 = vand.u32 %v2888, 4294901760
        %v3329 = vsub.f32 %v2888, %v3328
        %3330 = vmatpush1.msra.mxu0 %v3329
        %3331 = vmatprep.subr.mxu0 0.0
        %v3332 = vand.u32 %v2889, 4294901760
        %v3333 = vsub.f32 %v2889, %v3332
        %3334 = vmatpush1.msra.mxu0 %v3333
        %3335 = vmatprep.subr.mxu0 0.0
        %v3336 = vand.u32 %v2890, 4294901760
        %v3337 = vsub.f32 %v2890, %v3336
        %3338 = vmatpush1.msra.mxu0 %v3337
        %3339 = vmatprep.subr.mxu0 0.0
        %v3340 = vand.u32 %v2891, 4294901760
        %v3341 = vsub.f32 %v2891, %v3340
        %3342 = vmatpush1.msra.mxu0 %v3341
        %3343 = vmatprep.subr.mxu0 0.0
        %v3344 = vand.u32 %v2892, 4294901760
        %v3345 = vsub.f32 %v2892, %v3344
        %3346 = vmatpush1.msra.mxu0 %v3345
        %3347 = vmatprep.subr.mxu0 0.0
        %v3348 = vand.u32 %v2893, 4294901760
        %v3349 = vsub.f32 %v2893, %v3348
        %3350 = vmatpush1.msra.mxu0 %v3349
        %3351 = vmatprep.subr.mxu0 0.0
        %v3352 = vand.u32 %v2894, 4294901760
        %v3353 = vsub.f32 %v2894, %v3352
        %3354 = vmatpush1.msra.mxu0 %v3353
        %3355 = vmatprep.subr.mxu0 0.0
        %v3356 = vand.u32 %v2895, 4294901760
        %v3357 = vsub.f32 %v2895, %v3356
        %3358 = vmatpush1.msra.mxu0 %v3357
        %3359 = vmatprep.subr.mxu0 0.0
        %v3360 = vand.u32 %v2896, 4294901760
        %v3361 = vsub.f32 %v2896, %v3360
        %3362 = vmatpush1.msra.mxu0 %v3361
        %3363 = vmatprep.subr.mxu0 0.0
        %v3364 = vand.u32 %v2897, 4294901760
        %v3365 = vsub.f32 %v2897, %v3364
        %3366 = vmatpush1.msra.mxu0 %v3365
        %3367 = vmatprep.subr.mxu0 0.0
        %v3368 = vand.u32 %v2898, 4294901760
        %v3369 = vsub.f32 %v2898, %v3368
        %3370 = vmatpush1.msra.mxu0 %v3369
        %v3371 = vand.u32 %v206, 4294901760
        %v3372 = vsub.f32 %v206, %v3371
        %3373 = vmatprep.mubr.f32.mxu0 %v3372
        %v3374 = vand.u32 %v172, 4294901760
        %v3375 = vsub.f32 %v172, %v3374
        %3376 = vmatmul.mubr.f32.gmra.mrb[0].mxu0 %v3375
        %v3377 = vpop.f32.mrb[0].mxu0
        %v3378 = vadd.f32 %v3240, %v3377
        %v3379 = vpop.f32.mrb[0].mxu0
        %3380 = vdwg.mxu0
        %3381 = vmatprep.subr.mxu0 0.0
        %v3382 = vand.u32 %v2867, 4294901760
        %3383 = vmatpush1.msra.mxu0 %v3382
        %3384 = vmatprep.subr.mxu0 0.0
        %v3385 = vand.u32 %v2868, 4294901760
        %3386 = vmatpush1.msra.mxu0 %v3385
        %3387 = vmatprep.subr.mxu0 0.0
        %v3388 = vand.u32 %v2869, 4294901760
        %3389 = vmatpush1.msra.mxu0 %v3388
        %3390 = vmatprep.subr.mxu0 0.0
        %v3391 = vand.u32 %v2870, 4294901760
        %3392 = vmatpush1.msra.mxu0 %v3391
        %3393 = vmatprep.subr.mxu0 0.0
        %v3394 = vand.u32 %v2871, 4294901760
        %3395 = vmatpush1.msra.mxu0 %v3394
        %3396 = vmatprep.subr.mxu0 0.0
        %v3397 = vand.u32 %v2872, 4294901760
        %3398 = vmatpush1.msra.mxu0 %v3397
        %3399 = vmatprep.subr.mxu0 0.0
        %v3400 = vand.u32 %v2873, 4294901760
        %3401 = vmatpush1.msra.mxu0 %v3400
        %3402 = vmatprep.subr.mxu0 0.0
        %v3403 = vand.u32 %v2874, 4294901760
        %3404 = vmatpush1.msra.mxu0 %v3403
        %3405 = vmatprep.subr.mxu0 0.0
        %v3406 = vand.u32 %v2875, 4294901760
        %3407 = vmatpush1.msra.mxu0 %v3406
        %3408 = vmatprep.subr.mxu0 0.0
        %v3409 = vand.u32 %v2876, 4294901760
        %3410 = vmatpush1.msra.mxu0 %v3409
        %3411 = vmatprep.subr.mxu0 0.0
        %v3412 = vand.u32 %v2877, 4294901760
        %3413 = vmatpush1.msra.mxu0 %v3412
        %3414 = vmatprep.subr.mxu0 0.0
        %v3415 = vand.u32 %v2878, 4294901760
        %3416 = vmatpush1.msra.mxu0 %v3415
        %3417 = vmatprep.subr.mxu0 0.0
        %v3418 = vand.u32 %v2879, 4294901760
        %3419 = vmatpush1.msra.mxu0 %v3418
        %3420 = vmatprep.subr.mxu0 0.0
        %v3421 = vand.u32 %v2880, 4294901760
        %3422 = vmatpush1.msra.mxu0 %v3421
        %3423 = vmatprep.subr.mxu0 0.0
        %v3424 = vand.u32 %v2881, 4294901760
        %3425 = vmatpush1.msra.mxu0 %v3424
        %3426 = vmatprep.subr.mxu0 0.0
        %v3427 = vand.u32 %v2882, 4294901760
        %3428 = vmatpush1.msra.mxu0 %v3427
        %3429 = vmatprep.subr.mxu0 0.0
        %v3430 = vand.u32 %v2883, 4294901760
        %3431 = vmatpush1.msra.mxu0 %v3430
        %3432 = vmatprep.subr.mxu0 0.0
        %v3433 = vand.u32 %v2884, 4294901760
        %3434 = vmatpush1.msra.mxu0 %v3433
        %3435 = vmatprep.subr.mxu0 0.0
        %v3436 = vand.u32 %v2885, 4294901760
        %3437 = vmatpush1.msra.mxu0 %v3436
        %3438 = vmatprep.subr.mxu0 0.0
        %v3439 = vand.u32 %v2886, 4294901760
        %3440 = vmatpush1.msra.mxu0 %v3439
        %3441 = vmatprep.subr.mxu0 0.0
        %v3442 = vand.u32 %v2887, 4294901760
        %3443 = vmatpush1.msra.mxu0 %v3442
        %3444 = vmatprep.subr.mxu0 0.0
        %v3445 = vand.u32 %v2888, 4294901760
        %3446 = vmatpush1.msra.mxu0 %v3445
        %3447 = vmatprep.subr.mxu0 0.0
        %v3448 = vand.u32 %v2889, 4294901760
        %3449 = vmatpush1.msra.mxu0 %v3448
        %3450 = vmatprep.subr.mxu0 0.0
        %v3451 = vand.u32 %v2890, 4294901760
        %3452 = vmatpush1.msra.mxu0 %v3451
        %3453 = vmatprep.subr.mxu0 0.0
        %v3454 = vand.u32 %v2891, 4294901760
        %3455 = vmatpush1.msra.mxu0 %v3454
        %3456 = vmatprep.subr.mxu0 0.0
        %v3457 = vand.u32 %v2892, 4294901760
        %3458 = vmatpush1.msra.mxu0 %v3457
        %3459 = vmatprep.subr.mxu0 0.0
        %v3460 = vand.u32 %v2893, 4294901760
        %3461 = vmatpush1.msra.mxu0 %v3460
        %3462 = vmatprep.subr.mxu0 0.0
        %v3463 = vand.u32 %v2894, 4294901760
        %3464 = vmatpush1.msra.mxu0 %v3463
        %3465 = vmatprep.subr.mxu0 0.0
        %v3466 = vand.u32 %v2895, 4294901760
        %3467 = vmatpush1.msra.mxu0 %v3466
        %3468 = vmatprep.subr.mxu0 0.0
        %v3469 = vand.u32 %v2896, 4294901760
        %3470 = vmatpush1.msra.mxu0 %v3469
        %3471 = vmatprep.subr.mxu0 0.0
        %v3472 = vand.u32 %v2897, 4294901760
        %3473 = vmatpush1.msra.mxu0 %v3472
        %3474 = vmatprep.subr.mxu0 0.0
        %v3475 = vand.u32 %v2898, 4294901760
        %3476 = vmatpush1.msra.mxu0 %v3475
        %v3477 = vand.u32 %v206, 4294901760
        %v3478 = vsub.f32 %v206, %v3477
        %v3479 = vand.u32 %v3478, 4294901760
        %3480 = vmatprep.mubr.f32.mxu0 %v3479
        %v3481 = vand.u32 %v172, 4294901760
        %v3482 = vsub.f32 %v172, %v3481
        %v3483 = vand.u32 %v3482, 4294901760
        %3484 = vmatmul.mubr.f32.gmra.mrb[0].mxu0 %v3483
        %v3485 = vpop.f32.mrb[0].mxu0
        %v3486 = vadd.f32 %v3378, %v3485
        %v3487 = vpop.f32.mrb[0].mxu0
        %3488 = vdwg.mxu0
        %3489 = vmatprep.subr.mxu0 0.0
        %v3490 = vand.u32 %v2867, 4294901760
        %v3491 = vsub.f32 %v2867, %v3490
        %v3492 = vand.u32 %v3491, 4294901760
        %3493 = vmatpush1.msra.mxu0 %v3492
        %3494 = vmatprep.subr.mxu0 0.0
        %v3495 = vand.u32 %v2868, 4294901760
        %v3496 = vsub.f32 %v2868, %v3495
        %v3497 = vand.u32 %v3496, 4294901760
        %3498 = vmatpush1.msra.mxu0 %v3497
        %3499 = vmatprep.subr.mxu0 0.0
        %v3500 = vand.u32 %v2869, 4294901760
        %v3501 = vsub.f32 %v2869, %v3500
        %v3502 = vand.u32 %v3501, 4294901760
        %3503 = vmatpush1.msra.mxu0 %v3502
        %3504 = vmatprep.subr.mxu0 0.0
        %v3505 = vand.u32 %v2870, 4294901760
        %v3506 = vsub.f32 %v2870, %v3505
        %v3507 = vand.u32 %v3506, 4294901760
        %3508 = vmatpush1.msra.mxu0 %v3507
        %3509 = vmatprep.subr.mxu0 0.0
        %v3510 = vand.u32 %v2871, 4294901760
        %v3511 = vsub.f32 %v2871, %v3510
        %v3512 = vand.u32 %v3511, 4294901760
        %3513 = vmatpush1.msra.mxu0 %v3512
        %3514 = vmatprep.subr.mxu0 0.0
        %v3515 = vand.u32 %v2872, 4294901760
        %v3516 = vsub.f32 %v2872, %v3515
        %v3517 = vand.u32 %v3516, 4294901760
        %3518 = vmatpush1.msra.mxu0 %v3517
        %3519 = vmatprep.subr.mxu0 0.0
        %v3520 = vand.u32 %v2873, 4294901760
        %v3521 = vsub.f32 %v2873, %v3520
        %v3522 = vand.u32 %v3521, 4294901760
        %3523 = vmatpush1.msra.mxu0 %v3522
        %3524 = vmatprep.subr.mxu0 0.0
        %v3525 = vand.u32 %v2874, 4294901760
        %v3526 = vsub.f32 %v2874, %v3525
        %v3527 = vand.u32 %v3526, 4294901760
        %3528 = vmatpush1.msra.mxu0 %v3527
        %3529 = vmatprep.subr.mxu0 0.0
        %v3530 = vand.u32 %v2875, 4294901760
        %v3531 = vsub.f32 %v2875, %v3530
        %v3532 = vand.u32 %v3531, 4294901760
        %3533 = vmatpush1.msra.mxu0 %v3532
        %3534 = vmatprep.subr.mxu0 0.0
        %v3535 = vand.u32 %v2876, 4294901760
        %v3536 = vsub.f32 %v2876, %v3535
        %v3537 = vand.u32 %v3536, 4294901760
        %3538 = vmatpush1.msra.mxu0 %v3537
        %3539 = vmatprep.subr.mxu0 0.0
        %v3540 = vand.u32 %v2877, 4294901760
        %v3541 = vsub.f32 %v2877, %v3540
        %v3542 = vand.u32 %v3541, 4294901760
        %3543 = vmatpush1.msra.mxu0 %v3542
        %3544 = vmatprep.subr.mxu0 0.0
        %v3545 = vand.u32 %v2878, 4294901760
        %v3546 = vsub.f32 %v2878, %v3545
        %v3547 = vand.u32 %v3546, 4294901760
        %3548 = vmatpush1.msra.mxu0 %v3547
        %3549 = vmatprep.subr.mxu0 0.0
        %v3550 = vand.u32 %v2879, 4294901760
        %v3551 = vsub.f32 %v2879, %v3550
        %v3552 = vand.u32 %v3551, 4294901760
        %3553 = vmatpush1.msra.mxu0 %v3552
        %3554 = vmatprep.subr.mxu0 0.0
        %v3555 = vand.u32 %v2880, 4294901760
        %v3556 = vsub.f32 %v2880, %v3555
        %v3557 = vand.u32 %v3556, 4294901760
        %3558 = vmatpush1.msra.mxu0 %v3557
        %3559 = vmatprep.subr.mxu0 0.0
        %v3560 = vand.u32 %v2881, 4294901760
        %v3561 = vsub.f32 %v2881, %v3560
        %v3562 = vand.u32 %v3561, 4294901760
        %3563 = vmatpush1.msra.mxu0 %v3562
        %3564 = vmatprep.subr.mxu0 0.0
        %v3565 = vand.u32 %v2882, 4294901760
        %v3566 = vsub.f32 %v2882, %v3565
        %v3567 = vand.u32 %v3566, 4294901760
        %3568 = vmatpush1.msra.mxu0 %v3567
        %3569 = vmatprep.subr.mxu0 0.0
        %v3570 = vand.u32 %v2883, 4294901760
        %v3571 = vsub.f32 %v2883, %v3570
        %v3572 = vand.u32 %v3571, 4294901760
        %3573 = vmatpush1.msra.mxu0 %v3572
        %3574 = vmatprep.subr.mxu0 0.0
        %v3575 = vand.u32 %v2884, 4294901760
        %v3576 = vsub.f32 %v2884, %v3575
        %v3577 = vand.u32 %v3576, 4294901760
        %3578 = vmatpush1.msra.mxu0 %v3577
        %3579 = vmatprep.subr.mxu0 0.0
        %v3580 = vand.u32 %v2885, 4294901760
        %v3581 = vsub.f32 %v2885, %v3580
        %v3582 = vand.u32 %v3581, 4294901760
        %3583 = vmatpush1.msra.mxu0 %v3582
        %3584 = vmatprep.subr.mxu0 0.0
        %v3585 = vand.u32 %v2886, 4294901760
        %v3586 = vsub.f32 %v2886, %v3585
        %v3587 = vand.u32 %v3586, 4294901760
        %3588 = vmatpush1.msra.mxu0 %v3587
        %3589 = vmatprep.subr.mxu0 0.0
        %v3590 = vand.u32 %v2887, 4294901760
        %v3591 = vsub.f32 %v2887, %v3590
        %v3592 = vand.u32 %v3591, 4294901760
        %3593 = vmatpush1.msra.mxu0 %v3592
        %3594 = vmatprep.subr.mxu0 0.0
        %v3595 = vand.u32 %v2888, 4294901760
        %v3596 = vsub.f32 %v2888, %v3595
        %v3597 = vand.u32 %v3596, 4294901760
        %3598 = vmatpush1.msra.mxu0 %v3597
        %3599 = vmatprep.subr.mxu0 0.0
        %v3600 = vand.u32 %v2889, 4294901760
        %v3601 = vsub.f32 %v2889, %v3600
        %v3602 = vand.u32 %v3601, 4294901760
        %3603 = vmatpush1.msra.mxu0 %v3602
        %3604 = vmatprep.subr.mxu0 0.0
        %v3605 = vand.u32 %v2890, 4294901760
        %v3606 = vsub.f32 %v2890, %v3605
        %v3607 = vand.u32 %v3606, 4294901760
        %3608 = vmatpush1.msra.mxu0 %v3607
        %3609 = vmatprep.subr.mxu0 0.0
        %v3610 = vand.u32 %v2891, 4294901760
        %v3611 = vsub.f32 %v2891, %v3610
        %v3612 = vand.u32 %v3611, 4294901760
        %3613 = vmatpush1.msra.mxu0 %v3612
        %3614 = vmatprep.subr.mxu0 0.0
        %v3615 = vand.u32 %v2892, 4294901760
        %v3616 = vsub.f32 %v2892, %v3615
        %v3617 = vand.u32 %v3616, 4294901760
        %3618 = vmatpush1.msra.mxu0 %v3617
        %3619 = vmatprep.subr.mxu0 0.0
        %v3620 = vand.u32 %v2893, 4294901760
        %v3621 = vsub.f32 %v2893, %v3620
        %v3622 = vand.u32 %v3621, 4294901760
        %3623 = vmatpush1.msra.mxu0 %v3622
        %3624 = vmatprep.subr.mxu0 0.0
        %v3625 = vand.u32 %v2894, 4294901760
        %v3626 = vsub.f32 %v2894, %v3625
        %v3627 = vand.u32 %v3626, 4294901760
        %3628 = vmatpush1.msra.mxu0 %v3627
        %3629 = vmatprep.subr.mxu0 0.0
        %v3630 = vand.u32 %v2895, 4294901760
        %v3631 = vsub.f32 %v2895, %v3630
        %v3632 = vand.u32 %v3631, 4294901760
        %3633 = vmatpush1.msra.mxu0 %v3632
        %3634 = vmatprep.subr.mxu0 0.0
        %v3635 = vand.u32 %v2896, 4294901760
        %v3636 = vsub.f32 %v2896, %v3635
        %v3637 = vand.u32 %v3636, 4294901760
        %3638 = vmatpush1.msra.mxu0 %v3637
        %3639 = vmatprep.subr.mxu0 0.0
        %v3640 = vand.u32 %v2897, 4294901760
        %v3641 = vsub.f32 %v2897, %v3640
        %v3642 = vand.u32 %v3641, 4294901760
        %3643 = vmatpush1.msra.mxu0 %v3642
        %3644 = vmatprep.subr.mxu0 0.0
        %v3645 = vand.u32 %v2898, 4294901760
        %v3646 = vsub.f32 %v2898, %v3645
        %v3647 = vand.u32 %v3646, 4294901760
        %3648 = vmatpush1.msra.mxu0 %v3647
        %v3649 = vand.u32 %v206, 4294901760
        %3650 = vmatprep.mubr.f32.mxu0 %v3649
        %v3651 = vand.u32 %v172, 4294901760
        %3652 = vmatmul.mubr.f32.gmra.mrb[0].mxu0 %v3651
        %v3653 = vpop.f32.mrb[0].mxu0
        %v3654 = vadd.f32 %v3486, %v3653
        %v3655 = vpop.f32.mrb[0].mxu0
        %3656 = vdwg.mxu0
        %3657 = vmatprep.subr.mxu0 0.0
        %v3658 = vand.u32 %v2867, 4294901760
        %3659 = vmatpush1.msra.mxu0 %v3658
        %3660 = vmatprep.subr.mxu0 0.0
        %v3661 = vand.u32 %v2868, 4294901760
        %3662 = vmatpush1.msra.mxu0 %v3661
        %3663 = vmatprep.subr.mxu0 0.0
        %v3664 = vand.u32 %v2869, 4294901760
        %3665 = vmatpush1.msra.mxu0 %v3664
        %3666 = vmatprep.subr.mxu0 0.0
        %v3667 = vand.u32 %v2870, 4294901760
        %3668 = vmatpush1.msra.mxu0 %v3667
        %3669 = vmatprep.subr.mxu0 0.0
        %v3670 = vand.u32 %v2871, 4294901760
        %3671 = vmatpush1.msra.mxu0 %v3670
        %3672 = vmatprep.subr.mxu0 0.0
        %v3673 = vand.u32 %v2872, 4294901760
        %3674 = vmatpush1.msra.mxu0 %v3673
        %3675 = vmatprep.subr.mxu0 0.0
        %v3676 = vand.u32 %v2873, 4294901760
        %3677 = vmatpush1.msra.mxu0 %v3676
        %3678 = vmatprep.subr.mxu0 0.0
        %v3679 = vand.u32 %v2874, 4294901760
        %3680 = vmatpush1.msra.mxu0 %v3679
        %3681 = vmatprep.subr.mxu0 0.0
        %v3682 = vand.u32 %v2875, 4294901760
        %3683 = vmatpush1.msra.mxu0 %v3682
        %3684 = vmatprep.subr.mxu0 0.0
        %v3685 = vand.u32 %v2876, 4294901760
        %3686 = vmatpush1.msra.mxu0 %v3685
        %3687 = vmatprep.subr.mxu0 0.0
        %v3688 = vand.u32 %v2877, 4294901760
        %3689 = vmatpush1.msra.mxu0 %v3688
        %3690 = vmatprep.subr.mxu0 0.0
        %v3691 = vand.u32 %v2878, 4294901760
        %3692 = vmatpush1.msra.mxu0 %v3691
        %3693 = vmatprep.subr.mxu0 0.0
        %v3694 = vand.u32 %v2879, 4294901760
        %3695 = vmatpush1.msra.mxu0 %v3694
        %3696 = vmatprep.subr.mxu0 0.0
        %v3697 = vand.u32 %v2880, 4294901760
        %3698 = vmatpush1.msra.mxu0 %v3697
        %3699 = vmatprep.subr.mxu0 0.0
        %v3700 = vand.u32 %v2881, 4294901760
        %3701 = vmatpush1.msra.mxu0 %v3700
        %3702 = vmatprep.subr.mxu0 0.0
        %v3703 = vand.u32 %v2882, 4294901760
        %3704 = vmatpush1.msra.mxu0 %v3703
        %3705 = vmatprep.subr.mxu0 0.0
        %v3706 = vand.u32 %v2883, 4294901760
        %3707 = vmatpush1.msra.mxu0 %v3706
        %3708 = vmatprep.subr.mxu0 0.0
        %v3709 = vand.u32 %v2884, 4294901760
        %3710 = vmatpush1.msra.mxu0 %v3709
        %3711 = vmatprep.subr.mxu0 0.0
        %v3712 = vand.u32 %v2885, 4294901760
        %3713 = vmatpush1.msra.mxu0 %v3712
        %3714 = vmatprep.subr.mxu0 0.0
        %v3715 = vand.u32 %v2886, 4294901760
        %3716 = vmatpush1.msra.mxu0 %v3715
        %3717 = vmatprep.subr.mxu0 0.0
        %v3718 = vand.u32 %v2887, 4294901760
        %3719 = vmatpush1.msra.mxu0 %v3718
        %3720 = vmatprep.subr.mxu0 0.0
        %v3721 = vand.u32 %v2888, 4294901760
        %3722 = vmatpush1.msra.mxu0 %v3721
        %3723 = vmatprep.subr.mxu0 0.0
        %v3724 = vand.u32 %v2889, 4294901760
        %3725 = vmatpush1.msra.mxu0 %v3724
        %3726 = vmatprep.subr.mxu0 0.0
        %v3727 = vand.u32 %v2890, 4294901760
        %3728 = vmatpush1.msra.mxu0 %v3727
        %3729 = vmatprep.subr.mxu0 0.0
        %v3730 = vand.u32 %v2891, 4294901760
        %3731 = vmatpush1.msra.mxu0 %v3730
        %3732 = vmatprep.subr.mxu0 0.0
        %v3733 = vand.u32 %v2892, 4294901760
        %3734 = vmatpush1.msra.mxu0 %v3733
        %3735 = vmatprep.subr.mxu0 0.0
        %v3736 = vand.u32 %v2893, 4294901760
        %3737 = vmatpush1.msra.mxu0 %v3736
        %3738 = vmatprep.subr.mxu0 0.0
        %v3739 = vand.u32 %v2894, 4294901760
        %3740 = vmatpush1.msra.mxu0 %v3739
        %3741 = vmatprep.subr.mxu0 0.0
        %v3742 = vand.u32 %v2895, 4294901760
        %3743 = vmatpush1.msra.mxu0 %v3742
        %3744 = vmatprep.subr.mxu0 0.0
        %v3745 = vand.u32 %v2896, 4294901760
        %3746 = vmatpush1.msra.mxu0 %v3745
        %3747 = vmatprep.subr.mxu0 0.0
        %v3748 = vand.u32 %v2897, 4294901760
        %3749 = vmatpush1.msra.mxu0 %v3748
        %3750 = vmatprep.subr.mxu0 0.0
        %v3751 = vand.u32 %v2898, 4294901760
        %3752 = vmatpush1.msra.mxu0 %v3751
        %v3753 = vand.u32 %v206, 4294901760
        %3754 = vmatprep.mubr.f32.mxu0 %v3753
        %v3755 = vand.u32 %v172, 4294901760
        %3756 = vmatmul.mubr.f32.gmra.mrb[0].mxu0 %v3755
        %v3757 = vpop.f32.mrb[0].mxu0
        %v3758 = vadd.f32 %v3654, %v3757
        %v3759 = vpop.f32.mrb[0].mxu0
        %3760 = vdwg.mxu0
        %s3761 = scalar_lea.vmem %s161, 12 [#allocation2]
        %3762 = vst.msk [vmem:[%s3761] sm:$0xf] %vm1070, %v3758
        %s3763 = sand.u32 %s87, 1
        %s3764 = scalar_lea.sflag [#allocation3], %s3763
        %s3765 = sand.u32 %s87, 1
        %s3766 = smul.addr %s3765, 16
        %s3767 = scalar_lea.vmem [#allocation2], %s3766
        // Predicated region
        $region29: #{tpu_custom_call.1} parent=27 // pred_check
          %p3768 = pneg %p97
        $region30: #{tpu_custom_call.1} parent=27 // pred_check_branch
          %3770 = sbr.rel (%p3768) target = $region32
        $region31: #{tpu_custom_call.1} parent=27 // pred_region
          %s3772 = ssub.s32 256, 256
          %3773 = vsyncadd %s3764, %s3772
          %s3774 = smul.addr %s20, 4
          %s3775 = sadd.s32 %s21, %s3774
          %s3776 = smul.addr %s3775, 64
          %s3777 = scalar_lea.hbm %s2, %s3776
          %s3778 = sshll.u32 %s3767, 4
          %s3779 = int_to_ptr.vmem [resolvable:$true] %s3778
          %3784 = dma.vmem_to_hbm [thread:$0]  %s3779, 256, %s3777, %s3764, 64, 64, 4
        $region32: #{tpu_custom_call.1} parent=27 // pred_fallthru
          _
      $region28: #{tpu_custom_call.1} parent=5 // pred_fallthru
        _
      %p3785 = scmp.le.s32.totalorder 2, %s11
      // Predicated region
      $region33: #{tpu_custom_call.1} parent=5 // pred_check
        %p3786 = pneg %p3785
      $region34: #{tpu_custom_call.1} parent=5 // pred_check_branch
        %3788 = sbr.rel (%p3786) target = $region36
      $region35: #{tpu_custom_call.1} parent=5 // pred_region
        %s3789 = ssub.s32 %s11, 2
        // Predicated region
        $region37: #{tpu_custom_call.1} parent=35 // pred_check
          %p3790 = pneg %p103
        $region38: #{tpu_custom_call.1} parent=35 // pred_check_branch
          %3792 = sbr.rel (%p3790) target = $region40
        $region39: #{tpu_custom_call.1} parent=35 // pred_region
          %s3793 = sand.u32 %s88, 1
          %s3794 = scalar_lea.sflag [#allocation3], %s3793
          %s3795 = sand.u32 %s88, 1
          %s3796 = smul.addr %s3795, 16
          %s3797 = scalar_lea.vmem [#allocation2], %s3796
          %3798 = dma.done %s3794, 256
        $region40: #{tpu_custom_call.1} parent=35 // pred_fallthru
          _
      $region36: #{tpu_custom_call.1} parent=5 // pred_fallthru
        _
    $region6: #{tpu_custom_call.1} parent=1 // loop_footer
      %s15 = sadd.s32 1, %s11
    $region7: #{tpu_custom_call.1} parent=1 // loop_footer_branch
      %10 = sbr.rel target = $region3
    $region8: #{tpu_custom_call.1} parent=1 // loop_exit
      _
    %3799 = vsyncpa [#allocation3], 1
    %s3800 = scalar_lea.sflag [#allocation3], 1
    %3801 = vsyncpa %s3800, 1

</llo_original>
